<compile_context>
chip_gen: v7x
topology: tpu7x:2x2x1
jax: 0.10.0
libtpu: 0.0.40
codegen_flags: <defaults>
</compile_context>

<pallas_src>
import functools

import jax
import jax.numpy as jnp
from jax import lax
from jax.experimental import pallas as pl
from jax.experimental.pallas import tpu as pltpu

MIN_NORM = 1e-15
BALL_EPS_F32 = 4e-3   # geoopt projection eps for float32


# ---------------- in-kernel Poincare-ball helpers (carry squared norms) ----------------

def _sumsq(x):
    return jnp.sum(x * x, axis=-1, keepdims=True)


def _inv_and_norm(sq):
    """(1/||v||, ||v||) from a squared norm via a single rsqrt (EUP), norm clamped to MIN_NORM."""
    sq = jnp.maximum(sq, MIN_NORM * MIN_NORM)
    inv = lax.rsqrt(sq)
    return inv, sq * inv


def _artanh(x):
    x = jnp.clip(x, -1.0 + 1e-7, 1.0 - 1e-7)
    # approx reciprocal keeps the divide off the VPU (consistent approx-recip policy)
    return 0.5 * jnp.log((1.0 + x) * pl.reciprocal(1.0 - x, approx=True))


def _gyro_ratio(v_sq, c):
    """artanh(sqrt(c) * ||v||) / ||v||  for a vector whose squared norm is already known."""
    inv, norm = _inv_and_norm(v_sq)
    return _artanh((c ** 0.5) * norm) * inv


def _project_sq(x, x_sq, c):
    """Ball projection; returns (projected x, its squared norm) without re-reducing."""
    maxnorm = (1.0 - BALL_EPS_F32) / (c ** 0.5)
    inv, norm = _inv_and_norm(x_sq)
    cond = norm > maxnorm
    clipped = x * (maxnorm * inv)
    return jnp.where(cond, clipped, x), jnp.where(cond, maxnorm * maxnorm, x_sq)


def _mobius_scale_tail(mx, in_ratio, c):
    """Shared tail of mobius_matvec / mobius_pointwise_mul (incl. projection).

    mx       : M @ v  (or w * v), shape (B, H)
    in_ratio : artanh(sqrt(c) * ||v||) / ||v||, shape (B, 1), precomputed & reused
    Returns (projected result, its squared norm).
    """
    inv_sqrt_c = 1.0 / (c ** 0.5)
    mx_sq = _sumsq(mx)                       # single XLU reduce for this op
    inv, norm = _inv_and_norm(mx_sq)
    scale = jnp.tanh(norm * in_ratio) * (inv * inv_sqrt_c)
    zero = mx_sq <= 0.0                      # "all components zero"
    res = jnp.where(zero, 0.0, scale * mx)
    res_sq = jnp.where(zero, 0.0, scale * scale * mx_sq)
    return _project_sq(res, res_sq, c)


def _mobius_pointwise_mul_proj(w, v, c):
    # geoopt mobius_pointwise_mul(w, v): scaling uses ||v|| and ||w*v||
    return _mobius_scale_tail(w * v, _gyro_ratio(_sumsq(v), c), c)


def _mobius_add_proj(x, x_sq, y, y_sq, c):
    """Projected mobius_add with operand squared norms supplied; the squared norm of the
    result is derived analytically instead of re-reducing."""
    xy = jnp.sum(x * y, axis=-1, keepdims=True)     # single XLU reduce for this op
    coef_x = 1.0 + 2.0 * c * xy + c * y_sq
    coef_y = 1.0 - c * x_sq
    denom = jnp.maximum(1.0 + 2.0 * c * xy + c * c * x_sq * y_sq, MIN_NORM)
    inv_denom = pl.reciprocal(denom, approx=True)
    res = (coef_x * x + coef_y * y) * inv_denom
    num_sq = coef_x * coef_x * x_sq + 2.0 * coef_x * coef_y * xy + coef_y * coef_y * y_sq
    res_sq = jnp.maximum(num_sq, 0.0) * (inv_denom * inv_denom)
    return _project_sq(res, res_sq, c)


def _logmap0_sq(y, y_sq, c):
    sqrt_c = c ** 0.5
    inv, norm = _inv_and_norm(y_sq)
    return y * (_artanh(sqrt_c * norm) * (inv / sqrt_c))


def _sigmoid(v):
    # one EUP op (tanh) instead of exp + reciprocal
    return 0.5 * (jnp.tanh(0.5 * v) + 1.0)


# ------------------------------------ Pallas kernel ------------------------------------

def hyper_gru_kernel(*refs, c, hidden_size, fused_gates):
    H = hidden_size
    if fused_gates:
        x_ref, h_ref, w_big_ref, w_h_ref, b_ref, out_ref, hx_ref = refs
    else:
        x_ref, h_ref, w_zr_ref, u_zr_ref, w_h_ref, b_ref, out_ref = refs

    x = x_ref[...].astype(jnp.float32)
    h = h_ref[...].astype(jnp.float32)
    b_all = b_ref[...].astype(jnp.float32)
    b_z, b_r, b_h = b_all[0:1, :], b_all[1:2, :], b_all[2:3, :]

    # hoisted norms / ratios (each input reduced exactly once)
    x_sq, h_sq = _sumsq(x), _sumsq(h)
    x_ratio, h_ratio = _gyro_ratio(x_sq, c), _gyro_ratio(h_sq, c)
    bz_sq, br_sq, bh_sq = _sumsq(b_z), _sumsq(b_r), _sumsq(b_h)

    if fused_gates:
        # one lane-dense block-diagonal dot: [h | x] @ blockdiag(w_z|w_r, u_z|u_r) -> (B, 4H)
        hx_ref[:, :H] = h.astype(hx_ref.dtype)
        hx_ref[:, H:] = x.astype(hx_ref.dtype)
        m = jnp.dot(hx_ref[...], w_big_ref[...], preferred_element_type=jnp.float32)
        mh_z, mh_r = m[:, 0 * H:1 * H], m[:, 1 * H:2 * H]
        ux_z, ux_r = m[:, 2 * H:3 * H], m[:, 3 * H:4 * H]
    else:
        mh = jnp.dot(h.astype(w_zr_ref.dtype), w_zr_ref[...],
                     preferred_element_type=jnp.float32)         # (B, 2H)
        ux = jnp.dot(x.astype(u_zr_ref.dtype), u_zr_ref[...],
                     preferred_element_type=jnp.float32)         # (B, 2H)
        mh_z, mh_r = mh[:, :H], mh[:, H:]
        ux_z, ux_r = ux[:, :H], ux[:, H:]

    Wh_z, Wh_z_sq = _mobius_scale_tail(mh_z, h_ratio, c)
    Wh_r, Wh_r_sq = _mobius_scale_tail(mh_r, h_ratio, c)
    Ux_z, Ux_z_sq = _mobius_scale_tail(ux_z, x_ratio, c)
    Ux_r, Ux_r_sq = _mobius_scale_tail(ux_r, x_ratio, c)   # reused below for h_tilde

    def finish_transition(Wh, Wh_sq, Ux, Ux_sq, b, b_sq):
        s, s_sq = _mobius_add_proj(Wh, Wh_sq, Ux, Ux_sq, c)
        return _mobius_add_proj(s, s_sq, b, b_sq, c)

    z_pt, z_pt_sq = finish_transition(Wh_z, Wh_z_sq, Ux_z, Ux_z_sq, b_z, bz_sq)
    r_pt, r_pt_sq = finish_transition(Wh_r, Wh_r_sq, Ux_r, Ux_r_sq, b_r, br_sq)
    z = _sigmoid(_logmap0_sq(z_pt, z_pt_sq, c))
    r = _sigmoid(_logmap0_sq(r_pt, r_pt_sq, c))

    # r (.) h : geoopt mobius_pointwise_mul(hidden, r)
    r_ph, r_ph_sq = _mobius_pointwise_mul_proj(h, r, c)

    # h_tilde = transition(w_h, r_point_h, u_r, x, b_h); the reference uses u_r here, so the
    # already computed (projected) Ux_r is reused -- one full matvec chain eliminated, exactly.
    mh_h = jnp.dot(r_ph.astype(w_h_ref.dtype), w_h_ref[...],
                   preferred_element_type=jnp.float32)
    Wh_h, Wh_h_sq = _mobius_scale_tail(mh_h, _gyro_ratio(r_ph_sq, c), c)
    h_tilde, h_tilde_sq = finish_transition(Wh_h, Wh_h_sq, Ux_r, Ux_r_sq, b_h, bh_sq)

    mho, mho_sq = _mobius_add_proj(-h, h_sq, h_tilde, h_tilde_sq, c)
    delta, delta_sq = _mobius_pointwise_mul_proj(mho, z, c)
    new_h, _ = _mobius_add_proj(h, h_sq, delta, delta_sq, c)

    out_ref[...] = new_h.astype(out_ref.dtype)


# -------------------------------------- wrapper --------------------------------------

def hyper_gru_cell(hyp_x, hidden, params, *, c=1.0, tile_b=None,
                   weights_dtype=None, donate_hidden=False):
    # NOTE: if this cell is stepped inside a scan, hoist the weight packing below out of the
    # step function (it is a pure function of the parameters).
    B, I = hyp_x.shape
    _, H = hidden.shape
    w_z, w_r, w_h, u_z, u_r, u_h, b_z, b_r, b_h = params
    del u_h   # unused by the reference forward (it uses u_r for h_tilde); kept in params for parity

    out_dtype = hidden.dtype
    if weights_dtype is None:
        # bf16 weights: ~2-3x MXU throughput and half the weight DMA/VMEM at large H (doubly
        # valuable under v7x's 64 MiB VMEM). Keep f32 at small H where the kernel is
        # EUP-latency bound; the elementwise/EUP chain always stays f32.
        weights_dtype = jnp.bfloat16 if H >= 512 else jnp.float32

    # Small-shape path: one lane-dense block-diagonal gate matmul. Skip at large H where the
    # zero blocks would waste real MXU work.
    fuse_gates = (H + I) <= 512 and (4 * H) <= 1024

    # biases packed into a single (3, H) operand (one DMA descriptor / pipeline buffer)
    b_all = jnp.stack([b_z, b_r, b_h], axis=0)

    if fuse_gates:
        # [h | x] @ [[w_z w_r 0 0], [0 0 u_z u_r]]  -> (B, 4H) = [Wh_z | Wh_r | Ux_z | Ux_r]
        w_big = jnp.zeros((H + I, 4 * H), weights_dtype)
        w_big = w_big.at[:H, 0 * H:1 * H].set(w_z.astype(weights_dtype))
        w_big = w_big.at[:H, 1 * H:2 * H].set(w_r.astype(weights_dtype))
        w_big = w_big.at[H:, 2 * H:3 * H].set(u_z.astype(weights_dtype))
        w_big = w_big.at[H:, 3 * H:4 * H].set(u_r.astype(weights_dtype))
        gate_weights = (w_big,)
        gate_shapes = ((H + I, 4 * H),)
    else:
        # fall back to two fused dots: W_z|W_r (H,2H) and U_z|U_r (I,2H)
        w_zr = jnp.concatenate([w_z, w_r], axis=1).astype(weights_dtype)
        u_zr = jnp.concatenate([u_z, u_r], axis=1).astype(weights_dtype)
        gate_weights = (w_zr, u_zr)
        gate_shapes = ((H, 2 * H), (I, 2 * H))
    w_h = w_h.astype(weights_dtype)

    # tile_b: one grid step for small problems (no per-step pipeline overhead); split the batch
    # across two steps once per-core work is at least a few full vregs so v7x's second
    # TensorCore gets work (dimension_semantics=("parallel",) shards the grid across TCs).
    if tile_b is None:
        big_work = (B >= 256) or (B >= 16 and H >= 128)
        tile_b = B // 2 if (big_work and B % 16 == 0) else B
    assert B % tile_b == 0
    n_steps = B // tile_b

    # Weight buffering / VMEM budget: constant-index weights never change across the grid, so
    # single-buffer them when the grid has more than one step or they are large; raise the
    # scoped VMEM limit when the budget exceeds v5e's 16 MiB default (cap at v7x's 64 MiB).
    wbytes = jnp.dtype(weights_dtype).itemsize
    weight_bytes = (sum(int(w.size) for w in gate_weights) + int(w_h.size)) * wbytes
    single_buffer_weights = (n_steps > 1) or (weight_bytes > (8 << 20))
    io_bytes = 4 * 2 * (tile_b * I + 2 * tile_b * H)      # x, h, out (double-buffered)
    approx_vmem = (weight_bytes * (1 if single_buffer_weights else 2)
                   + io_bytes + 4 * 3 * H * 2 + (2 << 20))
    vmem_limit = None
    if approx_vmem > (16 << 20):
        vmem_limit = min(int(approx_vmem * 5 // 4), 64 << 20)

    full = lambda i: (0, 0)
    row = lambda i: (i, 0)

    def wspec(shape):
        if single_buffer_weights:
            return pl.BlockSpec(shape, full, pipeline_mode=pl.Buffered(1))
        return pl.BlockSpec(shape, full)

    in_specs = [pl.BlockSpec((tile_b, I), row),
                pl.BlockSpec((tile_b, H), row)]
    in_specs += [wspec(s) for s in gate_shapes]
    in_specs += [wspec((H, H)), pl.BlockSpec((3, H), full)]

    # tiny VMEM staging buffer for the [h | x] operand of the block-diagonal dot
    scratch = [pltpu.VMEM((tile_b, H + I), weights_dtype)] if fuse_gates else []

    kernel = functools.partial(hyper_gru_kernel, c=float(c), hidden_size=H,
                               fused_gates=fuse_gates)

    # advisory cost hint: this call is latency-bound at small shapes, help XLA schedule around it
    gate_flops = 2 * B * (H + I) * 4 * H if fuse_gates else 2 * B * 2 * H * (H + I)
    cost = pl.CostEstimate(
        flops=gate_flops + 2 * B * H * H + 80 * B * H,
        transcendentals=30 * B * H,
        bytes_accessed=int(4 * (hyp_x.size + hidden.size + B * H + 3 * H) + weight_bytes),
    )

    return pl.pallas_call(
        kernel,
        out_shape=jax.ShapeDtypeStruct((B, H), out_dtype),
        grid_spec=pltpu.PrefetchScalarGridSpec(
            num_scalar_prefetch=0,
            grid=(n_steps,),
            in_specs=in_specs,
            out_specs=pl.BlockSpec((tile_b, H), row),
            scratch_shapes=scratch,
        ),
        compiler_params=pltpu.CompilerParams(
            dimension_semantics=("parallel",),
            vmem_limit_bytes=vmem_limit),
        cost_estimate=cost,
        # donate the old hidden state's HBM buffer when the caller discards it
        input_output_aliases=({1: 0} if donate_hidden else {}),
    )(hyp_x, hidden, *gate_weights, w_h, b_all)


# ------------------------- pure-JAX reference (exact divisions) -------------------------

def _ref_cell(hyp_x, hidden, params, c):
    w_z, w_r, w_h, u_z, u_r, u_h, b_z, b_r, b_h = params
    sqrt_c = c ** 0.5

    def norm(v): return jnp.maximum(jnp.sqrt(jnp.sum(v * v, -1, keepdims=True)), MIN_NORM)
    def artanh(v): return jnp.arctanh(jnp.clip(v, -1 + 1e-7, 1 - 1e-7))
    def project(v):
        n = norm(v); mx = (1.0 - BALL_EPS_F32) / sqrt_c
        return jnp.where(n > mx, v / n * mx, v)
    def madd(a, b_):
        a2 = jnp.sum(a * a, -1, keepdims=True); b2 = jnp.sum(b_ * b_, -1, keepdims=True)
        ab = jnp.sum(a * b_, -1, keepdims=True)
        num = (1 + 2 * c * ab + c * b2) * a + (1 - c * a2) * b_
        den = jnp.maximum(1 + 2 * c * ab + c * c * a2 * b2, MIN_NORM)
        return project(num / den)
    def tail(m, v):
        mn = norm(m); vn = norm(v)
        res = jnp.tanh(mn / vn * artanh(sqrt_c * vn)) * m / (mn * sqrt_c)
        return project(jnp.where(jnp.sum(jnp.abs(m), -1, keepdims=True) <= 0, 0.0, res))
    def mmatvec(M, v): return tail(v @ M, v)
    def mpmul(w, v): return tail(w * v, v)
    def logmap0(y):
        yn = norm(y); return y / (yn * sqrt_c) * artanh(sqrt_c * yn)
    def transition(W, hh, U, xx, b):
        return madd(madd(mmatvec(W, hh), mmatvec(U, xx)), b)

    z = jax.nn.sigmoid(logmap0(transition(w_z, hidden, u_z, hyp_x, b_z)))
    r = jax.nn.sigmoid(logmap0(transition(w_r, hidden, u_r, hyp_x, b_r)))
    r_point_h = mpmul(hidden, r)
    h_tilde = transition(w_h, r_point_h, u_r, hyp_x, b_h)   # u_r, as in the reference module
    mho = madd(-hidden, h_tilde)
    return madd(hidden, mpmul(mho, z))


# --------------------------------------- driver ---------------------------------------

def _expmap0(u, c):
    sqrt_c = c ** 0.5
    un = jnp.maximum(jnp.sqrt(jnp.sum(u * u, axis=-1, keepdims=True)), MIN_NORM)
    return jnp.tanh(sqrt_c * un) * u / (sqrt_c * un)


if __name__ == "__main__":
    B, I, H = 16, 32, 32          # batch, input_size, hidden_size
    c = 1.0                       # ball curvature
    k = (1.0 / H) ** 0.5

    keys = jax.random.split(jax.random.PRNGKey(0), 8)
    w_z = jax.random.uniform(keys[0], (H, H), jnp.float32, -k, k)
    w_r = jax.random.uniform(keys[1], (H, H), jnp.float32, -k, k)
    w_h = jax.random.uniform(keys[2], (H, H), jnp.float32, -k, k)
    u_z = jax.random.uniform(keys[3], (I, H), jnp.float32, -k, k)
    u_r = jax.random.uniform(keys[4], (I, H), jnp.float32, -k, k)
    u_h = jax.random.uniform(keys[5], (I, H), jnp.float32, -k, k)
    b_z = jnp.zeros((H,), jnp.float32)   # .zero_() in the module
    b_r = jnp.zeros((H,), jnp.float32)
    b_h = jnp.zeros((H,), jnp.float32)
    params = (w_z, w_r, w_h, u_z, u_r, u_h, b_z, b_r, b_h)

    # inputs are points on the Poincare ball (exp-map of small tangent vectors)
    hyp_x = _expmap0(0.5 * jax.random.normal(keys[6], (B, I), jnp.float32), c)
    hidden = _expmap0(0.5 * jax.random.normal(keys[7], (B, H), jnp.float32), c)

    out = jax.block_until_ready(hyper_gru_cell(hyp_x, hidden, params, c=c))
    ref = _ref_cell(hyp_x, hidden, params, c)

    assert out.shape == (B, H) and out.dtype == jnp.float32
    assert bool(jnp.all(jnp.isfinite(out)))
    # output must lie inside the unit ball (it is projected)
    assert bool(jnp.all(jnp.sum(out * out, axis=-1) < 1.0 / c + 1e-5))
    # loose tolerance vs exact-division reference (kernel uses approx EUP reciprocals / rsqrt)
    assert float(jnp.max(jnp.abs(out - ref))) < 5e-2
    print("KERNEL_OK")
</pallas_src>

<mosaic_0001>
module attributes {stable_mosaic.version = 11 : i64} {
  func.func @hyper_gru_kernel(%arg0: i32, %arg1: memref<16x32xf32, #tpu.memory_space<vmem>>, %arg2: memref<16x32xf32, #tpu.memory_space<vmem>>, %arg3: memref<64x128xf32, #tpu.memory_space<vmem>>, %arg4: memref<32x32xf32, #tpu.memory_space<vmem>>, %arg5: memref<3x32xf32, #tpu.memory_space<vmem>>, %arg6: memref<16x32xf32, #tpu.memory_space<vmem>>, %arg7: memref<16x64xf32, #tpu.memory_space<vmem>>) attributes {dimension_semantics = [#tpu.dimension_semantics<parallel>], iteration_bounds = array<i64: 1>, scalar_prefetch = 0 : i64, scratch_operands = 1 : i64, tpu.core_type = #tpu.core_type<tc>, window_params = [{transform_indices = @transform_0, window_bounds = array<i64: 16, 32>}, {transform_indices = @transform_1, window_bounds = array<i64: 16, 32>}, {pipeline_mode = #tpu.pipeline_mode<synchronous>, transform_indices = @transform_2, window_bounds = array<i64: 64, 128>}, {pipeline_mode = #tpu.pipeline_mode<synchronous>, transform_indices = @transform_3, window_bounds = array<i64: 32, 32>}, {pipeline_mode = #tpu.pipeline_mode<synchronous>, transform_indices = @transform_4, window_bounds = array<i64: 3, 32>}, {transform_indices = @transform_5, window_bounds = array<i64: 16, 32>}]} {
    %c0 = arith.constant 0 : index
    %c0_0 = arith.constant 0 : index
    %0 = vector.load %arg1[%c0, %c0_0] : memref<16x32xf32, #tpu.memory_space<vmem>>, vector<16x32xf32>
    %c0_1 = arith.constant 0 : index
    %c0_2 = arith.constant 0 : index
    %1 = vector.load %arg2[%c0_1, %c0_2] : memref<16x32xf32, #tpu.memory_space<vmem>>, vector<16x32xf32>
    %c0_3 = arith.constant 0 : index
    %c0_4 = arith.constant 0 : index
    %2 = vector.load %arg5[%c0_3, %c0_4] : memref<3x32xf32, #tpu.memory_space<vmem>>, vector<3x32xf32>
    %3 = vector.extract_strided_slice %2 {offsets = [0, 0], sizes = [1, 32], strides = [1, 1]} : vector<3x32xf32> to vector<1x32xf32>
    %4 = vector.extract_strided_slice %2 {offsets = [1, 0], sizes = [1, 32], strides = [1, 1]} : vector<3x32xf32> to vector<1x32xf32>
    %5 = vector.extract_strided_slice %2 {offsets = [2, 0], sizes = [1, 32], strides = [1, 1]} : vector<3x32xf32> to vector<1x32xf32>
    %6 = arith.mulf %0, %0 : vector<16x32xf32>
    %cst = arith.constant dense<0.000000e+00> : vector<16xf32>
    %7 = vector.multi_reduction <add>, %6, %cst [1] : vector<16x32xf32> to vector<16xf32>
    %8 = vector.shape_cast %7 : vector<16xf32> to vector<16x1xf32>
    %9 = arith.mulf %1, %1 : vector<16x32xf32>
    %cst_5 = arith.constant dense<0.000000e+00> : vector<16xf32>
    %10 = vector.multi_reduction <add>, %9, %cst_5 [1] : vector<16x32xf32> to vector<16xf32>
    %11 = vector.shape_cast %10 : vector<16xf32> to vector<16x1xf32>
    %cst_6 = arith.constant 1.000000e-30 : f32
    %12 = vector.broadcast %cst_6 : f32 to vector<16x1xf32>
    %13 = arith.maximumf %8, %12 : vector<16x1xf32>
    %14 = math.rsqrt %13 : vector<16x1xf32>
    %15 = arith.mulf %13, %14 : vector<16x1xf32>
    %cst_7 = arith.constant 1.000000e+00 : f32
    %16 = vector.broadcast %cst_7 : f32 to vector<16x1xf32>
    %17 = arith.mulf %16, %15 : vector<16x1xf32>
    %cst_8 = arith.constant -0.99999988 : f32
    %cst_9 = arith.constant 0.99999988 : f32
    %18 = vector.broadcast %cst_8 : f32 to vector<16x1xf32>
    %19 = arith.maximumf %18, %17 : vector<16x1xf32>
    %20 = vector.broadcast %cst_9 : f32 to vector<16x1xf32>
    %21 = arith.minimumf %20, %19 : vector<16x1xf32>
    %cst_10 = arith.constant 1.000000e+00 : f32
    %22 = vector.broadcast %cst_10 : f32 to vector<16x1xf32>
    %23 = arith.addf %22, %21 : vector<16x1xf32>
    %cst_11 = arith.constant 1.000000e+00 : f32
    %24 = vector.broadcast %cst_11 : f32 to vector<16x1xf32>
    %25 = arith.subf %24, %21 : vector<16x1xf32>
    %26 = tpu.reciprocal %25 {approx = true} : vector<16x1xf32> -> vector<16x1xf32>
    %27 = arith.mulf %23, %26 : vector<16x1xf32>
    %28 = math.log %27 : vector<16x1xf32>
    %cst_12 = arith.constant 5.000000e-01 : f32
    %29 = vector.broadcast %cst_12 : f32 to vector<16x1xf32>
    %30 = arith.mulf %29, %28 : vector<16x1xf32>
    %31 = arith.mulf %30, %14 : vector<16x1xf32>
    %cst_13 = arith.constant 1.000000e-30 : f32
    %32 = vector.broadcast %cst_13 : f32 to vector<16x1xf32>
    %33 = arith.maximumf %11, %32 : vector<16x1xf32>
    %34 = math.rsqrt %33 : vector<16x1xf32>
    %35 = arith.mulf %33, %34 : vector<16x1xf32>
    %cst_14 = arith.constant 1.000000e+00 : f32
    %36 = vector.broadcast %cst_14 : f32 to vector<16x1xf32>
    %37 = arith.mulf %36, %35 : vector<16x1xf32>
    %cst_15 = arith.constant -0.99999988 : f32
    %cst_16 = arith.constant 0.99999988 : f32
    %38 = vector.broadcast %cst_15 : f32 to vector<16x1xf32>
    %39 = arith.maximumf %38, %37 : vector<16x1xf32>
    %40 = vector.broadcast %cst_16 : f32 to vector<16x1xf32>
    %41 = arith.minimumf %40, %39 : vector<16x1xf32>
    %cst_17 = arith.constant 1.000000e+00 : f32
    %42 = vector.broadcast %cst_17 : f32 to vector<16x1xf32>
    %43 = arith.addf %42, %41 : vector<16x1xf32>
    %cst_18 = arith.constant 1.000000e+00 : f32
    %44 = vector.broadcast %cst_18 : f32 to vector<16x1xf32>
    %45 = arith.subf %44, %41 : vector<16x1xf32>
    %46 = tpu.reciprocal %45 {approx = true} : vector<16x1xf32> -> vector<16x1xf32>
    %47 = arith.mulf %43, %46 : vector<16x1xf32>
    %48 = math.log %47 : vector<16x1xf32>
    %cst_19 = arith.constant 5.000000e-01 : f32
    %49 = vector.broadcast %cst_19 : f32 to vector<16x1xf32>
    %50 = arith.mulf %49, %48 : vector<16x1xf32>
    %51 = arith.mulf %50, %34 : vector<16x1xf32>
    %52 = arith.mulf %3, %3 : vector<1x32xf32>
    %cst_20 = arith.constant dense<0.000000e+00> : vector<1xf32>
    %53 = vector.multi_reduction <add>, %52, %cst_20 [1] : vector<1x32xf32> to vector<1xf32>
    %54 = vector.shape_cast %53 : vector<1xf32> to vector<1x1xf32>
    %55 = arith.mulf %4, %4 : vector<1x32xf32>
    %cst_21 = arith.constant dense<0.000000e+00> : vector<1xf32>
    %56 = vector.multi_reduction <add>, %55, %cst_21 [1] : vector<1x32xf32> to vector<1xf32>
    %57 = vector.shape_cast %56 : vector<1xf32> to vector<1x1xf32>
    %58 = arith.mulf %5, %5 : vector<1x32xf32>
    %cst_22 = arith.constant dense<0.000000e+00> : vector<1xf32>
    %59 = vector.multi_reduction <add>, %58, %cst_22 [1] : vector<1x32xf32> to vector<1xf32>
    %60 = vector.shape_cast %59 : vector<1xf32> to vector<1x1xf32>
    %c0_23 = arith.constant 0 : index
    %c0_24 = arith.constant 0 : index
    %61 = vector.load %arg7[%c0_23, %c0_24] : memref<16x64xf32, #tpu.memory_space<vmem>>, vector<16x32xf32>
    tpu.vector_store %arg7[%c0_23, %c0_24], %1 {strides = array<i32>} : memref<16x64xf32, #tpu.memory_space<vmem>>, vector<16x32xf32>,
    %c0_25 = arith.constant 0 : index
    %c32 = arith.constant 32 : index
    %62 = vector.load %arg7[%c0_25, %c32] : memref<16x64xf32, #tpu.memory_space<vmem>>, vector<16x32xf32>
    tpu.vector_store %arg7[%c0_25, %c32], %0 {strides = array<i32>} : memref<16x64xf32, #tpu.memory_space<vmem>>, vector<16x32xf32>,
    %c0_26 = arith.constant 0 : index
    %c0_27 = arith.constant 0 : index
    %63 = vector.load %arg7[%c0_26, %c0_27] : memref<16x64xf32, #tpu.memory_space<vmem>>, vector<16x64xf32>
    %c0_28 = arith.constant 0 : index
    %c0_29 = arith.constant 0 : index
    %64 = vector.load %arg3[%c0_28, %c0_29] : memref<64x128xf32, #tpu.memory_space<vmem>>, vector<64x128xf32>
    %cst_30 = arith.constant dense<0.000000e+00> : vector<16x128xf32>
    %65 = tpu.matmul %63, %64, %cst_30 {dimension_numbers = #tpu.dot_dimension_numbers<[1], [0], [0], [1], [0, 0, 1, 1], [], []>} : vector<16x64xf32>, vector<64x128xf32>, vector<16x128xf32> -> vector<16x128xf32>
    %66 = vector.extract_strided_slice %65 {offsets = [0, 0], sizes = [16, 32], strides = [1, 1]} : vector<16x128xf32> to vector<16x32xf32>
    %67 = vector.extract_strided_slice %65 {offsets = [0, 32], sizes = [16, 32], strides = [1, 1]} : vector<16x128xf32> to vector<16x32xf32>
    %68 = vector.extract_strided_slice %65 {offsets = [0, 64], sizes = [16, 32], strides = [1, 1]} : vector<16x128xf32> to vector<16x32xf32>
    %69 = vector.extract_strided_slice %65 {offsets = [0, 96], sizes = [16, 32], strides = [1, 1]} : vector<16x128xf32> to vector<16x32xf32>
    %70 = arith.mulf %66, %66 : vector<16x32xf32>
    %cst_31 = arith.constant dense<0.000000e+00> : vector<16xf32>
    %71 = vector.multi_reduction <add>, %70, %cst_31 [1] : vector<16x32xf32> to vector<16xf32>
    %72 = vector.shape_cast %71 : vector<16xf32> to vector<16x1xf32>
    %cst_32 = arith.constant 1.000000e-30 : f32
    %73 = vector.broadcast %cst_32 : f32 to vector<16x1xf32>
    %74 = arith.maximumf %72, %73 : vector<16x1xf32>
    %75 = math.rsqrt %74 : vector<16x1xf32>
    %76 = arith.mulf %74, %75 : vector<16x1xf32>
    %77 = arith.mulf %76, %51 : vector<16x1xf32>
    %78 = math.tanh %77 : vector<16x1xf32>
    %cst_33 = arith.constant 1.000000e+00 : f32
    %79 = vector.broadcast %cst_33 : f32 to vector<16x1xf32>
    %80 = arith.mulf %75, %79 : vector<16x1xf32>
    %81 = arith.mulf %78, %80 : vector<16x1xf32>
    %cst_34 = arith.constant 0.000000e+00 : f32
    %82 = vector.broadcast %cst_34 : f32 to vector<16x1xf32>
    %83 = arith.cmpf ole, %72, %82 : vector<16x1xf32>
    %84 = vector.broadcast %81 : vector<16x1xf32> to vector<16x32xf32>
    %85 = arith.mulf %84, %66 : vector<16x32xf32>
    %cst_35 = arith.constant 0.000000e+00 : f32
    %86 = vector.shape_cast %83 : vector<16x1xi1> to vector<16x1xi1>
    %87 = vector.broadcast %86 : vector<16x1xi1> to vector<16x32xi1>
    %88 = vector.broadcast %cst_35 : f32 to vector<16x32xf32>
    %89 = arith.select %87, %88, %85 : vector<16x32xi1>, vector<16x32xf32>
    %90 = arith.mulf %81, %81 : vector<16x1xf32>
    %91 = arith.mulf %90, %72 : vector<16x1xf32>
    %cst_36 = arith.constant 0.000000e+00 : f32
    %92 = vector.broadcast %cst_36 : f32 to vector<16x1xf32>
    %93 = arith.select %83, %92, %91 : vector<16x1xi1>, vector<16x1xf32>
    %cst_37 = arith.constant 1.000000e-30 : f32
    %94 = vector.broadcast %cst_37 : f32 to vector<16x1xf32>
    %95 = arith.maximumf %93, %94 : vector<16x1xf32>
    %96 = math.rsqrt %95 : vector<16x1xf32>
    %97 = arith.mulf %95, %96 : vector<16x1xf32>
    %cst_38 = arith.constant 0.995999991 : f32
    %98 = vector.broadcast %cst_38 : f32 to vector<16x1xf32>
    %99 = arith.cmpf ogt, %97, %98 : vector<16x1xf32>
    %cst_39 = arith.constant 0.995999991 : f32
    %100 = vector.broadcast %cst_39 : f32 to vector<16x1xf32>
    %101 = arith.mulf %100, %96 : vector<16x1xf32>
    %102 = vector.broadcast %101 : vector<16x1xf32> to vector<16x32xf32>
    %103 = arith.mulf %89, %102 : vector<16x32xf32>
    %104 = vector.shape_cast %99 : vector<16x1xi1> to vector<16x1xi1>
    %105 = vector.broadcast %104 : vector<16x1xi1> to vector<16x32xi1>
    %106 = arith.select %105, %103, %89 : vector<16x32xi1>, vector<16x32xf32>
    %cst_40 = arith.constant 9.920160e-01 : f32
    %107 = vector.broadcast %cst_40 : f32 to vector<16x1xf32>
    %108 = arith.select %99, %107, %93 : vector<16x1xi1>, vector<16x1xf32>
    %109 = arith.mulf %67, %67 : vector<16x32xf32>
    %cst_41 = arith.constant dense<0.000000e+00> : vector<16xf32>
    %110 = vector.multi_reduction <add>, %109, %cst_41 [1] : vector<16x32xf32> to vector<16xf32>
    %111 = vector.shape_cast %110 : vector<16xf32> to vector<16x1xf32>
    %cst_42 = arith.constant 1.000000e-30 : f32
    %112 = vector.broadcast %cst_42 : f32 to vector<16x1xf32>
    %113 = arith.maximumf %111, %112 : vector<16x1xf32>
    %114 = math.rsqrt %113 : vector<16x1xf32>
    %115 = arith.mulf %113, %114 : vector<16x1xf32>
    %116 = arith.mulf %115, %51 : vector<16x1xf32>
    %117 = math.tanh %116 : vector<16x1xf32>
    %cst_43 = arith.constant 1.000000e+00 : f32
    %118 = vector.broadcast %cst_43 : f32 to vector<16x1xf32>
    %119 = arith.mulf %114, %118 : vector<16x1xf32>
    %120 = arith.mulf %117, %119 : vector<16x1xf32>
    %cst_44 = arith.constant 0.000000e+00 : f32
    %121 = vector.broadcast %cst_44 : f32 to vector<16x1xf32>
    %122 = arith.cmpf ole, %111, %121 : vector<16x1xf32>
    %123 = vector.broadcast %120 : vector<16x1xf32> to vector<16x32xf32>
    %124 = arith.mulf %123, %67 : vector<16x32xf32>
    %cst_45 = arith.constant 0.000000e+00 : f32
    %125 = vector.shape_cast %122 : vector<16x1xi1> to vector<16x1xi1>
    %126 = vector.broadcast %125 : vector<16x1xi1> to vector<16x32xi1>
    %127 = vector.broadcast %cst_45 : f32 to vector<16x32xf32>
    %128 = arith.select %126, %127, %124 : vector<16x32xi1>, vector<16x32xf32>
    %129 = arith.mulf %120, %120 : vector<16x1xf32>
    %130 = arith.mulf %129, %111 : vector<16x1xf32>
    %cst_46 = arith.constant 0.000000e+00 : f32
    %131 = vector.broadcast %cst_46 : f32 to vector<16x1xf32>
    %132 = arith.select %122, %131, %130 : vector<16x1xi1>, vector<16x1xf32>
    %cst_47 = arith.constant 1.000000e-30 : f32
    %133 = vector.broadcast %cst_47 : f32 to vector<16x1xf32>
    %134 = arith.maximumf %132, %133 : vector<16x1xf32>
    %135 = math.rsqrt %134 : vector<16x1xf32>
    %136 = arith.mulf %134, %135 : vector<16x1xf32>
    %cst_48 = arith.constant 0.995999991 : f32
    %137 = vector.broadcast %cst_48 : f32 to vector<16x1xf32>
    %138 = arith.cmpf ogt, %136, %137 : vector<16x1xf32>
    %cst_49 = arith.constant 0.995999991 : f32
    %139 = vector.broadcast %cst_49 : f32 to vector<16x1xf32>
    %140 = arith.mulf %139, %135 : vector<16x1xf32>
    %141 = vector.broadcast %140 : vector<16x1xf32> to vector<16x32xf32>
    %142 = arith.mulf %128, %141 : vector<16x32xf32>
    %143 = vector.shape_cast %138 : vector<16x1xi1> to vector<16x1xi1>
    %144 = vector.broadcast %143 : vector<16x1xi1> to vector<16x32xi1>
    %145 = arith.select %144, %142, %128 : vector<16x32xi1>, vector<16x32xf32>
    %cst_50 = arith.constant 9.920160e-01 : f32
    %146 = vector.broadcast %cst_50 : f32 to vector<16x1xf32>
    %147 = arith.select %138, %146, %132 : vector<16x1xi1>, vector<16x1xf32>
    %148 = arith.mulf %68, %68 : vector<16x32xf32>
    %cst_51 = arith.constant dense<0.000000e+00> : vector<16xf32>
    %149 = vector.multi_reduction <add>, %148, %cst_51 [1] : vector<16x32xf32> to vector<16xf32>
    %150 = vector.shape_cast %149 : vector<16xf32> to vector<16x1xf32>
    %cst_52 = arith.constant 1.000000e-30 : f32
    %151 = vector.broadcast %cst_52 : f32 to vector<16x1xf32>
    %152 = arith.maximumf %150, %151 : vector<16x1xf32>
    %153 = math.rsqrt %152 : vector<16x1xf32>
    %154 = arith.mulf %152, %153 : vector<16x1xf32>
    %155 = arith.mulf %154, %31 : vector<16x1xf32>
    %156 = math.tanh %155 : vector<16x1xf32>
    %cst_53 = arith.constant 1.000000e+00 : f32
    %157 = vector.broadcast %cst_53 : f32 to vector<16x1xf32>
    %158 = arith.mulf %153, %157 : vector<16x1xf32>
    %159 = arith.mulf %156, %158 : vector<16x1xf32>
    %cst_54 = arith.constant 0.000000e+00 : f32
    %160 = vector.broadcast %cst_54 : f32 to vector<16x1xf32>
    %161 = arith.cmpf ole, %150, %160 : vector<16x1xf32>
    %162 = vector.broadcast %159 : vector<16x1xf32> to vector<16x32xf32>
    %163 = arith.mulf %162, %68 : vector<16x32xf32>
    %cst_55 = arith.constant 0.000000e+00 : f32
    %164 = vector.shape_cast %161 : vector<16x1xi1> to vector<16x1xi1>
    %165 = vector.broadcast %164 : vector<16x1xi1> to vector<16x32xi1>
    %166 = vector.broadcast %cst_55 : f32 to vector<16x32xf32>
    %167 = arith.select %165, %166, %163 : vector<16x32xi1>, vector<16x32xf32>
    %168 = arith.mulf %159, %159 : vector<16x1xf32>
    %169 = arith.mulf %168, %150 : vector<16x1xf32>
    %cst_56 = arith.constant 0.000000e+00 : f32
    %170 = vector.broadcast %cst_56 : f32 to vector<16x1xf32>
    %171 = arith.select %161, %170, %169 : vector<16x1xi1>, vector<16x1xf32>
    %cst_57 = arith.constant 1.000000e-30 : f32
    %172 = vector.broadcast %cst_57 : f32 to vector<16x1xf32>
    %173 = arith.maximumf %171, %172 : vector<16x1xf32>
    %174 = math.rsqrt %173 : vector<16x1xf32>
    %175 = arith.mulf %173, %174 : vector<16x1xf32>
    %cst_58 = arith.constant 0.995999991 : f32
    %176 = vector.broadcast %cst_58 : f32 to vector<16x1xf32>
    %177 = arith.cmpf ogt, %175, %176 : vector<16x1xf32>
    %cst_59 = arith.constant 0.995999991 : f32
    %178 = vector.broadcast %cst_59 : f32 to vector<16x1xf32>
    %179 = arith.mulf %178, %174 : vector<16x1xf32>
    %180 = vector.broadcast %179 : vector<16x1xf32> to vector<16x32xf32>
    %181 = arith.mulf %167, %180 : vector<16x32xf32>
    %182 = vector.shape_cast %177 : vector<16x1xi1> to vector<16x1xi1>
    %183 = vector.broadcast %182 : vector<16x1xi1> to vector<16x32xi1>
    %184 = arith.select %183, %181, %167 : vector<16x32xi1>, vector<16x32xf32>
    %cst_60 = arith.constant 9.920160e-01 : f32
    %185 = vector.broadcast %cst_60 : f32 to vector<16x1xf32>
    %186 = arith.select %177, %185, %171 : vector<16x1xi1>, vector<16x1xf32>
    %187 = arith.mulf %69, %69 : vector<16x32xf32>
    %cst_61 = arith.constant dense<0.000000e+00> : vector<16xf32>
    %188 = vector.multi_reduction <add>, %187, %cst_61 [1] : vector<16x32xf32> to vector<16xf32>
    %189 = vector.shape_cast %188 : vector<16xf32> to vector<16x1xf32>
    %cst_62 = arith.constant 1.000000e-30 : f32
    %190 = vector.broadcast %cst_62 : f32 to vector<16x1xf32>
    %191 = arith.maximumf %189, %190 : vector<16x1xf32>
    %192 = math.rsqrt %191 : vector<16x1xf32>
    %193 = arith.mulf %191, %192 : vector<16x1xf32>
    %194 = arith.mulf %193, %31 : vector<16x1xf32>
    %195 = math.tanh %194 : vector<16x1xf32>
    %cst_63 = arith.constant 1.000000e+00 : f32
    %196 = vector.broadcast %cst_63 : f32 to vector<16x1xf32>
    %197 = arith.mulf %192, %196 : vector<16x1xf32>
    %198 = arith.mulf %195, %197 : vector<16x1xf32>
    %cst_64 = arith.constant 0.000000e+00 : f32
    %199 = vector.broadcast %cst_64 : f32 to vector<16x1xf32>
    %200 = arith.cmpf ole, %189, %199 : vector<16x1xf32>
    %201 = vector.broadcast %198 : vector<16x1xf32> to vector<16x32xf32>
    %202 = arith.mulf %201, %69 : vector<16x32xf32>
    %cst_65 = arith.constant 0.000000e+00 : f32
    %203 = vector.shape_cast %200 : vector<16x1xi1> to vector<16x1xi1>
    %204 = vector.broadcast %203 : vector<16x1xi1> to vector<16x32xi1>
    %205 = vector.broadcast %cst_65 : f32 to vector<16x32xf32>
    %206 = arith.select %204, %205, %202 : vector<16x32xi1>, vector<16x32xf32>
    %207 = arith.mulf %198, %198 : vector<16x1xf32>
    %208 = arith.mulf %207, %189 : vector<16x1xf32>
    %cst_66 = arith.constant 0.000000e+00 : f32
    %209 = vector.broadcast %cst_66 : f32 to vector<16x1xf32>
    %210 = arith.select %200, %209, %208 : vector<16x1xi1>, vector<16x1xf32>
    %cst_67 = arith.constant 1.000000e-30 : f32
    %211 = vector.broadcast %cst_67 : f32 to vector<16x1xf32>
    %212 = arith.maximumf %210, %211 : vector<16x1xf32>
    %213 = math.rsqrt %212 : vector<16x1xf32>
    %214 = arith.mulf %212, %213 : vector<16x1xf32>
    %cst_68 = arith.constant 0.995999991 : f32
    %215 = vector.broadcast %cst_68 : f32 to vector<16x1xf32>
    %216 = arith.cmpf ogt, %214, %215 : vector<16x1xf32>
    %cst_69 = arith.constant 0.995999991 : f32
    %217 = vector.broadcast %cst_69 : f32 to vector<16x1xf32>
    %218 = arith.mulf %217, %213 : vector<16x1xf32>
    %219 = vector.broadcast %218 : vector<16x1xf32> to vector<16x32xf32>
    %220 = arith.mulf %206, %219 : vector<16x32xf32>
    %221 = vector.shape_cast %216 : vector<16x1xi1> to vector<16x1xi1>
    %222 = vector.broadcast %221 : vector<16x1xi1> to vector<16x32xi1>
    %223 = arith.select %222, %220, %206 : vector<16x32xi1>, vector<16x32xf32>
    %cst_70 = arith.constant 9.920160e-01 : f32
    %224 = vector.broadcast %cst_70 : f32 to vector<16x1xf32>
    %225 = arith.select %216, %224, %210 : vector<16x1xi1>, vector<16x1xf32>
    %226 = arith.mulf %106, %184 : vector<16x32xf32>
    %cst_71 = arith.constant dense<0.000000e+00> : vector<16xf32>
    %227 = vector.multi_reduction <add>, %226, %cst_71 [1] : vector<16x32xf32> to vector<16xf32>
    %228 = vector.shape_cast %227 : vector<16xf32> to vector<16x1xf32>
    %cst_72 = arith.constant 2.000000e+00 : f32
    %229 = vector.broadcast %cst_72 : f32 to vector<16x1xf32>
    %230 = arith.mulf %229, %228 : vector<16x1xf32>
    %cst_73 = arith.constant 1.000000e+00 : f32
    %231 = vector.broadcast %cst_73 : f32 to vector<16x1xf32>
    %232 = arith.addf %231, %230 : vector<16x1xf32>
    %cst_74 = arith.constant 1.000000e+00 : f32
    %233 = vector.broadcast %cst_74 : f32 to vector<16x1xf32>
    %234 = arith.mulf %233, %186 : vector<16x1xf32>
    %235 = arith.addf %232, %234 : vector<16x1xf32>
    %cst_75 = arith.constant 1.000000e+00 : f32
    %236 = vector.broadcast %cst_75 : f32 to vector<16x1xf32>
    %237 = arith.mulf %236, %108 : vector<16x1xf32>
    %cst_76 = arith.constant 1.000000e+00 : f32
    %238 = vector.broadcast %cst_76 : f32 to vector<16x1xf32>
    %239 = arith.subf %238, %237 : vector<16x1xf32>
    %cst_77 = arith.constant 2.000000e+00 : f32
    %240 = vector.broadcast %cst_77 : f32 to vector<16x1xf32>
    %241 = arith.mulf %240, %228 : vector<16x1xf32>
    %cst_78 = arith.constant 1.000000e+00 : f32
    %242 = vector.broadcast %cst_78 : f32 to vector<16x1xf32>
    %243 = arith.addf %242, %241 : vector<16x1xf32>
    %cst_79 = arith.constant 1.000000e+00 : f32
    %244 = vector.broadcast %cst_79 : f32 to vector<16x1xf32>
    %245 = arith.mulf %244, %108 : vector<16x1xf32>
    %246 = arith.mulf %245, %186 : vector<16x1xf32>
    %247 = arith.addf %243, %246 : vector<16x1xf32>
    %cst_80 = arith.constant 1.000000e-15 : f32
    %248 = vector.broadcast %cst_80 : f32 to vector<16x1xf32>
    %249 = arith.maximumf %247, %248 : vector<16x1xf32>
    %250 = tpu.reciprocal %249 {approx = true} : vector<16x1xf32> -> vector<16x1xf32>
    %251 = vector.broadcast %235 : vector<16x1xf32> to vector<16x32xf32>
    %252 = arith.mulf %251, %106 : vector<16x32xf32>
    %253 = vector.broadcast %239 : vector<16x1xf32> to vector<16x32xf32>
    %254 = arith.mulf %253, %184 : vector<16x32xf32>
    %255 = arith.addf %252, %254 : vector<16x32xf32>
    %256 = vector.broadcast %250 : vector<16x1xf32> to vector<16x32xf32>
    %257 = arith.mulf %255, %256 : vector<16x32xf32>
    %258 = arith.mulf %235, %235 : vector<16x1xf32>
    %259 = arith.mulf %258, %108 : vector<16x1xf32>
    %cst_81 = arith.constant 2.000000e+00 : f32
    %260 = vector.broadcast %cst_81 : f32 to vector<16x1xf32>
    %261 = arith.mulf %260, %235 : vector<16x1xf32>
    %262 = arith.mulf %261, %239 : vector<16x1xf32>
    %263 = arith.mulf %262, %228 : vector<16x1xf32>
    %264 = arith.addf %259, %263 : vector<16x1xf32>
    %265 = arith.mulf %239, %239 : vector<16x1xf32>
    %266 = arith.mulf %265, %186 : vector<16x1xf32>
    %267 = arith.addf %264, %266 : vector<16x1xf32>
    %cst_82 = arith.constant 0.000000e+00 : f32
    %268 = vector.broadcast %cst_82 : f32 to vector<16x1xf32>
    %269 = arith.maximumf %267, %268 : vector<16x1xf32>
    %270 = arith.mulf %250, %250 : vector<16x1xf32>
    %271 = arith.mulf %269, %270 : vector<16x1xf32>
    %cst_83 = arith.constant 1.000000e-30 : f32
    %272 = vector.broadcast %cst_83 : f32 to vector<16x1xf32>
    %273 = arith.maximumf %271, %272 : vector<16x1xf32>
    %274 = math.rsqrt %273 : vector<16x1xf32>
    %275 = arith.mulf %273, %274 : vector<16x1xf32>
    %cst_84 = arith.constant 0.995999991 : f32
    %276 = vector.broadcast %cst_84 : f32 to vector<16x1xf32>
    %277 = arith.cmpf ogt, %275, %276 : vector<16x1xf32>
    %cst_85 = arith.constant 0.995999991 : f32
    %278 = vector.broadcast %cst_85 : f32 to vector<16x1xf32>
    %279 = arith.mulf %278, %274 : vector<16x1xf32>
    %280 = vector.broadcast %279 : vector<16x1xf32> to vector<16x32xf32>
    %281 = arith.mulf %257, %280 : vector<16x32xf32>
    %282 = vector.shape_cast %277 : vector<16x1xi1> to vector<16x1xi1>
    %283 = vector.broadcast %282 : vector<16x1xi1> to vector<16x32xi1>
    %284 = arith.select %283, %281, %257 : vector<16x32xi1>, vector<16x32xf32>
    %cst_86 = arith.constant 9.920160e-01 : f32
    %285 = vector.broadcast %cst_86 : f32 to vector<16x1xf32>
    %286 = arith.select %277, %285, %271 : vector<16x1xi1>, vector<16x1xf32>
    %287 = vector.broadcast %3 : vector<1x32xf32> to vector<16x32xf32>
    %288 = arith.mulf %284, %287 : vector<16x32xf32>
    %cst_87 = arith.constant dense<0.000000e+00> : vector<16xf32>
    %289 = vector.multi_reduction <add>, %288, %cst_87 [1] : vector<16x32xf32> to vector<16xf32>
    %290 = vector.shape_cast %289 : vector<16xf32> to vector<16x1xf32>
    %cst_88 = arith.constant 2.000000e+00 : f32
    %291 = vector.broadcast %cst_88 : f32 to vector<16x1xf32>
    %292 = arith.mulf %291, %290 : vector<16x1xf32>
    %cst_89 = arith.constant 1.000000e+00 : f32
    %293 = vector.broadcast %cst_89 : f32 to vector<16x1xf32>
    %294 = arith.addf %293, %292 : vector<16x1xf32>
    %cst_90 = arith.constant 1.000000e+00 : f32
    %295 = vector.broadcast %cst_90 : f32 to vector<1x1xf32>
    %296 = arith.mulf %295, %54 : vector<1x1xf32>
    %297 = vector.broadcast %296 : vector<1x1xf32> to vector<16x1xf32>
    %298 = arith.addf %294, %297 : vector<16x1xf32>
    %cst_91 = arith.constant 1.000000e+00 : f32
    %299 = vector.broadcast %cst_91 : f32 to vector<16x1xf32>
    %300 = arith.mulf %299, %286 : vector<16x1xf32>
    %cst_92 = arith.constant 1.000000e+00 : f32
    %301 = vector.broadcast %cst_92 : f32 to vector<16x1xf32>
    %302 = arith.subf %301, %300 : vector<16x1xf32>
    %cst_93 = arith.constant 2.000000e+00 : f32
    %303 = vector.broadcast %cst_93 : f32 to vector<16x1xf32>
    %304 = arith.mulf %303, %290 : vector<16x1xf32>
    %cst_94 = arith.constant 1.000000e+00 : f32
    %305 = vector.broadcast %cst_94 : f32 to vector<16x1xf32>
    %306 = arith.addf %305, %304 : vector<16x1xf32>
    %cst_95 = arith.constant 1.000000e+00 : f32
    %307 = vector.broadcast %cst_95 : f32 to vector<16x1xf32>
    %308 = arith.mulf %307, %286 : vector<16x1xf32>
    %309 = vector.broadcast %54 : vector<1x1xf32> to vector<16x1xf32>
    %310 = arith.mulf %308, %309 : vector<16x1xf32>
    %311 = arith.addf %306, %310 : vector<16x1xf32>
    %cst_96 = arith.constant 1.000000e-15 : f32
    %312 = vector.broadcast %cst_96 : f32 to vector<16x1xf32>
    %313 = arith.maximumf %311, %312 : vector<16x1xf32>
    %314 = tpu.reciprocal %313 {approx = true} : vector<16x1xf32> -> vector<16x1xf32>
    %315 = vector.broadcast %298 : vector<16x1xf32> to vector<16x32xf32>
    %316 = arith.mulf %315, %284 : vector<16x32xf32>
    %317 = vector.broadcast %302 : vector<16x1xf32> to vector<16x32xf32>
    %318 = vector.broadcast %3 : vector<1x32xf32> to vector<16x32xf32>
    %319 = arith.mulf %317, %318 : vector<16x32xf32>
    %320 = arith.addf %316, %319 : vector<16x32xf32>
    %321 = vector.broadcast %314 : vector<16x1xf32> to vector<16x32xf32>
    %322 = arith.mulf %320, %321 : vector<16x32xf32>
    %323 = arith.mulf %298, %298 : vector<16x1xf32>
    %324 = arith.mulf %323, %286 : vector<16x1xf32>
    %cst_97 = arith.constant 2.000000e+00 : f32
    %325 = vector.broadcast %cst_97 : f32 to vector<16x1xf32>
    %326 = arith.mulf %325, %298 : vector<16x1xf32>
    %327 = arith.mulf %326, %302 : vector<16x1xf32>
    %328 = arith.mulf %327, %290 : vector<16x1xf32>
    %329 = arith.addf %324, %328 : vector<16x1xf32>
    %330 = arith.mulf %302, %302 : vector<16x1xf32>
    %331 = vector.broadcast %54 : vector<1x1xf32> to vector<16x1xf32>
    %332 = arith.mulf %330, %331 : vector<16x1xf32>
    %333 = arith.addf %329, %332 : vector<16x1xf32>
    %cst_98 = arith.constant 0.000000e+00 : f32
    %334 = vector.broadcast %cst_98 : f32 to vector<16x1xf32>
    %335 = arith.maximumf %333, %334 : vector<16x1xf32>
    %336 = arith.mulf %314, %314 : vector<16x1xf32>
    %337 = arith.mulf %335, %336 : vector<16x1xf32>
    %cst_99 = arith.constant 1.000000e-30 : f32
    %338 = vector.broadcast %cst_99 : f32 to vector<16x1xf32>
    %339 = arith.maximumf %337, %338 : vector<16x1xf32>
    %340 = math.rsqrt %339 : vector<16x1xf32>
    %341 = arith.mulf %339, %340 : vector<16x1xf32>
    %cst_100 = arith.constant 0.995999991 : f32
    %342 = vector.broadcast %cst_100 : f32 to vector<16x1xf32>
    %343 = arith.cmpf ogt, %341, %342 : vector<16x1xf32>
    %cst_101 = arith.constant 0.995999991 : f32
    %344 = vector.broadcast %cst_101 : f32 to vector<16x1xf32>
    %345 = arith.mulf %344, %340 : vector<16x1xf32>
    %346 = vector.broadcast %345 : vector<16x1xf32> to vector<16x32xf32>
    %347 = arith.mulf %322, %346 : vector<16x32xf32>
    %348 = vector.shape_cast %343 : vector<16x1xi1> to vector<16x1xi1>
    %349 = vector.broadcast %348 : vector<16x1xi1> to vector<16x32xi1>
    %350 = arith.select %349, %347, %322 : vector<16x32xi1>, vector<16x32xf32>
    %cst_102 = arith.constant 9.920160e-01 : f32
    %351 = vector.broadcast %cst_102 : f32 to vector<16x1xf32>
    %352 = arith.select %343, %351, %337 : vector<16x1xi1>, vector<16x1xf32>
    %353 = arith.mulf %145, %223 : vector<16x32xf32>
    %cst_103 = arith.constant dense<0.000000e+00> : vector<16xf32>
    %354 = vector.multi_reduction <add>, %353, %cst_103 [1] : vector<16x32xf32> to vector<16xf32>
    %355 = vector.shape_cast %354 : vector<16xf32> to vector<16x1xf32>
    %cst_104 = arith.constant 2.000000e+00 : f32
    %356 = vector.broadcast %cst_104 : f32 to vector<16x1xf32>
    %357 = arith.mulf %356, %355 : vector<16x1xf32>
    %cst_105 = arith.constant 1.000000e+00 : f32
    %358 = vector.broadcast %cst_105 : f32 to vector<16x1xf32>
    %359 = arith.addf %358, %357 : vector<16x1xf32>
    %cst_106 = arith.constant 1.000000e+00 : f32
    %360 = vector.broadcast %cst_106 : f32 to vector<16x1xf32>
    %361 = arith.mulf %360, %225 : vector<16x1xf32>
    %362 = arith.addf %359, %361 : vector<16x1xf32>
    %cst_107 = arith.constant 1.000000e+00 : f32
    %363 = vector.broadcast %cst_107 : f32 to vector<16x1xf32>
    %364 = arith.mulf %363, %147 : vector<16x1xf32>
    %cst_108 = arith.constant 1.000000e+00 : f32
    %365 = vector.broadcast %cst_108 : f32 to vector<16x1xf32>
    %366 = arith.subf %365, %364 : vector<16x1xf32>
    %cst_109 = arith.constant 2.000000e+00 : f32
    %367 = vector.broadcast %cst_109 : f32 to vector<16x1xf32>
    %368 = arith.mulf %367, %355 : vector<16x1xf32>
    %cst_110 = arith.constant 1.000000e+00 : f32
    %369 = vector.broadcast %cst_110 : f32 to vector<16x1xf32>
    %370 = arith.addf %369, %368 : vector<16x1xf32>
    %cst_111 = arith.constant 1.000000e+00 : f32
    %371 = vector.broadcast %cst_111 : f32 to vector<16x1xf32>
    %372 = arith.mulf %371, %147 : vector<16x1xf32>
    %373 = arith.mulf %372, %225 : vector<16x1xf32>
    %374 = arith.addf %370, %373 : vector<16x1xf32>
    %cst_112 = arith.constant 1.000000e-15 : f32
    %375 = vector.broadcast %cst_112 : f32 to vector<16x1xf32>
    %376 = arith.maximumf %374, %375 : vector<16x1xf32>
    %377 = tpu.reciprocal %376 {approx = true} : vector<16x1xf32> -> vector<16x1xf32>
    %378 = vector.broadcast %362 : vector<16x1xf32> to vector<16x32xf32>
    %379 = arith.mulf %378, %145 : vector<16x32xf32>
    %380 = vector.broadcast %366 : vector<16x1xf32> to vector<16x32xf32>
    %381 = arith.mulf %380, %223 : vector<16x32xf32>
    %382 = arith.addf %379, %381 : vector<16x32xf32>
    %383 = vector.broadcast %377 : vector<16x1xf32> to vector<16x32xf32>
    %384 = arith.mulf %382, %383 : vector<16x32xf32>
    %385 = arith.mulf %362, %362 : vector<16x1xf32>
    %386 = arith.mulf %385, %147 : vector<16x1xf32>
    %cst_113 = arith.constant 2.000000e+00 : f32
    %387 = vector.broadcast %cst_113 : f32 to vector<16x1xf32>
    %388 = arith.mulf %387, %362 : vector<16x1xf32>
    %389 = arith.mulf %388, %366 : vector<16x1xf32>
    %390 = arith.mulf %389, %355 : vector<16x1xf32>
    %391 = arith.addf %386, %390 : vector<16x1xf32>
    %392 = arith.mulf %366, %366 : vector<16x1xf32>
    %393 = arith.mulf %392, %225 : vector<16x1xf32>
    %394 = arith.addf %391, %393 : vector<16x1xf32>
    %cst_114 = arith.constant 0.000000e+00 : f32
    %395 = vector.broadcast %cst_114 : f32 to vector<16x1xf32>
    %396 = arith.maximumf %394, %395 : vector<16x1xf32>
    %397 = arith.mulf %377, %377 : vector<16x1xf32>
    %398 = arith.mulf %396, %397 : vector<16x1xf32>
    %cst_115 = arith.constant 1.000000e-30 : f32
    %399 = vector.broadcast %cst_115 : f32 to vector<16x1xf32>
    %400 = arith.maximumf %398, %399 : vector<16x1xf32>
    %401 = math.rsqrt %400 : vector<16x1xf32>
    %402 = arith.mulf %400, %401 : vector<16x1xf32>
    %cst_116 = arith.constant 0.995999991 : f32
    %403 = vector.broadcast %cst_116 : f32 to vector<16x1xf32>
    %404 = arith.cmpf ogt, %402, %403 : vector<16x1xf32>
    %cst_117 = arith.constant 0.995999991 : f32
    %405 = vector.broadcast %cst_117 : f32 to vector<16x1xf32>
    %406 = arith.mulf %405, %401 : vector<16x1xf32>
    %407 = vector.broadcast %406 : vector<16x1xf32> to vector<16x32xf32>
    %408 = arith.mulf %384, %407 : vector<16x32xf32>
    %409 = vector.shape_cast %404 : vector<16x1xi1> to vector<16x1xi1>
    %410 = vector.broadcast %409 : vector<16x1xi1> to vector<16x32xi1>
    %411 = arith.select %410, %408, %384 : vector<16x32xi1>, vector<16x32xf32>
    %cst_118 = arith.constant 9.920160e-01 : f32
    %412 = vector.broadcast %cst_118 : f32 to vector<16x1xf32>
    %413 = arith.select %404, %412, %398 : vector<16x1xi1>, vector<16x1xf32>
    %414 = vector.broadcast %4 : vector<1x32xf32> to vector<16x32xf32>
    %415 = arith.mulf %411, %414 : vector<16x32xf32>
    %cst_119 = arith.constant dense<0.000000e+00> : vector<16xf32>
    %416 = vector.multi_reduction <add>, %415, %cst_119 [1] : vector<16x32xf32> to vector<16xf32>
    %417 = vector.shape_cast %416 : vector<16xf32> to vector<16x1xf32>
    %cst_120 = arith.constant 2.000000e+00 : f32
    %418 = vector.broadcast %cst_120 : f32 to vector<16x1xf32>
    %419 = arith.mulf %418, %417 : vector<16x1xf32>
    %cst_121 = arith.constant 1.000000e+00 : f32
    %420 = vector.broadcast %cst_121 : f32 to vector<16x1xf32>
    %421 = arith.addf %420, %419 : vector<16x1xf32>
    %cst_122 = arith.constant 1.000000e+00 : f32
    %422 = vector.broadcast %cst_122 : f32 to vector<1x1xf32>
    %423 = arith.mulf %422, %57 : vector<1x1xf32>
    %424 = vector.broadcast %423 : vector<1x1xf32> to vector<16x1xf32>
    %425 = arith.addf %421, %424 : vector<16x1xf32>
    %cst_123 = arith.constant 1.000000e+00 : f32
    %426 = vector.broadcast %cst_123 : f32 to vector<16x1xf32>
    %427 = arith.mulf %426, %413 : vector<16x1xf32>
    %cst_124 = arith.constant 1.000000e+00 : f32
    %428 = vector.broadcast %cst_124 : f32 to vector<16x1xf32>
    %429 = arith.subf %428, %427 : vector<16x1xf32>
    %cst_125 = arith.constant 2.000000e+00 : f32
    %430 = vector.broadcast %cst_125 : f32 to vector<16x1xf32>
    %431 = arith.mulf %430, %417 : vector<16x1xf32>
    %cst_126 = arith.constant 1.000000e+00 : f32
    %432 = vector.broadcast %cst_126 : f32 to vector<16x1xf32>
    %433 = arith.addf %432, %431 : vector<16x1xf32>
    %cst_127 = arith.constant 1.000000e+00 : f32
    %434 = vector.broadcast %cst_127 : f32 to vector<16x1xf32>
    %435 = arith.mulf %434, %413 : vector<16x1xf32>
    %436 = vector.broadcast %57 : vector<1x1xf32> to vector<16x1xf32>
    %437 = arith.mulf %435, %436 : vector<16x1xf32>
    %438 = arith.addf %433, %437 : vector<16x1xf32>
    %cst_128 = arith.constant 1.000000e-15 : f32
    %439 = vector.broadcast %cst_128 : f32 to vector<16x1xf32>
    %440 = arith.maximumf %438, %439 : vector<16x1xf32>
    %441 = tpu.reciprocal %440 {approx = true} : vector<16x1xf32> -> vector<16x1xf32>
    %442 = vector.broadcast %425 : vector<16x1xf32> to vector<16x32xf32>
    %443 = arith.mulf %442, %411 : vector<16x32xf32>
    %444 = vector.broadcast %429 : vector<16x1xf32> to vector<16x32xf32>
    %445 = vector.broadcast %4 : vector<1x32xf32> to vector<16x32xf32>
    %446 = arith.mulf %444, %445 : vector<16x32xf32>
    %447 = arith.addf %443, %446 : vector<16x32xf32>
    %448 = vector.broadcast %441 : vector<16x1xf32> to vector<16x32xf32>
    %449 = arith.mulf %447, %448 : vector<16x32xf32>
    %450 = arith.mulf %425, %425 : vector<16x1xf32>
    %451 = arith.mulf %450, %413 : vector<16x1xf32>
    %cst_129 = arith.constant 2.000000e+00 : f32
    %452 = vector.broadcast %cst_129 : f32 to vector<16x1xf32>
    %453 = arith.mulf %452, %425 : vector<16x1xf32>
    %454 = arith.mulf %453, %429 : vector<16x1xf32>
    %455 = arith.mulf %454, %417 : vector<16x1xf32>
    %456 = arith.addf %451, %455 : vector<16x1xf32>
    %457 = arith.mulf %429, %429 : vector<16x1xf32>
    %458 = vector.broadcast %57 : vector<1x1xf32> to vector<16x1xf32>
    %459 = arith.mulf %457, %458 : vector<16x1xf32>
    %460 = arith.addf %456, %459 : vector<16x1xf32>
    %cst_130 = arith.constant 0.000000e+00 : f32
    %461 = vector.broadcast %cst_130 : f32 to vector<16x1xf32>
    %462 = arith.maximumf %460, %461 : vector<16x1xf32>
    %463 = arith.mulf %441, %441 : vector<16x1xf32>
    %464 = arith.mulf %462, %463 : vector<16x1xf32>
    %cst_131 = arith.constant 1.000000e-30 : f32
    %465 = vector.broadcast %cst_131 : f32 to vector<16x1xf32>
    %466 = arith.maximumf %464, %465 : vector<16x1xf32>
    %467 = math.rsqrt %466 : vector<16x1xf32>
    %468 = arith.mulf %466, %467 : vector<16x1xf32>
    %cst_132 = arith.constant 0.995999991 : f32
    %469 = vector.broadcast %cst_132 : f32 to vector<16x1xf32>
    %470 = arith.cmpf ogt, %468, %469 : vector<16x1xf32>
    %cst_133 = arith.constant 0.995999991 : f32
    %471 = vector.broadcast %cst_133 : f32 to vector<16x1xf32>
    %472 = arith.mulf %471, %467 : vector<16x1xf32>
    %473 = vector.broadcast %472 : vector<16x1xf32> to vector<16x32xf32>
    %474 = arith.mulf %449, %473 : vector<16x32xf32>
    %475 = vector.shape_cast %470 : vector<16x1xi1> to vector<16x1xi1>
    %476 = vector.broadcast %475 : vector<16x1xi1> to vector<16x32xi1>
    %477 = arith.select %476, %474, %449 : vector<16x32xi1>, vector<16x32xf32>
    %cst_134 = arith.constant 9.920160e-01 : f32
    %478 = vector.broadcast %cst_134 : f32 to vector<16x1xf32>
    %479 = arith.select %470, %478, %464 : vector<16x1xi1>, vector<16x1xf32>
    %cst_135 = arith.constant 1.000000e-30 : f32
    %480 = vector.broadcast %cst_135 : f32 to vector<16x1xf32>
    %481 = arith.maximumf %352, %480 : vector<16x1xf32>
    %482 = math.rsqrt %481 : vector<16x1xf32>
    %483 = arith.mulf %481, %482 : vector<16x1xf32>
    %cst_136 = arith.constant 1.000000e+00 : f32
    %484 = vector.broadcast %cst_136 : f32 to vector<16x1xf32>
    %485 = arith.mulf %484, %483 : vector<16x1xf32>
    %cst_137 = arith.constant -0.99999988 : f32
    %cst_138 = arith.constant 0.99999988 : f32
    %486 = vector.broadcast %cst_137 : f32 to vector<16x1xf32>
    %487 = arith.maximumf %486, %485 : vector<16x1xf32>
    %488 = vector.broadcast %cst_138 : f32 to vector<16x1xf32>
    %489 = arith.minimumf %488, %487 : vector<16x1xf32>
    %cst_139 = arith.constant 1.000000e+00 : f32
    %490 = vector.broadcast %cst_139 : f32 to vector<16x1xf32>
    %491 = arith.addf %490, %489 : vector<16x1xf32>
    %cst_140 = arith.constant 1.000000e+00 : f32
    %492 = vector.broadcast %cst_140 : f32 to vector<16x1xf32>
    %493 = arith.subf %492, %489 : vector<16x1xf32>
    %494 = tpu.reciprocal %493 {approx = true} : vector<16x1xf32> -> vector<16x1xf32>
    %495 = arith.mulf %491, %494 : vector<16x1xf32>
    %496 = math.log %495 : vector<16x1xf32>
    %cst_141 = arith.constant 5.000000e-01 : f32
    %497 = vector.broadcast %cst_141 : f32 to vector<16x1xf32>
    %498 = arith.mulf %497, %496 : vector<16x1xf32>
    %cst_142 = arith.constant 1.000000e+00 : f32
    %499 = vector.broadcast %cst_142 : f32 to vector<16x1xf32>
    %500 = arith.divf %482, %499 : vector<16x1xf32>
    %501 = arith.mulf %498, %500 : vector<16x1xf32>
    %502 = vector.broadcast %501 : vector<16x1xf32> to vector<16x32xf32>
    %503 = arith.mulf %350, %502 : vector<16x32xf32>
    %cst_143 = arith.constant 5.000000e-01 : f32
    %504 = vector.broadcast %cst_143 : f32 to vector<16x32xf32>
    %505 = arith.mulf %504, %503 : vector<16x32xf32>
    %506 = math.tanh %505 : vector<16x32xf32>
    %cst_144 = arith.constant 1.000000e+00 : f32
    %507 = vector.broadcast %cst_144 : f32 to vector<16x32xf32>
    %508 = arith.addf %506, %507 : vector<16x32xf32>
    %cst_145 = arith.constant 5.000000e-01 : f32
    %509 = vector.broadcast %cst_145 : f32 to vector<16x32xf32>
    %510 = arith.mulf %509, %508 : vector<16x32xf32>
    %cst_146 = arith.constant 1.000000e-30 : f32
    %511 = vector.broadcast %cst_146 : f32 to vector<16x1xf32>
    %512 = arith.maximumf %479, %511 : vector<16x1xf32>
    %513 = math.rsqrt %512 : vector<16x1xf32>
    %514 = arith.mulf %512, %513 : vector<16x1xf32>
    %cst_147 = arith.constant 1.000000e+00 : f32
    %515 = vector.broadcast %cst_147 : f32 to vector<16x1xf32>
    %516 = arith.mulf %515, %514 : vector<16x1xf32>
    %cst_148 = arith.constant -0.99999988 : f32
    %cst_149 = arith.constant 0.99999988 : f32
    %517 = vector.broadcast %cst_148 : f32 to vector<16x1xf32>
    %518 = arith.maximumf %517, %516 : vector<16x1xf32>
    %519 = vector.broadcast %cst_149 : f32 to vector<16x1xf32>
    %520 = arith.minimumf %519, %518 : vector<16x1xf32>
    %cst_150 = arith.constant 1.000000e+00 : f32
    %521 = vector.broadcast %cst_150 : f32 to vector<16x1xf32>
    %522 = arith.addf %521, %520 : vector<16x1xf32>
    %cst_151 = arith.constant 1.000000e+00 : f32
    %523 = vector.broadcast %cst_151 : f32 to vector<16x1xf32>
    %524 = arith.subf %523, %520 : vector<16x1xf32>
    %525 = tpu.reciprocal %524 {approx = true} : vector<16x1xf32> -> vector<16x1xf32>
    %526 = arith.mulf %522, %525 : vector<16x1xf32>
    %527 = math.log %526 : vector<16x1xf32>
    %cst_152 = arith.constant 5.000000e-01 : f32
    %528 = vector.broadcast %cst_152 : f32 to vector<16x1xf32>
    %529 = arith.mulf %528, %527 : vector<16x1xf32>
    %cst_153 = arith.constant 1.000000e+00 : f32
    %530 = vector.broadcast %cst_153 : f32 to vector<16x1xf32>
    %531 = arith.divf %513, %530 : vector<16x1xf32>
    %532 = arith.mulf %529, %531 : vector<16x1xf32>
    %533 = vector.broadcast %532 : vector<16x1xf32> to vector<16x32xf32>
    %534 = arith.mulf %477, %533 : vector<16x32xf32>
    %cst_154 = arith.constant 5.000000e-01 : f32
    %535 = vector.broadcast %cst_154 : f32 to vector<16x32xf32>
    %536 = arith.mulf %535, %534 : vector<16x32xf32>
    %537 = math.tanh %536 : vector<16x32xf32>
    %cst_155 = arith.constant 1.000000e+00 : f32
    %538 = vector.broadcast %cst_155 : f32 to vector<16x32xf32>
    %539 = arith.addf %537, %538 : vector<16x32xf32>
    %cst_156 = arith.constant 5.000000e-01 : f32
    %540 = vector.broadcast %cst_156 : f32 to vector<16x32xf32>
    %541 = arith.mulf %540, %539 : vector<16x32xf32>
    %542 = arith.mulf %1, %541 : vector<16x32xf32>
    %543 = arith.mulf %541, %541 : vector<16x32xf32>
    %cst_157 = arith.constant dense<0.000000e+00> : vector<16xf32>
    %544 = vector.multi_reduction <add>, %543, %cst_157 [1] : vector<16x32xf32> to vector<16xf32>
    %545 = vector.shape_cast %544 : vector<16xf32> to vector<16x1xf32>
    %cst_158 = arith.constant 1.000000e-30 : f32
    %546 = vector.broadcast %cst_158 : f32 to vector<16x1xf32>
    %547 = arith.maximumf %545, %546 : vector<16x1xf32>
    %548 = math.rsqrt %547 : vector<16x1xf32>
    %549 = arith.mulf %547, %548 : vector<16x1xf32>
    %cst_159 = arith.constant 1.000000e+00 : f32
    %550 = vector.broadcast %cst_159 : f32 to vector<16x1xf32>
    %551 = arith.mulf %550, %549 : vector<16x1xf32>
    %cst_160 = arith.constant -0.99999988 : f32
    %cst_161 = arith.constant 0.99999988 : f32
    %552 = vector.broadcast %cst_160 : f32 to vector<16x1xf32>
    %553 = arith.maximumf %552, %551 : vector<16x1xf32>
    %554 = vector.broadcast %cst_161 : f32 to vector<16x1xf32>
    %555 = arith.minimumf %554, %553 : vector<16x1xf32>
    %cst_162 = arith.constant 1.000000e+00 : f32
    %556 = vector.broadcast %cst_162 : f32 to vector<16x1xf32>
    %557 = arith.addf %556, %555 : vector<16x1xf32>
    %cst_163 = arith.constant 1.000000e+00 : f32
    %558 = vector.broadcast %cst_163 : f32 to vector<16x1xf32>
    %559 = arith.subf %558, %555 : vector<16x1xf32>
    %560 = tpu.reciprocal %559 {approx = true} : vector<16x1xf32> -> vector<16x1xf32>
    %561 = arith.mulf %557, %560 : vector<16x1xf32>
    %562 = math.log %561 : vector<16x1xf32>
    %cst_164 = arith.constant 5.000000e-01 : f32
    %563 = vector.broadcast %cst_164 : f32 to vector<16x1xf32>
    %564 = arith.mulf %563, %562 : vector<16x1xf32>
    %565 = arith.mulf %564, %548 : vector<16x1xf32>
    %566 = arith.mulf %542, %542 : vector<16x32xf32>
    %cst_165 = arith.constant dense<0.000000e+00> : vector<16xf32>
    %567 = vector.multi_reduction <add>, %566, %cst_165 [1] : vector<16x32xf32> to vector<16xf32>
    %568 = vector.shape_cast %567 : vector<16xf32> to vector<16x1xf32>
    %cst_166 = arith.constant 1.000000e-30 : f32
    %569 = vector.broadcast %cst_166 : f32 to vector<16x1xf32>
    %570 = arith.maximumf %568, %569 : vector<16x1xf32>
    %571 = math.rsqrt %570 : vector<16x1xf32>
    %572 = arith.mulf %570, %571 : vector<16x1xf32>
    %573 = arith.mulf %572, %565 : vector<16x1xf32>
    %574 = math.tanh %573 : vector<16x1xf32>
    %cst_167 = arith.constant 1.000000e+00 : f32
    %575 = vector.broadcast %cst_167 : f32 to vector<16x1xf32>
    %576 = arith.mulf %571, %575 : vector<16x1xf32>
    %577 = arith.mulf %574, %576 : vector<16x1xf32>
    %cst_168 = arith.constant 0.000000e+00 : f32
    %578 = vector.broadcast %cst_168 : f32 to vector<16x1xf32>
    %579 = arith.cmpf ole, %568, %578 : vector<16x1xf32>
    %580 = vector.broadcast %577 : vector<16x1xf32> to vector<16x32xf32>
    %581 = arith.mulf %580, %542 : vector<16x32xf32>
    %cst_169 = arith.constant 0.000000e+00 : f32
    %582 = vector.shape_cast %579 : vector<16x1xi1> to vector<16x1xi1>
    %583 = vector.broadcast %582 : vector<16x1xi1> to vector<16x32xi1>
    %584 = vector.broadcast %cst_169 : f32 to vector<16x32xf32>
    %585 = arith.select %583, %584, %581 : vector<16x32xi1>, vector<16x32xf32>
    %586 = arith.mulf %577, %577 : vector<16x1xf32>
    %587 = arith.mulf %586, %568 : vector<16x1xf32>
    %cst_170 = arith.constant 0.000000e+00 : f32
    %588 = vector.broadcast %cst_170 : f32 to vector<16x1xf32>
    %589 = arith.select %579, %588, %587 : vector<16x1xi1>, vector<16x1xf32>
    %cst_171 = arith.constant 1.000000e-30 : f32
    %590 = vector.broadcast %cst_171 : f32 to vector<16x1xf32>
    %591 = arith.maximumf %589, %590 : vector<16x1xf32>
    %592 = math.rsqrt %591 : vector<16x1xf32>
    %593 = arith.mulf %591, %592 : vector<16x1xf32>
    %cst_172 = arith.constant 0.995999991 : f32
    %594 = vector.broadcast %cst_172 : f32 to vector<16x1xf32>
    %595 = arith.cmpf ogt, %593, %594 : vector<16x1xf32>
    %cst_173 = arith.constant 0.995999991 : f32
    %596 = vector.broadcast %cst_173 : f32 to vector<16x1xf32>
    %597 = arith.mulf %596, %592 : vector<16x1xf32>
    %598 = vector.broadcast %597 : vector<16x1xf32> to vector<16x32xf32>
    %599 = arith.mulf %585, %598 : vector<16x32xf32>
    %600 = vector.shape_cast %595 : vector<16x1xi1> to vector<16x1xi1>
    %601 = vector.broadcast %600 : vector<16x1xi1> to vector<16x32xi1>
    %602 = arith.select %601, %599, %585 : vector<16x32xi1>, vector<16x32xf32>
    %cst_174 = arith.constant 9.920160e-01 : f32
    %603 = vector.broadcast %cst_174 : f32 to vector<16x1xf32>
    %604 = arith.select %595, %603, %589 : vector<16x1xi1>, vector<16x1xf32>
    %c0_175 = arith.constant 0 : index
    %c0_176 = arith.constant 0 : index
    %605 = vector.load %arg4[%c0_175, %c0_176] : memref<32x32xf32, #tpu.memory_space<vmem>>, vector<32x32xf32>
    %cst_177 = arith.constant dense<0.000000e+00> : vector<16x32xf32>
    %606 = tpu.matmul %602, %605, %cst_177 {dimension_numbers = #tpu.dot_dimension_numbers<[1], [0], [0], [1], [0, 0, 1, 1], [], []>} : vector<16x32xf32>, vector<32x32xf32>, vector<16x32xf32> -> vector<16x32xf32>
    %cst_178 = arith.constant 1.000000e-30 : f32
    %607 = vector.broadcast %cst_178 : f32 to vector<16x1xf32>
    %608 = arith.maximumf %604, %607 : vector<16x1xf32>
    %609 = math.rsqrt %608 : vector<16x1xf32>
    %610 = arith.mulf %608, %609 : vector<16x1xf32>
    %cst_179 = arith.constant 1.000000e+00 : f32
    %611 = vector.broadcast %cst_179 : f32 to vector<16x1xf32>
    %612 = arith.mulf %611, %610 : vector<16x1xf32>
    %cst_180 = arith.constant -0.99999988 : f32
    %cst_181 = arith.constant 0.99999988 : f32
    %613 = vector.broadcast %cst_180 : f32 to vector<16x1xf32>
    %614 = arith.maximumf %613, %612 : vector<16x1xf32>
    %615 = vector.broadcast %cst_181 : f32 to vector<16x1xf32>
    %616 = arith.minimumf %615, %614 : vector<16x1xf32>
    %cst_182 = arith.constant 1.000000e+00 : f32
    %617 = vector.broadcast %cst_182 : f32 to vector<16x1xf32>
    %618 = arith.addf %617, %616 : vector<16x1xf32>
    %cst_183 = arith.constant 1.000000e+00 : f32
    %619 = vector.broadcast %cst_183 : f32 to vector<16x1xf32>
    %620 = arith.subf %619, %616 : vector<16x1xf32>
    %621 = tpu.reciprocal %620 {approx = true} : vector<16x1xf32> -> vector<16x1xf32>
    %622 = arith.mulf %618, %621 : vector<16x1xf32>
    %623 = math.log %622 : vector<16x1xf32>
    %cst_184 = arith.constant 5.000000e-01 : f32
    %624 = vector.broadcast %cst_184 : f32 to vector<16x1xf32>
    %625 = arith.mulf %624, %623 : vector<16x1xf32>
    %626 = arith.mulf %625, %609 : vector<16x1xf32>
    %627 = arith.mulf %606, %606 : vector<16x32xf32>
    %cst_185 = arith.constant dense<0.000000e+00> : vector<16xf32>
    %628 = vector.multi_reduction <add>, %627, %cst_185 [1] : vector<16x32xf32> to vector<16xf32>
    %629 = vector.shape_cast %628 : vector<16xf32> to vector<16x1xf32>
    %cst_186 = arith.constant 1.000000e-30 : f32
    %630 = vector.broadcast %cst_186 : f32 to vector<16x1xf32>
    %631 = arith.maximumf %629, %630 : vector<16x1xf32>
    %632 = math.rsqrt %631 : vector<16x1xf32>
    %633 = arith.mulf %631, %632 : vector<16x1xf32>
    %634 = arith.mulf %633, %626 : vector<16x1xf32>
    %635 = math.tanh %634 : vector<16x1xf32>
    %cst_187 = arith.constant 1.000000e+00 : f32
    %636 = vector.broadcast %cst_187 : f32 to vector<16x1xf32>
    %637 = arith.mulf %632, %636 : vector<16x1xf32>
    %638 = arith.mulf %635, %637 : vector<16x1xf32>
    %cst_188 = arith.constant 0.000000e+00 : f32
    %639 = vector.broadcast %cst_188 : f32 to vector<16x1xf32>
    %640 = arith.cmpf ole, %629, %639 : vector<16x1xf32>
    %641 = vector.broadcast %638 : vector<16x1xf32> to vector<16x32xf32>
    %642 = arith.mulf %641, %606 : vector<16x32xf32>
    %cst_189 = arith.constant 0.000000e+00 : f32
    %643 = vector.shape_cast %640 : vector<16x1xi1> to vector<16x1xi1>
    %644 = vector.broadcast %643 : vector<16x1xi1> to vector<16x32xi1>
    %645 = vector.broadcast %cst_189 : f32 to vector<16x32xf32>
    %646 = arith.select %644, %645, %642 : vector<16x32xi1>, vector<16x32xf32>
    %647 = arith.mulf %638, %638 : vector<16x1xf32>
    %648 = arith.mulf %647, %629 : vector<16x1xf32>
    %cst_190 = arith.constant 0.000000e+00 : f32
    %649 = vector.broadcast %cst_190 : f32 to vector<16x1xf32>
    %650 = arith.select %640, %649, %648 : vector<16x1xi1>, vector<16x1xf32>
    %cst_191 = arith.constant 1.000000e-30 : f32
    %651 = vector.broadcast %cst_191 : f32 to vector<16x1xf32>
    %652 = arith.maximumf %650, %651 : vector<16x1xf32>
    %653 = math.rsqrt %652 : vector<16x1xf32>
    %654 = arith.mulf %652, %653 : vector<16x1xf32>
    %cst_192 = arith.constant 0.995999991 : f32
    %655 = vector.broadcast %cst_192 : f32 to vector<16x1xf32>
    %656 = arith.cmpf ogt, %654, %655 : vector<16x1xf32>
    %cst_193 = arith.constant 0.995999991 : f32
    %657 = vector.broadcast %cst_193 : f32 to vector<16x1xf32>
    %658 = arith.mulf %657, %653 : vector<16x1xf32>
    %659 = vector.broadcast %658 : vector<16x1xf32> to vector<16x32xf32>
    %660 = arith.mulf %646, %659 : vector<16x32xf32>
    %661 = vector.shape_cast %656 : vector<16x1xi1> to vector<16x1xi1>
    %662 = vector.broadcast %661 : vector<16x1xi1> to vector<16x32xi1>
    %663 = arith.select %662, %660, %646 : vector<16x32xi1>, vector<16x32xf32>
    %cst_194 = arith.constant 9.920160e-01 : f32
    %664 = vector.broadcast %cst_194 : f32 to vector<16x1xf32>
    %665 = arith.select %656, %664, %650 : vector<16x1xi1>, vector<16x1xf32>
    %666 = arith.mulf %663, %223 : vector<16x32xf32>
    %cst_195 = arith.constant dense<0.000000e+00> : vector<16xf32>
    %667 = vector.multi_reduction <add>, %666, %cst_195 [1] : vector<16x32xf32> to vector<16xf32>
    %668 = vector.shape_cast %667 : vector<16xf32> to vector<16x1xf32>
    %cst_196 = arith.constant 2.000000e+00 : f32
    %669 = vector.broadcast %cst_196 : f32 to vector<16x1xf32>
    %670 = arith.mulf %669, %668 : vector<16x1xf32>
    %cst_197 = arith.constant 1.000000e+00 : f32
    %671 = vector.broadcast %cst_197 : f32 to vector<16x1xf32>
    %672 = arith.addf %671, %670 : vector<16x1xf32>
    %cst_198 = arith.constant 1.000000e+00 : f32
    %673 = vector.broadcast %cst_198 : f32 to vector<16x1xf32>
    %674 = arith.mulf %673, %225 : vector<16x1xf32>
    %675 = arith.addf %672, %674 : vector<16x1xf32>
    %cst_199 = arith.constant 1.000000e+00 : f32
    %676 = vector.broadcast %cst_199 : f32 to vector<16x1xf32>
    %677 = arith.mulf %676, %665 : vector<16x1xf32>
    %cst_200 = arith.constant 1.000000e+00 : f32
    %678 = vector.broadcast %cst_200 : f32 to vector<16x1xf32>
    %679 = arith.subf %678, %677 : vector<16x1xf32>
    %cst_201 = arith.constant 2.000000e+00 : f32
    %680 = vector.broadcast %cst_201 : f32 to vector<16x1xf32>
    %681 = arith.mulf %680, %668 : vector<16x1xf32>
    %cst_202 = arith.constant 1.000000e+00 : f32
    %682 = vector.broadcast %cst_202 : f32 to vector<16x1xf32>
    %683 = arith.addf %682, %681 : vector<16x1xf32>
    %cst_203 = arith.constant 1.000000e+00 : f32
    %684 = vector.broadcast %cst_203 : f32 to vector<16x1xf32>
    %685 = arith.mulf %684, %665 : vector<16x1xf32>
    %686 = arith.mulf %685, %225 : vector<16x1xf32>
    %687 = arith.addf %683, %686 : vector<16x1xf32>
    %cst_204 = arith.constant 1.000000e-15 : f32
    %688 = vector.broadcast %cst_204 : f32 to vector<16x1xf32>
    %689 = arith.maximumf %687, %688 : vector<16x1xf32>
    %690 = tpu.reciprocal %689 {approx = true} : vector<16x1xf32> -> vector<16x1xf32>
    %691 = vector.broadcast %675 : vector<16x1xf32> to vector<16x32xf32>
    %692 = arith.mulf %691, %663 : vector<16x32xf32>
    %693 = vector.broadcast %679 : vector<16x1xf32> to vector<16x32xf32>
    %694 = arith.mulf %693, %223 : vector<16x32xf32>
    %695 = arith.addf %692, %694 : vector<16x32xf32>
    %696 = vector.broadcast %690 : vector<16x1xf32> to vector<16x32xf32>
    %697 = arith.mulf %695, %696 : vector<16x32xf32>
    %698 = arith.mulf %675, %675 : vector<16x1xf32>
    %699 = arith.mulf %698, %665 : vector<16x1xf32>
    %cst_205 = arith.constant 2.000000e+00 : f32
    %700 = vector.broadcast %cst_205 : f32 to vector<16x1xf32>
    %701 = arith.mulf %700, %675 : vector<16x1xf32>
    %702 = arith.mulf %701, %679 : vector<16x1xf32>
    %703 = arith.mulf %702, %668 : vector<16x1xf32>
    %704 = arith.addf %699, %703 : vector<16x1xf32>
    %705 = arith.mulf %679, %679 : vector<16x1xf32>
    %706 = arith.mulf %705, %225 : vector<16x1xf32>
    %707 = arith.addf %704, %706 : vector<16x1xf32>
    %cst_206 = arith.constant 0.000000e+00 : f32
    %708 = vector.broadcast %cst_206 : f32 to vector<16x1xf32>
    %709 = arith.maximumf %707, %708 : vector<16x1xf32>
    %710 = arith.mulf %690, %690 : vector<16x1xf32>
    %711 = arith.mulf %709, %710 : vector<16x1xf32>
    %cst_207 = arith.constant 1.000000e-30 : f32
    %712 = vector.broadcast %cst_207 : f32 to vector<16x1xf32>
    %713 = arith.maximumf %711, %712 : vector<16x1xf32>
    %714 = math.rsqrt %713 : vector<16x1xf32>
    %715 = arith.mulf %713, %714 : vector<16x1xf32>
    %cst_208 = arith.constant 0.995999991 : f32
    %716 = vector.broadcast %cst_208 : f32 to vector<16x1xf32>
    %717 = arith.cmpf ogt, %715, %716 : vector<16x1xf32>
    %cst_209 = arith.constant 0.995999991 : f32
    %718 = vector.broadcast %cst_209 : f32 to vector<16x1xf32>
    %719 = arith.mulf %718, %714 : vector<16x1xf32>
    %720 = vector.broadcast %719 : vector<16x1xf32> to vector<16x32xf32>
    %721 = arith.mulf %697, %720 : vector<16x32xf32>
    %722 = vector.shape_cast %717 : vector<16x1xi1> to vector<16x1xi1>
    %723 = vector.broadcast %722 : vector<16x1xi1> to vector<16x32xi1>
    %724 = arith.select %723, %721, %697 : vector<16x32xi1>, vector<16x32xf32>
    %cst_210 = arith.constant 9.920160e-01 : f32
    %725 = vector.broadcast %cst_210 : f32 to vector<16x1xf32>
    %726 = arith.select %717, %725, %711 : vector<16x1xi1>, vector<16x1xf32>
    %727 = vector.broadcast %5 : vector<1x32xf32> to vector<16x32xf32>
    %728 = arith.mulf %724, %727 : vector<16x32xf32>
    %cst_211 = arith.constant dense<0.000000e+00> : vector<16xf32>
    %729 = vector.multi_reduction <add>, %728, %cst_211 [1] : vector<16x32xf32> to vector<16xf32>
    %730 = vector.shape_cast %729 : vector<16xf32> to vector<16x1xf32>
    %cst_212 = arith.constant 2.000000e+00 : f32
    %731 = vector.broadcast %cst_212 : f32 to vector<16x1xf32>
    %732 = arith.mulf %731, %730 : vector<16x1xf32>
    %cst_213 = arith.constant 1.000000e+00 : f32
    %733 = vector.broadcast %cst_213 : f32 to vector<16x1xf32>
    %734 = arith.addf %733, %732 : vector<16x1xf32>
    %cst_214 = arith.constant 1.000000e+00 : f32
    %735 = vector.broadcast %cst_214 : f32 to vector<1x1xf32>
    %736 = arith.mulf %735, %60 : vector<1x1xf32>
    %737 = vector.broadcast %736 : vector<1x1xf32> to vector<16x1xf32>
    %738 = arith.addf %734, %737 : vector<16x1xf32>
    %cst_215 = arith.constant 1.000000e+00 : f32
    %739 = vector.broadcast %cst_215 : f32 to vector<16x1xf32>
    %740 = arith.mulf %739, %726 : vector<16x1xf32>
    %cst_216 = arith.constant 1.000000e+00 : f32
    %741 = vector.broadcast %cst_216 : f32 to vector<16x1xf32>
    %742 = arith.subf %741, %740 : vector<16x1xf32>
    %cst_217 = arith.constant 2.000000e+00 : f32
    %743 = vector.broadcast %cst_217 : f32 to vector<16x1xf32>
    %744 = arith.mulf %743, %730 : vector<16x1xf32>
    %cst_218 = arith.constant 1.000000e+00 : f32
    %745 = vector.broadcast %cst_218 : f32 to vector<16x1xf32>
    %746 = arith.addf %745, %744 : vector<16x1xf32>
    %cst_219 = arith.constant 1.000000e+00 : f32
    %747 = vector.broadcast %cst_219 : f32 to vector<16x1xf32>
    %748 = arith.mulf %747, %726 : vector<16x1xf32>
    %749 = vector.broadcast %60 : vector<1x1xf32> to vector<16x1xf32>
    %750 = arith.mulf %748, %749 : vector<16x1xf32>
    %751 = arith.addf %746, %750 : vector<16x1xf32>
    %cst_220 = arith.constant 1.000000e-15 : f32
    %752 = vector.broadcast %cst_220 : f32 to vector<16x1xf32>
    %753 = arith.maximumf %751, %752 : vector<16x1xf32>
    %754 = tpu.reciprocal %753 {approx = true} : vector<16x1xf32> -> vector<16x1xf32>
    %755 = vector.broadcast %738 : vector<16x1xf32> to vector<16x32xf32>
    %756 = arith.mulf %755, %724 : vector<16x32xf32>
    %757 = vector.broadcast %742 : vector<16x1xf32> to vector<16x32xf32>
    %758 = vector.broadcast %5 : vector<1x32xf32> to vector<16x32xf32>
    %759 = arith.mulf %757, %758 : vector<16x32xf32>
    %760 = arith.addf %756, %759 : vector<16x32xf32>
    %761 = vector.broadcast %754 : vector<16x1xf32> to vector<16x32xf32>
    %762 = arith.mulf %760, %761 : vector<16x32xf32>
    %763 = arith.mulf %738, %738 : vector<16x1xf32>
    %764 = arith.mulf %763, %726 : vector<16x1xf32>
    %cst_221 = arith.constant 2.000000e+00 : f32
    %765 = vector.broadcast %cst_221 : f32 to vector<16x1xf32>
    %766 = arith.mulf %765, %738 : vector<16x1xf32>
    %767 = arith.mulf %766, %742 : vector<16x1xf32>
    %768 = arith.mulf %767, %730 : vector<16x1xf32>
    %769 = arith.addf %764, %768 : vector<16x1xf32>
    %770 = arith.mulf %742, %742 : vector<16x1xf32>
    %771 = vector.broadcast %60 : vector<1x1xf32> to vector<16x1xf32>
    %772 = arith.mulf %770, %771 : vector<16x1xf32>
    %773 = arith.addf %769, %772 : vector<16x1xf32>
    %cst_222 = arith.constant 0.000000e+00 : f32
    %774 = vector.broadcast %cst_222 : f32 to vector<16x1xf32>
    %775 = arith.maximumf %773, %774 : vector<16x1xf32>
    %776 = arith.mulf %754, %754 : vector<16x1xf32>
    %777 = arith.mulf %775, %776 : vector<16x1xf32>
    %cst_223 = arith.constant 1.000000e-30 : f32
    %778 = vector.broadcast %cst_223 : f32 to vector<16x1xf32>
    %779 = arith.maximumf %777, %778 : vector<16x1xf32>
    %780 = math.rsqrt %779 : vector<16x1xf32>
    %781 = arith.mulf %779, %780 : vector<16x1xf32>
    %cst_224 = arith.constant 0.995999991 : f32
    %782 = vector.broadcast %cst_224 : f32 to vector<16x1xf32>
    %783 = arith.cmpf ogt, %781, %782 : vector<16x1xf32>
    %cst_225 = arith.constant 0.995999991 : f32
    %784 = vector.broadcast %cst_225 : f32 to vector<16x1xf32>
    %785 = arith.mulf %784, %780 : vector<16x1xf32>
    %786 = vector.broadcast %785 : vector<16x1xf32> to vector<16x32xf32>
    %787 = arith.mulf %762, %786 : vector<16x32xf32>
    %788 = vector.shape_cast %783 : vector<16x1xi1> to vector<16x1xi1>
    %789 = vector.broadcast %788 : vector<16x1xi1> to vector<16x32xi1>
    %790 = arith.select %789, %787, %762 : vector<16x32xi1>, vector<16x32xf32>
    %cst_226 = arith.constant 9.920160e-01 : f32
    %791 = vector.broadcast %cst_226 : f32 to vector<16x1xf32>
    %792 = arith.select %783, %791, %777 : vector<16x1xi1>, vector<16x1xf32>
    %cst_227 = arith.constant 0.000000e+00 : f32
    %793 = vector.broadcast %cst_227 : f32 to vector<16x32xf32>
    %794 = arith.subf %793, %1 : vector<16x32xf32>
    %795 = arith.mulf %794, %790 : vector<16x32xf32>
    %cst_228 = arith.constant dense<0.000000e+00> : vector<16xf32>
    %796 = vector.multi_reduction <add>, %795, %cst_228 [1] : vector<16x32xf32> to vector<16xf32>
    %797 = vector.shape_cast %796 : vector<16xf32> to vector<16x1xf32>
    %cst_229 = arith.constant 2.000000e+00 : f32
    %798 = vector.broadcast %cst_229 : f32 to vector<16x1xf32>
    %799 = arith.mulf %798, %797 : vector<16x1xf32>
    %cst_230 = arith.constant 1.000000e+00 : f32
    %800 = vector.broadcast %cst_230 : f32 to vector<16x1xf32>
    %801 = arith.addf %800, %799 : vector<16x1xf32>
    %cst_231 = arith.constant 1.000000e+00 : f32
    %802 = vector.broadcast %cst_231 : f32 to vector<16x1xf32>
    %803 = arith.mulf %802, %792 : vector<16x1xf32>
    %804 = arith.addf %801, %803 : vector<16x1xf32>
    %cst_232 = arith.constant 1.000000e+00 : f32
    %805 = vector.broadcast %cst_232 : f32 to vector<16x1xf32>
    %806 = arith.mulf %805, %11 : vector<16x1xf32>
    %cst_233 = arith.constant 1.000000e+00 : f32
    %807 = vector.broadcast %cst_233 : f32 to vector<16x1xf32>
    %808 = arith.subf %807, %806 : vector<16x1xf32>
    %cst_234 = arith.constant 2.000000e+00 : f32
    %809 = vector.broadcast %cst_234 : f32 to vector<16x1xf32>
    %810 = arith.mulf %809, %797 : vector<16x1xf32>
    %cst_235 = arith.constant 1.000000e+00 : f32
    %811 = vector.broadcast %cst_235 : f32 to vector<16x1xf32>
    %812 = arith.addf %811, %810 : vector<16x1xf32>
    %cst_236 = arith.constant 1.000000e+00 : f32
    %813 = vector.broadcast %cst_236 : f32 to vector<16x1xf32>
    %814 = arith.mulf %813, %11 : vector<16x1xf32>
    %815 = arith.mulf %814, %792 : vector<16x1xf32>
    %816 = arith.addf %812, %815 : vector<16x1xf32>
    %cst_237 = arith.constant 1.000000e-15 : f32
    %817 = vector.broadcast %cst_237 : f32 to vector<16x1xf32>
    %818 = arith.maximumf %816, %817 : vector<16x1xf32>
    %819 = tpu.reciprocal %818 {approx = true} : vector<16x1xf32> -> vector<16x1xf32>
    %820 = vector.broadcast %804 : vector<16x1xf32> to vector<16x32xf32>
    %821 = arith.mulf %820, %794 : vector<16x32xf32>
    %822 = vector.broadcast %808 : vector<16x1xf32> to vector<16x32xf32>
    %823 = arith.mulf %822, %790 : vector<16x32xf32>
    %824 = arith.addf %821, %823 : vector<16x32xf32>
    %825 = vector.broadcast %819 : vector<16x1xf32> to vector<16x32xf32>
    %826 = arith.mulf %824, %825 : vector<16x32xf32>
    %827 = arith.mulf %804, %804 : vector<16x1xf32>
    %828 = arith.mulf %827, %11 : vector<16x1xf32>
    %cst_238 = arith.constant 2.000000e+00 : f32
    %829 = vector.broadcast %cst_238 : f32 to vector<16x1xf32>
    %830 = arith.mulf %829, %804 : vector<16x1xf32>
    %831 = arith.mulf %830, %808 : vector<16x1xf32>
    %832 = arith.mulf %831, %797 : vector<16x1xf32>
    %833 = arith.addf %828, %832 : vector<16x1xf32>
    %834 = arith.mulf %808, %808 : vector<16x1xf32>
    %835 = arith.mulf %834, %792 : vector<16x1xf32>
    %836 = arith.addf %833, %835 : vector<16x1xf32>
    %cst_239 = arith.constant 0.000000e+00 : f32
    %837 = vector.broadcast %cst_239 : f32 to vector<16x1xf32>
    %838 = arith.maximumf %836, %837 : vector<16x1xf32>
    %839 = arith.mulf %819, %819 : vector<16x1xf32>
    %840 = arith.mulf %838, %839 : vector<16x1xf32>
    %cst_240 = arith.constant 1.000000e-30 : f32
    %841 = vector.broadcast %cst_240 : f32 to vector<16x1xf32>
    %842 = arith.maximumf %840, %841 : vector<16x1xf32>
    %843 = math.rsqrt %842 : vector<16x1xf32>
    %844 = arith.mulf %842, %843 : vector<16x1xf32>
    %cst_241 = arith.constant 0.995999991 : f32
    %845 = vector.broadcast %cst_241 : f32 to vector<16x1xf32>
    %846 = arith.cmpf ogt, %844, %845 : vector<16x1xf32>
    %cst_242 = arith.constant 0.995999991 : f32
    %847 = vector.broadcast %cst_242 : f32 to vector<16x1xf32>
    %848 = arith.mulf %847, %843 : vector<16x1xf32>
    %849 = vector.broadcast %848 : vector<16x1xf32> to vector<16x32xf32>
    %850 = arith.mulf %826, %849 : vector<16x32xf32>
    %851 = vector.shape_cast %846 : vector<16x1xi1> to vector<16x1xi1>
    %852 = vector.broadcast %851 : vector<16x1xi1> to vector<16x32xi1>
    %853 = arith.select %852, %850, %826 : vector<16x32xi1>, vector<16x32xf32>
    %854 = arith.mulf %853, %510 : vector<16x32xf32>
    %855 = arith.mulf %510, %510 : vector<16x32xf32>
    %cst_243 = arith.constant dense<0.000000e+00> : vector<16xf32>
    %856 = vector.multi_reduction <add>, %855, %cst_243 [1] : vector<16x32xf32> to vector<16xf32>
    %857 = vector.shape_cast %856 : vector<16xf32> to vector<16x1xf32>
    %cst_244 = arith.constant 1.000000e-30 : f32
    %858 = vector.broadcast %cst_244 : f32 to vector<16x1xf32>
    %859 = arith.maximumf %857, %858 : vector<16x1xf32>
    %860 = math.rsqrt %859 : vector<16x1xf32>
    %861 = arith.mulf %859, %860 : vector<16x1xf32>
    %cst_245 = arith.constant 1.000000e+00 : f32
    %862 = vector.broadcast %cst_245 : f32 to vector<16x1xf32>
    %863 = arith.mulf %862, %861 : vector<16x1xf32>
    %cst_246 = arith.constant -0.99999988 : f32
    %cst_247 = arith.constant 0.99999988 : f32
    %864 = vector.broadcast %cst_246 : f32 to vector<16x1xf32>
    %865 = arith.maximumf %864, %863 : vector<16x1xf32>
    %866 = vector.broadcast %cst_247 : f32 to vector<16x1xf32>
    %867 = arith.minimumf %866, %865 : vector<16x1xf32>
    %cst_248 = arith.constant 1.000000e+00 : f32
    %868 = vector.broadcast %cst_248 : f32 to vector<16x1xf32>
    %869 = arith.addf %868, %867 : vector<16x1xf32>
    %cst_249 = arith.constant 1.000000e+00 : f32
    %870 = vector.broadcast %cst_249 : f32 to vector<16x1xf32>
    %871 = arith.subf %870, %867 : vector<16x1xf32>
    %872 = tpu.reciprocal %871 {approx = true} : vector<16x1xf32> -> vector<16x1xf32>
    %873 = arith.mulf %869, %872 : vector<16x1xf32>
    %874 = math.log %873 : vector<16x1xf32>
    %cst_250 = arith.constant 5.000000e-01 : f32
    %875 = vector.broadcast %cst_250 : f32 to vector<16x1xf32>
    %876 = arith.mulf %875, %874 : vector<16x1xf32>
    %877 = arith.mulf %876, %860 : vector<16x1xf32>
    %878 = arith.mulf %854, %854 : vector<16x32xf32>
    %cst_251 = arith.constant dense<0.000000e+00> : vector<16xf32>
    %879 = vector.multi_reduction <add>, %878, %cst_251 [1] : vector<16x32xf32> to vector<16xf32>
    %880 = vector.shape_cast %879 : vector<16xf32> to vector<16x1xf32>
    %cst_252 = arith.constant 1.000000e-30 : f32
    %881 = vector.broadcast %cst_252 : f32 to vector<16x1xf32>
    %882 = arith.maximumf %880, %881 : vector<16x1xf32>
    %883 = math.rsqrt %882 : vector<16x1xf32>
    %884 = arith.mulf %882, %883 : vector<16x1xf32>
    %885 = arith.mulf %884, %877 : vector<16x1xf32>
    %886 = math.tanh %885 : vector<16x1xf32>
    %cst_253 = arith.constant 1.000000e+00 : f32
    %887 = vector.broadcast %cst_253 : f32 to vector<16x1xf32>
    %888 = arith.mulf %883, %887 : vector<16x1xf32>
    %889 = arith.mulf %886, %888 : vector<16x1xf32>
    %cst_254 = arith.constant 0.000000e+00 : f32
    %890 = vector.broadcast %cst_254 : f32 to vector<16x1xf32>
    %891 = arith.cmpf ole, %880, %890 : vector<16x1xf32>
    %892 = vector.broadcast %889 : vector<16x1xf32> to vector<16x32xf32>
    %893 = arith.mulf %892, %854 : vector<16x32xf32>
    %cst_255 = arith.constant 0.000000e+00 : f32
    %894 = vector.shape_cast %891 : vector<16x1xi1> to vector<16x1xi1>
    %895 = vector.broadcast %894 : vector<16x1xi1> to vector<16x32xi1>
    %896 = vector.broadcast %cst_255 : f32 to vector<16x32xf32>
    %897 = arith.select %895, %896, %893 : vector<16x32xi1>, vector<16x32xf32>
    %898 = arith.mulf %889, %889 : vector<16x1xf32>
    %899 = arith.mulf %898, %880 : vector<16x1xf32>
    %cst_256 = arith.constant 0.000000e+00 : f32
    %900 = vector.broadcast %cst_256 : f32 to vector<16x1xf32>
    %901 = arith.select %891, %900, %899 : vector<16x1xi1>, vector<16x1xf32>
    %cst_257 = arith.constant 1.000000e-30 : f32
    %902 = vector.broadcast %cst_257 : f32 to vector<16x1xf32>
    %903 = arith.maximumf %901, %902 : vector<16x1xf32>
    %904 = math.rsqrt %903 : vector<16x1xf32>
    %905 = arith.mulf %903, %904 : vector<16x1xf32>
    %cst_258 = arith.constant 0.995999991 : f32
    %906 = vector.broadcast %cst_258 : f32 to vector<16x1xf32>
    %907 = arith.cmpf ogt, %905, %906 : vector<16x1xf32>
    %cst_259 = arith.constant 0.995999991 : f32
    %908 = vector.broadcast %cst_259 : f32 to vector<16x1xf32>
    %909 = arith.mulf %908, %904 : vector<16x1xf32>
    %910 = vector.broadcast %909 : vector<16x1xf32> to vector<16x32xf32>
    %911 = arith.mulf %897, %910 : vector<16x32xf32>
    %912 = vector.shape_cast %907 : vector<16x1xi1> to vector<16x1xi1>
    %913 = vector.broadcast %912 : vector<16x1xi1> to vector<16x32xi1>
    %914 = arith.select %913, %911, %897 : vector<16x32xi1>, vector<16x32xf32>
    %cst_260 = arith.constant 9.920160e-01 : f32
    %915 = vector.broadcast %cst_260 : f32 to vector<16x1xf32>
    %916 = arith.select %907, %915, %901 : vector<16x1xi1>, vector<16x1xf32>
    %917 = arith.mulf %1, %914 : vector<16x32xf32>
    %cst_261 = arith.constant dense<0.000000e+00> : vector<16xf32>
    %918 = vector.multi_reduction <add>, %917, %cst_261 [1] : vector<16x32xf32> to vector<16xf32>
    %919 = vector.shape_cast %918 : vector<16xf32> to vector<16x1xf32>
    %cst_262 = arith.constant 2.000000e+00 : f32
    %920 = vector.broadcast %cst_262 : f32 to vector<16x1xf32>
    %921 = arith.mulf %920, %919 : vector<16x1xf32>
    %cst_263 = arith.constant 1.000000e+00 : f32
    %922 = vector.broadcast %cst_263 : f32 to vector<16x1xf32>
    %923 = arith.addf %922, %921 : vector<16x1xf32>
    %cst_264 = arith.constant 1.000000e+00 : f32
    %924 = vector.broadcast %cst_264 : f32 to vector<16x1xf32>
    %925 = arith.mulf %924, %916 : vector<16x1xf32>
    %926 = arith.addf %923, %925 : vector<16x1xf32>
    %cst_265 = arith.constant 1.000000e+00 : f32
    %927 = vector.broadcast %cst_265 : f32 to vector<16x1xf32>
    %928 = arith.mulf %927, %11 : vector<16x1xf32>
    %cst_266 = arith.constant 1.000000e+00 : f32
    %929 = vector.broadcast %cst_266 : f32 to vector<16x1xf32>
    %930 = arith.subf %929, %928 : vector<16x1xf32>
    %cst_267 = arith.constant 2.000000e+00 : f32
    %931 = vector.broadcast %cst_267 : f32 to vector<16x1xf32>
    %932 = arith.mulf %931, %919 : vector<16x1xf32>
    %cst_268 = arith.constant 1.000000e+00 : f32
    %933 = vector.broadcast %cst_268 : f32 to vector<16x1xf32>
    %934 = arith.addf %933, %932 : vector<16x1xf32>
    %cst_269 = arith.constant 1.000000e+00 : f32
    %935 = vector.broadcast %cst_269 : f32 to vector<16x1xf32>
    %936 = arith.mulf %935, %11 : vector<16x1xf32>
    %937 = arith.mulf %936, %916 : vector<16x1xf32>
    %938 = arith.addf %934, %937 : vector<16x1xf32>
    %cst_270 = arith.constant 1.000000e-15 : f32
    %939 = vector.broadcast %cst_270 : f32 to vector<16x1xf32>
    %940 = arith.maximumf %938, %939 : vector<16x1xf32>
    %941 = tpu.reciprocal %940 {approx = true} : vector<16x1xf32> -> vector<16x1xf32>
    %942 = vector.broadcast %926 : vector<16x1xf32> to vector<16x32xf32>
    %943 = arith.mulf %942, %1 : vector<16x32xf32>
    %944 = vector.broadcast %930 : vector<16x1xf32> to vector<16x32xf32>
    %945 = arith.mulf %944, %914 : vector<16x32xf32>
    %946 = arith.addf %943, %945 : vector<16x32xf32>
    %947 = vector.broadcast %941 : vector<16x1xf32> to vector<16x32xf32>
    %948 = arith.mulf %946, %947 : vector<16x32xf32>
    %949 = arith.mulf %926, %926 : vector<16x1xf32>
    %950 = arith.mulf %949, %11 : vector<16x1xf32>
    %cst_271 = arith.constant 2.000000e+00 : f32
    %951 = vector.broadcast %cst_271 : f32 to vector<16x1xf32>
    %952 = arith.mulf %951, %926 : vector<16x1xf32>
    %953 = arith.mulf %952, %930 : vector<16x1xf32>
    %954 = arith.mulf %953, %919 : vector<16x1xf32>
    %955 = arith.addf %950, %954 : vector<16x1xf32>
    %956 = arith.mulf %930, %930 : vector<16x1xf32>
    %957 = arith.mulf %956, %916 : vector<16x1xf32>
    %958 = arith.addf %955, %957 : vector<16x1xf32>
    %cst_272 = arith.constant 0.000000e+00 : f32
    %959 = vector.broadcast %cst_272 : f32 to vector<16x1xf32>
    %960 = arith.maximumf %958, %959 : vector<16x1xf32>
    %961 = arith.mulf %941, %941 : vector<16x1xf32>
    %962 = arith.mulf %960, %961 : vector<16x1xf32>
    %cst_273 = arith.constant 1.000000e-30 : f32
    %963 = vector.broadcast %cst_273 : f32 to vector<16x1xf32>
    %964 = arith.maximumf %962, %963 : vector<16x1xf32>
    %965 = math.rsqrt %964 : vector<16x1xf32>
    %966 = arith.mulf %964, %965 : vector<16x1xf32>
    %cst_274 = arith.constant 0.995999991 : f32
    %967 = vector.broadcast %cst_274 : f32 to vector<16x1xf32>
    %968 = arith.cmpf ogt, %966, %967 : vector<16x1xf32>
    %cst_275 = arith.constant 0.995999991 : f32
    %969 = vector.broadcast %cst_275 : f32 to vector<16x1xf32>
    %970 = arith.mulf %969, %965 : vector<16x1xf32>
    %971 = vector.broadcast %970 : vector<16x1xf32> to vector<16x32xf32>
    %972 = arith.mulf %948, %971 : vector<16x32xf32>
    %973 = vector.shape_cast %968 : vector<16x1xi1> to vector<16x1xi1>
    %974 = vector.broadcast %973 : vector<16x1xi1> to vector<16x32xi1>
    %975 = arith.select %974, %972, %948 : vector<16x32xi1>, vector<16x32xf32>
    %c0_276 = arith.constant 0 : index
    %c0_277 = arith.constant 0 : index
    %976 = vector.load %arg6[%c0_276, %c0_277] : memref<16x32xf32, #tpu.memory_space<vmem>>, vector<16x32xf32>
    tpu.vector_store %arg6[%c0_276, %c0_277], %975 {strides = array<i32>} : memref<16x32xf32, #tpu.memory_space<vmem>>, vector<16x32xf32>,
    return
  }
  func.func @transform_0(%arg0: i32) -> (i32, i32) {
    %c0_i32 = arith.constant 0 : i32
    %c0_i32_0 = arith.constant 0 : i32
    return %arg0, %c0_i32 : i32, i32
  }
  func.func @transform_1(%arg0: i32) -> (i32, i32) {
    %c0_i32 = arith.constant 0 : i32
    %c0_i32_0 = arith.constant 0 : i32
    return %arg0, %c0_i32 : i32, i32
  }
  func.func @transform_2(%arg0: i32) -> (i32, i32) {
    %c0_i32 = arith.constant 0 : i32
    %c0_i32_0 = arith.constant 0 : i32
    %c0_i32_1 = arith.constant 0 : i32
    return %c0_i32, %c0_i32_0 : i32, i32
  }
  func.func @transform_3(%arg0: i32) -> (i32, i32) {
    %c0_i32 = arith.constant 0 : i32
    %c0_i32_0 = arith.constant 0 : i32
    %c0_i32_1 = arith.constant 0 : i32
    return %c0_i32, %c0_i32_0 : i32, i32
  }
  func.func @transform_4(%arg0: i32) -> (i32, i32) {
    %c0_i32 = arith.constant 0 : i32
    %c0_i32_0 = arith.constant 0 : i32
    %c0_i32_1 = arith.constant 0 : i32
    return %c0_i32, %c0_i32_0 : i32, i32
  }
  func.func @transform_5(%arg0: i32) -> (i32, i32) {
    %c0_i32 = arith.constant 0 : i32
    %c0_i32_0 = arith.constant 0 : i32
    return %arg0, %c0_i32 : i32, i32
  }
}

</mosaic_0001>

<llo_original>
// kernel: tpu_custom_call.1
$region0: #{tpu_custom_call.1}
  #allocation0 [shape = 'u32[]', space=smem, size = 0x4, offset = 0x4, fixed_abs, tag = 'smem constant byte address 0x4 - core index']
  #allocation1 [shape = 'u32[144,128]{1,0:T(1,128)}', space=vmem, size = 0x12000, scoped, tag = 'internal scratch']
  #allocation2 [shape = 'f32[16,64]{1,0:T(8,128)}', space=vmem, size = 0x2000, scoped, tag = 'scratch operand']
  %s0 = inlined_call_operand.hbm [shape: f32[16,32], index: 0, kind: input, shape index: {}]
  %s1 = inlined_call_operand.hbm [shape: f32[16,32], index: 1, kind: input, shape index: {}]
  %s2 = inlined_call_operand.hbm [shape: f32[64,128], index: 2, kind: input, shape index: {}]
  %s3 = inlined_call_operand.hbm [shape: f32[32,32], index: 3, kind: input, shape index: {}]
  %s4 = inlined_call_operand.vmem [shape: f32[3,32], index: 4, kind: input, shape index: {}]
  %s5 = inlined_call_operand.hbm [shape: f32[16,32], index: 5, kind: output, shape index: {}]
  %s6 = sld [smem:[#allocation0]]
  $region46: #{tpu_custom_call.1} parent=0
    _
  %s8 = ssub.s32 1, %s6
  %s9 = scalar_select 0, %s8, %s6
  $region1: #{tpu_custom_call.1} parent=0
    #allocation3 [shape = 'u8[8192]{0}', space=vmem, size = 0x2000, scoped, tag = 'input window, operand 0, single buffered']
    #allocation4 [shape = 's32[1]{0}', space=sflag, size = 0x4, scoped, tag = 'scoped memory for tpu_custom_call.1']
    #allocation5 [shape = 's32[1]{0}', space=sflag, size = 0x4, scoped, tag = 'scoped memory for tpu_custom_call.1']
    #allocation6 [shape = 'u8[8192]{0}', space=vmem, size = 0x2000, scoped, tag = 'input window, operand 1, single buffered']
    #allocation7 [shape = 's32[1]{0}', space=sflag, size = 0x4, scoped, tag = 'scoped memory for tpu_custom_call.1']
    #allocation8 [shape = 'u8[32768]{0}', space=vmem, size = 0x8000, scoped, tag = 'input window, operand 2, single buffered']
    #allocation9 [shape = 'u8[16384]{0}', space=vmem, size = 0x4000, scoped, tag = 'input window, operand 3, single buffered']
    #allocation10 [shape = 's32[1]{0}', space=sflag, size = 0x4, scoped, tag = 'scoped memory for tpu_custom_call.1']
    #allocation11 [shape = 'u8[8192]{0}', space=vmem, size = 0x2000, scoped, tag = 'output window, operand 0, single buffered']
    %10 = vsyncpa [#allocation4], 0
    %11 = vsyncpa [#allocation7], 0
    %12 = vsyncpa [#allocation10], 0
    %13 = vsyncpa [#allocation5], 0
    // Predicated region
    $region2: #{tpu_custom_call.1} parent=1 // pred_check
      _
    $region3: #{tpu_custom_call.1} parent=1 // pred_check_branch
      %15 = sbr.rel (0) target = $region5
    $region4: #{tpu_custom_call.1} parent=1 // pred_region
      %s17 = ssub.s32 256, 256
      %18 = vsyncadd [#allocation4], %s17
      %s19 = sshll.u32 [#allocation3], 4
      %s20 = int_to_ptr.vmem [resolvable:$true] %s19
      %25 = dma.hbm_to_vmem [thread:$0]  %s0, 256, %s20, [#allocation4], 128, 128, 8
    $region5: #{tpu_custom_call.1} parent=1 // pred_fallthru
      _
    // Predicated region
    $region6: #{tpu_custom_call.1} parent=1 // pred_check
      _
    $region7: #{tpu_custom_call.1} parent=1 // pred_check_branch
      %27 = sbr.rel (0) target = $region9
    $region8: #{tpu_custom_call.1} parent=1 // pred_region
      %s29 = ssub.s32 256, 256
      %30 = vsyncadd [#allocation7], %s29
      %s31 = sshll.u32 [#allocation6], 4
      %s32 = int_to_ptr.vmem [resolvable:$true] %s31
      %37 = dma.hbm_to_vmem [thread:$0]  %s1, 256, %s32, [#allocation7], 128, 128, 8
    $region9: #{tpu_custom_call.1} parent=1 // pred_fallthru
      _
    // Predicated region
    $region10: #{tpu_custom_call.1} parent=1 // pred_check
      _
    $region11: #{tpu_custom_call.1} parent=1 // pred_check_branch
      %39 = sbr.rel (0) target = $region13
    $region12: #{tpu_custom_call.1} parent=1 // pred_region
      %s41 = ssub.s32 1024, 1024
      %42 = vsyncadd [#allocation7], %s41
      %s43 = sshll.u32 [#allocation8], 4
      %s44 = int_to_ptr.vmem [resolvable:$true] %s43
      %49 = dma.hbm_to_vmem [thread:$0]  %s2, 1024, %s44, [#allocation7], 128, 128, 8
    $region13: #{tpu_custom_call.1} parent=1 // pred_fallthru
      _
    // Predicated region
    $region14: #{tpu_custom_call.1} parent=1 // pred_check
      _
    $region15: #{tpu_custom_call.1} parent=1 // pred_check_branch
      %51 = sbr.rel (0) target = $region17
    $region16: #{tpu_custom_call.1} parent=1 // pred_region
      %s53 = ssub.s32 512, 512
      %54 = vsyncadd [#allocation10], %s53
      %s55 = sshll.u32 [#allocation9], 4
      %s56 = int_to_ptr.vmem [resolvable:$true] %s55
      %61 = dma.hbm_to_vmem [thread:$0]  %s3, 512, %s56, [#allocation10], 128, 128, 8
    $region17: #{tpu_custom_call.1} parent=1 // pred_fallthru
      _
    // Predicated region
    $region18: #{tpu_custom_call.1} parent=1 // pred_check
      _
    $region19: #{tpu_custom_call.1} parent=1 // pred_check_branch
      %63 = sbr.rel (0) target = $region21
    $region20: #{tpu_custom_call.1} parent=1 // pred_region
      _
    $region21: #{tpu_custom_call.1} parent=1 // pred_fallthru
      _
    // Predicated region
    $region22: #{tpu_custom_call.1} parent=1 // pred_check
      _
    $region23: #{tpu_custom_call.1} parent=1 // pred_check_branch
      %65 = sbr.rel (0) target = $region25
    $region24: #{tpu_custom_call.1} parent=1 // pred_region
      %66 = dma.done [#allocation4], 256
    $region25: #{tpu_custom_call.1} parent=1 // pred_fallthru
      _
    // Predicated region
    $region26: #{tpu_custom_call.1} parent=1 // pred_check
      _
    $region27: #{tpu_custom_call.1} parent=1 // pred_check_branch
      %68 = sbr.rel (0) target = $region29
    $region28: #{tpu_custom_call.1} parent=1 // pred_region
      %69 = dma.done [#allocation7], 256
    $region29: #{tpu_custom_call.1} parent=1 // pred_fallthru
      _
    // Predicated region
    $region30: #{tpu_custom_call.1} parent=1 // pred_check
      _
    $region31: #{tpu_custom_call.1} parent=1 // pred_check_branch
      %71 = sbr.rel (0) target = $region33
    $region32: #{tpu_custom_call.1} parent=1 // pred_region
      %72 = dma.done [#allocation7], 1024
    $region33: #{tpu_custom_call.1} parent=1 // pred_fallthru
      _
    // Predicated region
    $region34: #{tpu_custom_call.1} parent=1 // pred_check
      _
    $region35: #{tpu_custom_call.1} parent=1 // pred_check_branch
      %74 = sbr.rel (0) target = $region37
    $region36: #{tpu_custom_call.1} parent=1 // pred_region
      %75 = dma.done [#allocation10], 512
    $region37: #{tpu_custom_call.1} parent=1 // pred_fallthru
      _
    %v76 = vld [vmem:[#allocation3] sm:$0xff]
    %v77 = vld [vmem:[#allocation3 + $0x8] sm:$0xff]
    %v78 = vld [vmem:[#allocation6] sm:$0xff]
    %v79 = vld [vmem:[#allocation6 + $0x8] sm:$0xff]
    %v80 = vld [vmem:[%s4] sm:$0x7]
    %v81 = vmul.f32 %v76, %v76
    %v82 = vmul.f32 %v77, %v77
    %vm83 = vcmask 261120
    %v84 = vsel %vm83, %v81, 0.0
    %85 = vadd.xlane.f32.xlu0 %v84
    %v86 = vpop.xlane.xlu0 %85
    %v87 = vsel %vm83, %v82, 0.0
    %88 = vadd.xlane.f32.xlu0 %v87
    %v89 = vpop.xlane.xlu0 %88
    %v90 = vmul.f32 %v78, %v78
    %v91 = vmul.f32 %v79, %v79
    %v92 = vsel %vm83, %v90, 0.0
    %93 = vadd.xlane.f32.xlu0 %v92
    %v94 = vpop.xlane.xlu0 %93
    %v95 = vsel %vm83, %v91, 0.0
    %96 = vadd.xlane.f32.xlu0 %v95
    %v97 = vpop.xlane.xlu0 %96
    %v98 = vmax.f32 %v86, 1e-30
    %v99 = vmax.f32 %v89, 1e-30
    %v100 = vrsqrt.pop %v98
    %v101 = vrsqrt.pop %v99
    %v102 = vmul.f32 %v98, %v100
    %v103 = vmul.f32 %v99, %v101
    %v104 = vmax.f32 %v102, -0.9999999
    %v105 = vmax.f32 %v103, -0.9999999
    %v106 = vmin.f32 %v104, 0.9999999
    %v107 = vmin.f32 %v105, 0.9999999
    %v108 = vadd.f32 %v106, 1.0
    %v109 = vadd.f32 %v107, 1.0
    %v110 = vsub.f32 1.0, %v106
    %v111 = vsub.f32 1.0, %v107
    %v112 = vrcp.pop %v110
    %v113 = vrcp.pop %v111
    %v114 = vmul.f32 %v108, %v112
    %v115 = vmul.f32 %v109, %v113
    %v116 = vlog2.pop %v114
    %v117 = vmul.f32 %v116, 0.6931472
    %v118 = vlog2.pop %v115
    %v119 = vmul.f32 %v118, 0.6931472
    %v120 = vmul.f32 %v117, 0.5
    %v121 = vmul.f32 %v119, 0.5
    %v122 = vmul.f32 %v120, %v100
    %v123 = vmul.f32 %v121, %v101
    %v124 = vmax.f32 %v94, 1e-30
    %v125 = vmax.f32 %v97, 1e-30
    %v126 = vrsqrt.pop %v124
    %v127 = vrsqrt.pop %v125
    %v128 = vmul.f32 %v124, %v126
    %v129 = vmul.f32 %v125, %v127
    %v130 = vmax.f32 %v128, -0.9999999
    %v131 = vmax.f32 %v129, -0.9999999
    %v132 = vmin.f32 %v130, 0.9999999
    %v133 = vmin.f32 %v131, 0.9999999
    %v134 = vadd.f32 %v132, 1.0
    %v135 = vadd.f32 %v133, 1.0
    %v136 = vsub.f32 1.0, %v132
    %v137 = vsub.f32 1.0, %v133
    %v138 = vrcp.pop %v136
    %v139 = vrcp.pop %v137
    %v140 = vmul.f32 %v134, %v138
    %v141 = vmul.f32 %v135, %v139
    %v142 = vlog2.pop %v140
    %v143 = vmul.f32 %v142, 0.6931472
    %v144 = vlog2.pop %v141
    %v145 = vmul.f32 %v144, 0.6931472
    %v146 = vmul.f32 %v143, 0.5
    %v147 = vmul.f32 %v145, 0.5
    %v148 = vmul.f32 %v146, %v126
    %v149 = vmul.f32 %v147, %v127
    %v150 = vmul.f32 %v80, %v80
    %vm151 = vcmask 253952
    %v152 = vsel %vm151, %v150, 0.0
    %153 = vadd.xlane.f32.xlu0 %v152
    %v154 = vpop.xlane.xlu0 %153
    %vm155 = vcmask 254977
    %v156 = vsel %vm155, %v150, 0.0
    %157 = vadd.xlane.f32.xlu0 %v156
    %v158 = vpop.xlane.xlu0 %157
    %vm159 = vcmask 256002
    %v160 = vsel %vm159, %v150, 0.0
    %161 = vadd.xlane.f32.xlu0 %v160
    %v162 = vpop.xlane.xlu0 %161
    %163 = vst.msk [vmem:[#allocation2] sm:$0xff] %vm83, %v78
    %164 = vst.msk [vmem:[#allocation2 + $0x8] sm:$0xff] %vm83, %v79
    %167 = vrot.lane.b32.xlu0 %v76, 32
    %v168 = vpop.permute.xlu0 %167
    %169 = vrot.lane.b32.xlu0 %v77, 32
    %v170 = vpop.permute.xlu0 %169
    %vm173 = vcmask 523520
    %174 = vst.msk [vmem:[#allocation2] sm:$0xff] %vm173, %v168
    %175 = vst.msk [vmem:[#allocation2 + $0x8] sm:$0xff] %vm173, %v170
    %v176 = vld [vmem:[#allocation2] sm:$0xff]
    %v177 = vld [vmem:[#allocation2 + $0x8] sm:$0xff]
    %v178 = vld [vmem:[#allocation8] sm:$0xff]
    %v179 = vld [vmem:[#allocation8 + $0x8] sm:$0xff]
    %v180 = vld [vmem:[#allocation8 + $0x10] sm:$0xff]
    %v181 = vld [vmem:[#allocation8 + $0x18] sm:$0xff]
    %v182 = vld [vmem:[#allocation8 + $0x20] sm:$0xff]
    %v183 = vld [vmem:[#allocation8 + $0x28] sm:$0xff]
    %v184 = vld [vmem:[#allocation8 + $0x30] sm:$0xff]
    %v185 = vld [vmem:[#allocation8 + $0x38] sm:$0xff]
    %vm186 = vcmask 523264
    %v188 = vsel %vm186, %v176, 0
    %v191 = vsel %vm186, %v177, 0
    %193 = vmatprep.subr.mxu0 0.0
    %194 = vmatpush1.msra.mxu0 %v178
    %195 = vmatprep.subr.mxu0 0.0
    %196 = vmatpush1.msra.mxu0 %v179
    %197 = vmatprep.subr.mxu0 0.0
    %198 = vmatpush1.msra.mxu0 %v180
    %199 = vmatprep.subr.mxu0 0.0
    %200 = vmatpush1.msra.mxu0 %v181
    %201 = vmatprep.subr.mxu0 0.0
    %202 = vmatpush1.msra.mxu0 %v182
    %203 = vmatprep.subr.mxu0 0.0
    %204 = vmatpush1.msra.mxu0 %v183
    %205 = vmatprep.subr.mxu0 0.0
    %206 = vmatpush1.msra.mxu0 %v184
    %207 = vmatprep.subr.mxu0 0.0
    %208 = vmatpush1.msra.mxu0 %v185
    %209 = vmatprep.subr.mxu0 0.0
    %210 = vmatpush1.msra.mxu0 0.0
    %211 = vmatprep.subr.mxu0 0.0
    %212 = vmatpush1.msra.mxu0 0.0
    %213 = vmatprep.subr.mxu0 0.0
    %214 = vmatpush1.msra.mxu0 0.0
    %215 = vmatprep.subr.mxu0 0.0
    %216 = vmatpush1.msra.mxu0 0.0
    %217 = vmatprep.subr.mxu0 0.0
    %218 = vmatpush1.msra.mxu0 0.0
    %219 = vmatprep.subr.mxu0 0.0
    %220 = vmatpush1.msra.mxu0 0.0
    %221 = vmatprep.subr.mxu0 0.0
    %222 = vmatpush1.msra.mxu0 0.0
    %223 = vmatprep.subr.mxu0 0.0
    %224 = vmatpush1.msra.mxu0 0.0
    %225 = vmatprep.subr.mxu0 0.0
    %226 = vmatpush1.msra.mxu0 0.0
    %227 = vmatprep.subr.mxu0 0.0
    %228 = vmatpush1.msra.mxu0 0.0
    %229 = vmatprep.subr.mxu0 0.0
    %230 = vmatpush1.msra.mxu0 0.0
    %231 = vmatprep.subr.mxu0 0.0
    %232 = vmatpush1.msra.mxu0 0.0
    %233 = vmatprep.subr.mxu0 0.0
    %234 = vmatpush1.msra.mxu0 0.0
    %235 = vmatprep.subr.mxu0 0.0
    %236 = vmatpush1.msra.mxu0 0.0
    %237 = vmatprep.subr.mxu0 0.0
    %238 = vmatpush1.msra.mxu0 0.0
    %239 = vmatprep.subr.mxu0 0.0
    %240 = vmatpush1.msra.mxu0 0.0
    %241 = vmatprep.subr.mxu0 0.0
    %242 = vmatpush1.msra.mxu0 0.0
    %243 = vmatprep.subr.mxu0 0.0
    %244 = vmatpush1.msra.mxu0 0.0
    %245 = vmatprep.subr.mxu0 0.0
    %246 = vmatpush1.msra.mxu0 0.0
    %247 = vmatprep.subr.mxu0 0.0
    %248 = vmatpush1.msra.mxu0 0.0
    %249 = vmatprep.subr.mxu0 0.0
    %250 = vmatpush1.msra.mxu0 0.0
    %251 = vmatprep.subr.mxu0 0.0
    %252 = vmatpush1.msra.mxu0 0.0
    %253 = vmatprep.subr.mxu0 0.0
    %254 = vmatpush1.msra.mxu0 0.0
    %255 = vmatprep.subr.mxu0 0.0
    %256 = vmatpush1.msra.mxu0 0.0
    %257 = vmatprep.mubr.f32.mxu0 0.0
    %258 = vmatmul.mubr.f32.gmra.mrb[0].mxu0 %v188
    %v259 = vpop.f32.mrb[0].mxu0
    %v260 = vadd.f32 0.0, %v259
    %v261 = vpop.f32.mrb[0].mxu0
    %262 = vmatprep.mubr.f32.mxu0 0.0
    %263 = vmatmul.mubr.f32.gmra.mrb[0].mxu0 %v191
    %v264 = vpop.f32.mrb[0].mxu0
    %v265 = vadd.f32 0.0, %v264
    %v266 = vpop.f32.mrb[0].mxu0
    %267 = vdwg.mxu0
    %v268 = vmul.f32 %v260, %v260
    %v269 = vmul.f32 %v265, %v265
    %v270 = vsel %vm83, %v268, 0.0
    %271 = vadd.xlane.f32.xlu0 %v270
    %v272 = vpop.xlane.xlu0 %271
    %v273 = vsel %vm83, %v269, 0.0
    %274 = vadd.xlane.f32.xlu0 %v273
    %v275 = vpop.xlane.xlu0 %274
    %v276 = vmax.f32 %v272, 1e-30
    %v277 = vmax.f32 %v275, 1e-30
    %v278 = vrsqrt.pop %v276
    %v279 = vrsqrt.pop %v277
    %v280 = vmul.f32 %v276, %v278
    %v281 = vmul.f32 %v277, %v279
    %v282 = vmul.f32 %v280, %v148
    %v283 = vmul.f32 %v281, %v149
    %v284 = vtanh.pop %v282
    %v285 = vtanh.pop %v283
    %v286 = vmul.f32 %v284, %v278
    %v287 = vmul.f32 %v285, %v279
    %vm288 = vcmp.le.f32.partialorder %v272, 0.0
    %vm289 = vcmp.le.f32.partialorder %v275, 0.0
    %v290 = vmul.f32 %v286, %v260
    %v291 = vmul.f32 %v287, %v265
    %v292 = vsel %vm288, 1, 0
    %v293 = vsel %vm289, 1, 0
    %vm294 = vcmp.eq.s32.totalorder %v292, 1
    %vm295 = vcmp.eq.s32.totalorder %v293, 1
    %v296 = vsel %vm294, 0.0, %v290
    %v297 = vsel %vm295, 0.0, %v291
    %v298 = vmul.f32 %v286, %v286
    %v299 = vmul.f32 %v287, %v287
    %v300 = vmul.f32 %v298, %v272
    %v301 = vmul.f32 %v299, %v275
    %v302 = vsel %vm288, 0.0, %v300
    %v303 = vsel %vm289, 0.0, %v301
    %v304 = vmax.f32 %v302, 1e-30
    %v305 = vmax.f32 %v303, 1e-30
    %v306 = vrsqrt.pop %v304
    %v307 = vrsqrt.pop %v305
    %v308 = vmul.f32 %v304, %v306
    %v309 = vmul.f32 %v305, %v307
    %vm310 = vcmp.gt.f32.partialorder %v308, 0.996
    %vm311 = vcmp.gt.f32.partialorder %v309, 0.996
    %v312 = vmul.f32 %v306, 0.996
    %v313 = vmul.f32 %v307, 0.996
    %v314 = vmul.f32 %v296, %v312
    %v315 = vmul.f32 %v297, %v313
    %v316 = vsel %vm310, 1, 0
    %v317 = vsel %vm311, 1, 0
    %vm318 = vcmp.eq.s32.totalorder %v316, 1
    %vm319 = vcmp.eq.s32.totalorder %v317, 1
    %v320 = vsel %vm318, %v314, %v296
    %v321 = vsel %vm319, %v315, %v297
    %v322 = vsel %vm310, 0.992016, %v302
    %v323 = vsel %vm311, 0.992016, %v303
    %326 = vrot.lane.b32.xlu0 %v268, 96
    %v327 = vpop.permute.xlu0 %326
    %328 = vrot.lane.b32.xlu0 %v269, 96
    %v329 = vpop.permute.xlu0 %328
    %v332 = vsel %vm83, %v327, 0.0
    %333 = vadd.xlane.f32.xlu0 %v332
    %v334 = vpop.xlane.xlu0 %333
    %v335 = vsel %vm83, %v329, 0.0
    %336 = vadd.xlane.f32.xlu0 %v335
    %v337 = vpop.xlane.xlu0 %336
    %v338 = vmax.f32 %v334, 1e-30
    %v339 = vmax.f32 %v337, 1e-30
    %v340 = vrsqrt.pop %v338
    %v341 = vrsqrt.pop %v339
    %v342 = vmul.f32 %v338, %v340
    %v343 = vmul.f32 %v339, %v341
    %v344 = vmul.f32 %v342, %v148
    %v345 = vmul.f32 %v343, %v149
    %v346 = vtanh.pop %v344
    %v347 = vtanh.pop %v345
    %v348 = vmul.f32 %v346, %v340
    %v349 = vmul.f32 %v347, %v341
    %vm350 = vcmp.le.f32.partialorder %v334, 0.0
    %vm351 = vcmp.le.f32.partialorder %v337, 0.0
    %v352 = vmul.f32 %v348, %v260
    %v353 = vmul.f32 %v349, %v265
    %v354 = vsel %vm350, 1, 0
    %v355 = vsel %vm351, 1, 0
    %vm356 = vcmp.eq.s32.totalorder %v354, 1
    %vm357 = vcmp.eq.s32.totalorder %v355, 1
    %v358 = vsel %vm356, 0.0, %v352
    %v359 = vsel %vm357, 0.0, %v353
    %v360 = vmul.f32 %v348, %v348
    %v361 = vmul.f32 %v349, %v349
    %v362 = vmul.f32 %v360, %v334
    %v363 = vmul.f32 %v361, %v337
    %v364 = vsel %vm350, 0.0, %v362
    %v365 = vsel %vm351, 0.0, %v363
    %v366 = vmax.f32 %v364, 1e-30
    %v367 = vmax.f32 %v365, 1e-30
    %v368 = vrsqrt.pop %v366
    %v369 = vrsqrt.pop %v367
    %v370 = vmul.f32 %v366, %v368
    %v371 = vmul.f32 %v367, %v369
    %vm372 = vcmp.gt.f32.partialorder %v370, 0.996
    %vm373 = vcmp.gt.f32.partialorder %v371, 0.996
    %v374 = vmul.f32 %v368, 0.996
    %v375 = vmul.f32 %v369, 0.996
    %v376 = vmul.f32 %v358, %v374
    %v377 = vmul.f32 %v359, %v375
    %v378 = vsel %vm372, 1, 0
    %v379 = vsel %vm373, 1, 0
    %vm380 = vcmp.eq.s32.totalorder %v378, 1
    %vm381 = vcmp.eq.s32.totalorder %v379, 1
    %v382 = vsel %vm380, %v376, %v358
    %v383 = vsel %vm381, %v377, %v359
    %v384 = vsel %vm372, 0.992016, %v364
    %v385 = vsel %vm373, 0.992016, %v365
    %386 = vrot.lane.b32.xlu0 %v268, 64
    %v387 = vpop.permute.xlu0 %386
    %388 = vrot.lane.b32.xlu0 %v269, 64
    %v389 = vpop.permute.xlu0 %388
    %v392 = vsel %vm83, %v387, 0.0
    %393 = vadd.xlane.f32.xlu0 %v392
    %v394 = vpop.xlane.xlu0 %393
    %v395 = vsel %vm83, %v389, 0.0
    %396 = vadd.xlane.f32.xlu0 %v395
    %v397 = vpop.xlane.xlu0 %396
    %v398 = vmax.f32 %v394, 1e-30
    %v399 = vmax.f32 %v397, 1e-30
    %v400 = vrsqrt.pop %v398
    %v401 = vrsqrt.pop %v399
    %v402 = vmul.f32 %v398, %v400
    %v403 = vmul.f32 %v399, %v401
    %v404 = vmul.f32 %v402, %v122
    %v405 = vmul.f32 %v403, %v123
    %v406 = vtanh.pop %v404
    %v407 = vtanh.pop %v405
    %v408 = vmul.f32 %v406, %v400
    %v409 = vmul.f32 %v407, %v401
    %vm410 = vcmp.le.f32.partialorder %v394, 0.0
    %vm411 = vcmp.le.f32.partialorder %v397, 0.0
    %v412 = vmul.f32 %v408, %v260
    %v413 = vmul.f32 %v409, %v265
    %v414 = vsel %vm410, 1, 0
    %v415 = vsel %vm411, 1, 0
    %vm416 = vcmp.eq.s32.totalorder %v414, 1
    %vm417 = vcmp.eq.s32.totalorder %v415, 1
    %v418 = vsel %vm416, 0.0, %v412
    %v419 = vsel %vm417, 0.0, %v413
    %v420 = vmul.f32 %v408, %v408
    %v421 = vmul.f32 %v409, %v409
    %v422 = vmul.f32 %v420, %v394
    %v423 = vmul.f32 %v421, %v397
    %v424 = vsel %vm410, 0.0, %v422
    %v425 = vsel %vm411, 0.0, %v423
    %v426 = vmax.f32 %v424, 1e-30
    %v427 = vmax.f32 %v425, 1e-30
    %v428 = vrsqrt.pop %v426
    %v429 = vrsqrt.pop %v427
    %v430 = vmul.f32 %v426, %v428
    %v431 = vmul.f32 %v427, %v429
    %vm432 = vcmp.gt.f32.partialorder %v430, 0.996
    %vm433 = vcmp.gt.f32.partialorder %v431, 0.996
    %v434 = vmul.f32 %v428, 0.996
    %v435 = vmul.f32 %v429, 0.996
    %v436 = vmul.f32 %v418, %v434
    %v437 = vmul.f32 %v419, %v435
    %v438 = vsel %vm432, 1, 0
    %v439 = vsel %vm433, 1, 0
    %vm440 = vcmp.eq.s32.totalorder %v438, 1
    %vm441 = vcmp.eq.s32.totalorder %v439, 1
    %v442 = vsel %vm440, %v436, %v418
    %v443 = vsel %vm441, %v437, %v419
    %v444 = vsel %vm432, 0.992016, %v424
    %v445 = vsel %vm433, 0.992016, %v425
    %446 = vrot.lane.b32.xlu0 %v268, 32
    %v447 = vpop.permute.xlu0 %446
    %448 = vrot.lane.b32.xlu0 %v269, 32
    %v449 = vpop.permute.xlu0 %448
    %v452 = vsel %vm83, %v447, 0.0
    %453 = vadd.xlane.f32.xlu0 %v452
    %v454 = vpop.xlane.xlu0 %453
    %v455 = vsel %vm83, %v449, 0.0
    %456 = vadd.xlane.f32.xlu0 %v455
    %v457 = vpop.xlane.xlu0 %456
    %v458 = vmax.f32 %v454, 1e-30
    %v459 = vmax.f32 %v457, 1e-30
    %v460 = vrsqrt.pop %v458
    %v461 = vrsqrt.pop %v459
    %v462 = vmul.f32 %v458, %v460
    %v463 = vmul.f32 %v459, %v461
    %v464 = vmul.f32 %v462, %v122
    %v465 = vmul.f32 %v463, %v123
    %v466 = vtanh.pop %v464
    %v467 = vtanh.pop %v465
    %v468 = vmul.f32 %v466, %v460
    %v469 = vmul.f32 %v467, %v461
    %vm470 = vcmp.le.f32.partialorder %v454, 0.0
    %vm471 = vcmp.le.f32.partialorder %v457, 0.0
    %v472 = vmul.f32 %v468, %v260
    %v473 = vmul.f32 %v469, %v265
    %v474 = vsel %vm470, 1, 0
    %v475 = vsel %vm471, 1, 0
    %vm476 = vcmp.eq.s32.totalorder %v474, 1
    %vm477 = vcmp.eq.s32.totalorder %v475, 1
    %v478 = vsel %vm476, 0.0, %v472
    %v479 = vsel %vm477, 0.0, %v473
    %v480 = vmul.f32 %v468, %v468
    %v481 = vmul.f32 %v469, %v469
    %v482 = vmul.f32 %v480, %v454
    %v483 = vmul.f32 %v481, %v457
    %v484 = vsel %vm470, 0.0, %v482
    %v485 = vsel %vm471, 0.0, %v483
    %v486 = vmax.f32 %v484, 1e-30
    %v487 = vmax.f32 %v485, 1e-30
    %v488 = vrsqrt.pop %v486
    %v489 = vrsqrt.pop %v487
    %v490 = vmul.f32 %v486, %v488
    %v491 = vmul.f32 %v487, %v489
    %vm492 = vcmp.gt.f32.partialorder %v490, 0.996
    %vm493 = vcmp.gt.f32.partialorder %v491, 0.996
    %v494 = vmul.f32 %v488, 0.996
    %v495 = vmul.f32 %v489, 0.996
    %v496 = vmul.f32 %v478, %v494
    %v497 = vmul.f32 %v479, %v495
    %v498 = vsel %vm492, 1, 0
    %v499 = vsel %vm493, 1, 0
    %vm500 = vcmp.eq.s32.totalorder %v498, 1
    %vm501 = vcmp.eq.s32.totalorder %v499, 1
    %v502 = vsel %vm500, %v496, %v478
    %v503 = vsel %vm501, %v497, %v479
    %v504 = vsel %vm492, 0.992016, %v484
    %v505 = vsel %vm493, 0.992016, %v485
    %508 = vrot.lane.b32.xlu0 %v442, 64
    %v509 = vpop.permute.xlu0 %508
    %510 = vrot.lane.b32.xlu0 %v443, 64
    %v511 = vpop.permute.xlu0 %510
    %v514 = vmul.f32 %v320, %v509
    %v515 = vmul.f32 %v321, %v511
    %v516 = vsel %vm83, %v514, 0.0
    %517 = vadd.xlane.f32.xlu0 %v516
    %v518 = vpop.xlane.xlu0 %517
    %v519 = vsel %vm83, %v515, 0.0
    %520 = vadd.xlane.f32.xlu0 %v519
    %v521 = vpop.xlane.xlu0 %520
    %v522 = vmul.f32 %v518, 2.0
    %v523 = vmul.f32 %v521, 2.0
    %v524 = vadd.f32 %v522, 1.0
    %v525 = vadd.f32 %v523, 1.0
    %v526 = vadd.f32 %v524, %v444
    %v527 = vadd.f32 %v525, %v445
    %v528 = vsub.f32 1.0, %v322
    %v529 = vsub.f32 1.0, %v323
    %v530 = vmul.f32 %v322, %v444
    %v531 = vmul.f32 %v323, %v445
    %v532 = vadd.f32 %v524, %v530
    %v533 = vadd.f32 %v525, %v531
    %v534 = vmax.f32 %v532, 1e-15
    %v535 = vmax.f32 %v533, 1e-15
    %v536 = vrcp.pop %v534
    %v537 = vrcp.pop %v535
    %v538 = vmul.f32 %v526, %v320
    %v539 = vmul.f32 %v527, %v321
    %v540 = vmul.f32 %v528, %v442
    %v541 = vmul.f32 %v529, %v443
    %544 = vrot.lane.b32.xlu0 %v540, 64
    %v545 = vpop.permute.xlu0 %544
    %546 = vrot.lane.b32.xlu0 %v541, 64
    %v547 = vpop.permute.xlu0 %546
    %v550 = vadd.f32 %v538, %v545
    %v551 = vadd.f32 %v539, %v547
    %v552 = vmul.f32 %v550, %v536
    %v553 = vmul.f32 %v551, %v537
    %v554 = vmul.f32 %v526, %v526
    %v555 = vmul.f32 %v527, %v527
    %v556 = vmul.f32 %v554, %v322
    %v557 = vmul.f32 %v555, %v323
    %v558 = vmul.f32 %v526, 2.0
    %v559 = vmul.f32 %v527, 2.0
    %v560 = vmul.f32 %v558, %v528
    %v561 = vmul.f32 %v559, %v529
    %v562 = vmul.f32 %v560, %v518
    %v563 = vmul.f32 %v561, %v521
    %v564 = vadd.f32 %v556, %v562
    %v565 = vadd.f32 %v557, %v563
    %v566 = vmul.f32 %v528, %v528
    %v567 = vmul.f32 %v529, %v529
    %v568 = vmul.f32 %v566, %v444
    %v569 = vmul.f32 %v567, %v445
    %v570 = vadd.f32 %v564, %v568
    %v571 = vadd.f32 %v565, %v569
    %v572 = vmax.f32 %v570, 0.0
    %v573 = vmax.f32 %v571, 0.0
    %v574 = vmul.f32 %v536, %v536
    %v575 = vmul.f32 %v537, %v537
    %v576 = vmul.f32 %v572, %v574
    %v577 = vmul.f32 %v573, %v575
    %v578 = vmax.f32 %v576, 1e-30
    %v579 = vmax.f32 %v577, 1e-30
    %v580 = vrsqrt.pop %v578
    %v581 = vrsqrt.pop %v579
    %v582 = vmul.f32 %v578, %v580
    %v583 = vmul.f32 %v579, %v581
    %vm584 = vcmp.gt.f32.partialorder %v582, 0.996
    %vm585 = vcmp.gt.f32.partialorder %v583, 0.996
    %v586 = vmul.f32 %v580, 0.996
    %v587 = vmul.f32 %v581, 0.996
    %v588 = vmul.f32 %v552, %v586
    %v589 = vmul.f32 %v553, %v587
    %v590 = vsel %vm584, 1, 0
    %v591 = vsel %vm585, 1, 0
    %vm592 = vcmp.eq.s32.totalorder %v590, 1
    %vm593 = vcmp.eq.s32.totalorder %v591, 1
    %v594 = vsel %vm592, %v588, %v552
    %v595 = vsel %vm593, %v589, %v553
    %v596 = vsel %vm584, 0.992016, %v576
    %v597 = vsel %vm585, 0.992016, %v577
    %v598 = vlaneseq
    %v599 = vshrl.u32 %v598, 7
    %v600 = vsub.s32 0, %v599
    %v601 = vrot.slane %v80, %v600
    %v602 = vmul.f32 %v594, %v601
    %v603 = vmul.f32 %v595, %v601
    %v604 = vsel %vm83, %v602, 0.0
    %605 = vadd.xlane.f32.xlu0 %v604
    %v606 = vpop.xlane.xlu0 %605
    %v607 = vsel %vm83, %v603, 0.0
    %608 = vadd.xlane.f32.xlu0 %v607
    %v609 = vpop.xlane.xlu0 %608
    %v610 = vmul.f32 %v606, 2.0
    %v611 = vmul.f32 %v609, 2.0
    %v612 = vadd.f32 %v610, 1.0
    %v613 = vadd.f32 %v611, 1.0
    %v614 = vlaneseq
    %v615 = vshrl.u32 %v614, 7
    %v616 = vsub.s32 0, %v615
    %v617 = vrot.slane %v154, %v616
    %v618 = vadd.f32 %v612, %v617
    %v619 = vadd.f32 %v613, %v617
    %v620 = vsub.f32 1.0, %v596
    %v621 = vsub.f32 1.0, %v597
    %v622 = vmul.f32 %v596, %v617
    %v623 = vmul.f32 %v597, %v617
    %v624 = vadd.f32 %v612, %v622
    %v625 = vadd.f32 %v613, %v623
    %v626 = vmax.f32 %v624, 1e-15
    %v627 = vmax.f32 %v625, 1e-15
    %v628 = vrcp.pop %v626
    %v629 = vrcp.pop %v627
    %v630 = vmul.f32 %v618, %v594
    %v631 = vmul.f32 %v619, %v595
    %v632 = vmul.f32 %v620, %v601
    %v633 = vmul.f32 %v621, %v601
    %v634 = vadd.f32 %v630, %v632
    %v635 = vadd.f32 %v631, %v633
    %v636 = vmul.f32 %v634, %v628
    %v637 = vmul.f32 %v635, %v629
    %v638 = vmul.f32 %v618, %v618
    %v639 = vmul.f32 %v619, %v619
    %v640 = vmul.f32 %v638, %v596
    %v641 = vmul.f32 %v639, %v597
    %v642 = vmul.f32 %v618, 2.0
    %v643 = vmul.f32 %v619, 2.0
    %v644 = vmul.f32 %v642, %v620
    %v645 = vmul.f32 %v643, %v621
    %v646 = vmul.f32 %v644, %v606
    %v647 = vmul.f32 %v645, %v609
    %v648 = vadd.f32 %v640, %v646
    %v649 = vadd.f32 %v641, %v647
    %v650 = vmul.f32 %v620, %v620
    %v651 = vmul.f32 %v621, %v621
    %v652 = vmul.f32 %v650, %v617
    %v653 = vmul.f32 %v651, %v617
    %v654 = vadd.f32 %v648, %v652
    %v655 = vadd.f32 %v649, %v653
    %v656 = vmax.f32 %v654, 0.0
    %v657 = vmax.f32 %v655, 0.0
    %v658 = vmul.f32 %v628, %v628
    %v659 = vmul.f32 %v629, %v629
    %v660 = vmul.f32 %v656, %v658
    %v661 = vmul.f32 %v657, %v659
    %v662 = vmax.f32 %v660, 1e-30
    %v663 = vmax.f32 %v661, 1e-30
    %v664 = vrsqrt.pop %v662
    %v665 = vrsqrt.pop %v663
    %v666 = vmul.f32 %v662, %v664
    %v667 = vmul.f32 %v663, %v665
    %vm668 = vcmp.gt.f32.partialorder %v666, 0.996
    %vm669 = vcmp.gt.f32.partialorder %v667, 0.996
    %v670 = vmul.f32 %v664, 0.996
    %v671 = vmul.f32 %v665, 0.996
    %v672 = vmul.f32 %v636, %v670
    %v673 = vmul.f32 %v637, %v671
    %v674 = vsel %vm668, 1, 0
    %v675 = vsel %vm669, 1, 0
    %vm676 = vcmp.eq.s32.totalorder %v674, 1
    %vm677 = vcmp.eq.s32.totalorder %v675, 1
    %v678 = vsel %vm676, %v672, %v636
    %v679 = vsel %vm677, %v673, %v637
    %v680 = vsel %vm668, 0.992016, %v660
    %v681 = vsel %vm669, 0.992016, %v661
    %684 = vrot.lane.b32.xlu0 %v502, 64
    %v685 = vpop.permute.xlu0 %684
    %686 = vrot.lane.b32.xlu0 %v503, 64
    %v687 = vpop.permute.xlu0 %686
    %v690 = vmul.f32 %v382, %v685
    %v691 = vmul.f32 %v383, %v687
    %694 = vrot.lane.b32.xlu0 %v690, 96
    %v695 = vpop.permute.xlu0 %694
    %696 = vrot.lane.b32.xlu0 %v691, 96
    %v697 = vpop.permute.xlu0 %696
    %v700 = vsel %vm83, %v695, 0.0
    %701 = vadd.xlane.f32.xlu0 %v700
    %v702 = vpop.xlane.xlu0 %701
    %v703 = vsel %vm83, %v697, 0.0
    %704 = vadd.xlane.f32.xlu0 %v703
    %v705 = vpop.xlane.xlu0 %704
    %v706 = vmul.f32 %v702, 2.0
    %v707 = vmul.f32 %v705, 2.0
    %v708 = vadd.f32 %v706, 1.0
    %v709 = vadd.f32 %v707, 1.0
    %v710 = vadd.f32 %v708, %v504
    %v711 = vadd.f32 %v709, %v505
    %v712 = vsub.f32 1.0, %v384
    %v713 = vsub.f32 1.0, %v385
    %v714 = vmul.f32 %v384, %v504
    %v715 = vmul.f32 %v385, %v505
    %v716 = vadd.f32 %v708, %v714
    %v717 = vadd.f32 %v709, %v715
    %v718 = vmax.f32 %v716, 1e-15
    %v719 = vmax.f32 %v717, 1e-15
    %v720 = vrcp.pop %v718
    %v721 = vrcp.pop %v719
    %v722 = vmul.f32 %v710, %v382
    %v723 = vmul.f32 %v711, %v383
    %v724 = vmul.f32 %v712, %v502
    %v725 = vmul.f32 %v713, %v503
    %728 = vrot.lane.b32.xlu0 %v724, 64
    %v729 = vpop.permute.xlu0 %728
    %730 = vrot.lane.b32.xlu0 %v725, 64
    %v731 = vpop.permute.xlu0 %730
    %v734 = vadd.f32 %v722, %v729
    %v735 = vadd.f32 %v723, %v731
    %v736 = vmul.f32 %v734, %v720
    %v737 = vmul.f32 %v735, %v721
    %v738 = vmul.f32 %v710, %v710
    %v739 = vmul.f32 %v711, %v711
    %v740 = vmul.f32 %v738, %v384
    %v741 = vmul.f32 %v739, %v385
    %v742 = vmul.f32 %v710, 2.0
    %v743 = vmul.f32 %v711, 2.0
    %v744 = vmul.f32 %v742, %v712
    %v745 = vmul.f32 %v743, %v713
    %v746 = vmul.f32 %v744, %v702
    %v747 = vmul.f32 %v745, %v705
    %v748 = vadd.f32 %v740, %v746
    %v749 = vadd.f32 %v741, %v747
    %v750 = vmul.f32 %v712, %v712
    %v751 = vmul.f32 %v713, %v713
    %v752 = vmul.f32 %v750, %v504
    %v753 = vmul.f32 %v751, %v505
    %v754 = vadd.f32 %v748, %v752
    %v755 = vadd.f32 %v749, %v753
    %v756 = vmax.f32 %v754, 0.0
    %v757 = vmax.f32 %v755, 0.0
    %v758 = vmul.f32 %v720, %v720
    %v759 = vmul.f32 %v721, %v721
    %v760 = vmul.f32 %v756, %v758
    %v761 = vmul.f32 %v757, %v759
    %v762 = vmax.f32 %v760, 1e-30
    %v763 = vmax.f32 %v761, 1e-30
    %v764 = vrsqrt.pop %v762
    %v765 = vrsqrt.pop %v763
    %v766 = vmul.f32 %v762, %v764
    %v767 = vmul.f32 %v763, %v765
    %vm768 = vcmp.gt.f32.partialorder %v766, 0.996
    %vm769 = vcmp.gt.f32.partialorder %v767, 0.996
    %v770 = vmul.f32 %v764, 0.996
    %v771 = vmul.f32 %v765, 0.996
    %v772 = vmul.f32 %v736, %v770
    %v773 = vmul.f32 %v737, %v771
    %v774 = vsel %vm768, 1, 0
    %v775 = vsel %vm769, 1, 0
    %vm776 = vcmp.eq.s32.totalorder %v774, 1
    %vm777 = vcmp.eq.s32.totalorder %v775, 1
    %v778 = vsel %vm776, %v772, %v736
    %v779 = vsel %vm777, %v773, %v737
    %v780 = vsel %vm768, 0.992016, %v760
    %v781 = vsel %vm769, 0.992016, %v761
    %v782 = vlaneseq
    %v783 = vshrl.u32 %v782, 7
    %v784 = vsub.s32 1, %v783
    %v785 = vrot.slane %v80, %v784
    %787 = vrot.lane.b32.xlu0 %v785, 32
    %v788 = vpop.permute.xlu0 %787
    %v790 = vmul.f32 %v778, %v788
    %v791 = vmul.f32 %v779, %v788
    %794 = vrot.lane.b32.xlu0 %v790, 96
    %v795 = vpop.permute.xlu0 %794
    %796 = vrot.lane.b32.xlu0 %v791, 96
    %v797 = vpop.permute.xlu0 %796
    %v800 = vsel %vm83, %v795, 0.0
    %801 = vadd.xlane.f32.xlu0 %v800
    %v802 = vpop.xlane.xlu0 %801
    %v803 = vsel %vm83, %v797, 0.0
    %804 = vadd.xlane.f32.xlu0 %v803
    %v805 = vpop.xlane.xlu0 %804
    %v806 = vmul.f32 %v802, 2.0
    %v807 = vmul.f32 %v805, 2.0
    %v808 = vadd.f32 %v806, 1.0
    %v809 = vadd.f32 %v807, 1.0
    %v810 = vlaneseq
    %v811 = vshrl.u32 %v810, 7
    %v812 = vsub.s32 1, %v811
    %v813 = vrot.slane %v158, %v812
    %v814 = vadd.f32 %v808, %v813
    %v815 = vadd.f32 %v809, %v813
    %v816 = vsub.f32 1.0, %v780
    %v817 = vsub.f32 1.0, %v781
    %v818 = vmul.f32 %v780, %v813
    %v819 = vmul.f32 %v781, %v813
    %v820 = vadd.f32 %v808, %v818
    %v821 = vadd.f32 %v809, %v819
    %v822 = vmax.f32 %v820, 1e-15
    %v823 = vmax.f32 %v821, 1e-15
    %v824 = vrcp.pop %v822
    %v825 = vrcp.pop %v823
    %v826 = vmul.f32 %v814, %v778
    %v827 = vmul.f32 %v815, %v779
    %v828 = vmul.f32 %v816, %v785
    %v829 = vmul.f32 %v817, %v785
    %832 = vrot.lane.b32.xlu0 %v828, 32
    %v833 = vpop.permute.xlu0 %832
    %834 = vrot.lane.b32.xlu0 %v829, 32
    %v835 = vpop.permute.xlu0 %834
    %v838 = vadd.f32 %v826, %v833
    %v839 = vadd.f32 %v827, %v835
    %v840 = vmul.f32 %v838, %v824
    %v841 = vmul.f32 %v839, %v825
    %v842 = vmul.f32 %v814, %v814
    %v843 = vmul.f32 %v815, %v815
    %v844 = vmul.f32 %v842, %v780
    %v845 = vmul.f32 %v843, %v781
    %v846 = vmul.f32 %v814, 2.0
    %v847 = vmul.f32 %v815, 2.0
    %v848 = vmul.f32 %v846, %v816
    %v849 = vmul.f32 %v847, %v817
    %v850 = vmul.f32 %v848, %v802
    %v851 = vmul.f32 %v849, %v805
    %v852 = vadd.f32 %v844, %v850
    %v853 = vadd.f32 %v845, %v851
    %v854 = vmul.f32 %v816, %v816
    %v855 = vmul.f32 %v817, %v817
    %v856 = vmul.f32 %v854, %v813
    %v857 = vmul.f32 %v855, %v813
    %v858 = vadd.f32 %v852, %v856
    %v859 = vadd.f32 %v853, %v857
    %v860 = vmax.f32 %v858, 0.0
    %v861 = vmax.f32 %v859, 0.0
    %v862 = vmul.f32 %v824, %v824
    %v863 = vmul.f32 %v825, %v825
    %v864 = vmul.f32 %v860, %v862
    %v865 = vmul.f32 %v861, %v863
    %v866 = vmax.f32 %v864, 1e-30
    %v867 = vmax.f32 %v865, 1e-30
    %v868 = vrsqrt.pop %v866
    %v869 = vrsqrt.pop %v867
    %v870 = vmul.f32 %v866, %v868
    %v871 = vmul.f32 %v867, %v869
    %vm872 = vcmp.gt.f32.partialorder %v870, 0.996
    %vm873 = vcmp.gt.f32.partialorder %v871, 0.996
    %v874 = vmul.f32 %v868, 0.996
    %v875 = vmul.f32 %v869, 0.996
    %v876 = vmul.f32 %v840, %v874
    %v877 = vmul.f32 %v841, %v875
    %v878 = vsel %vm872, 1, 0
    %v879 = vsel %vm873, 1, 0
    %vm880 = vcmp.eq.s32.totalorder %v878, 1
    %vm881 = vcmp.eq.s32.totalorder %v879, 1
    %v882 = vsel %vm880, %v876, %v840
    %v883 = vsel %vm881, %v877, %v841
    %v884 = vsel %vm872, 0.992016, %v864
    %v885 = vsel %vm873, 0.992016, %v865
    %v886 = vmax.f32 %v680, 1e-30
    %v887 = vmax.f32 %v681, 1e-30
    %v888 = vrsqrt.pop %v886
    %v889 = vrsqrt.pop %v887
    %v890 = vmul.f32 %v886, %v888
    %v891 = vmul.f32 %v887, %v889
    %v892 = vmax.f32 %v890, -0.9999999
    %v893 = vmax.f32 %v891, -0.9999999
    %v894 = vmin.f32 %v892, 0.9999999
    %v895 = vmin.f32 %v893, 0.9999999
    %v896 = vadd.f32 %v894, 1.0
    %v897 = vadd.f32 %v895, 1.0
    %v898 = vsub.f32 1.0, %v894
    %v899 = vsub.f32 1.0, %v895
    %v900 = vrcp.pop %v898
    %v901 = vrcp.pop %v899
    %v902 = vmul.f32 %v896, %v900
    %v903 = vmul.f32 %v897, %v901
    %v904 = vlog2.pop %v902
    %v905 = vmul.f32 %v904, 0.6931472
    %v906 = vlog2.pop %v903
    %v907 = vmul.f32 %v906, 0.6931472
    %v908 = vmul.f32 %v905, 0.5
    %v909 = vmul.f32 %v907, 0.5
    %v910 = vmul.f32 %v908, %v888
    %v911 = vmul.f32 %v909, %v889
    %v912 = vmul.f32 %v678, %v910
    %v913 = vmul.f32 %v679, %v911
    %v914 = vmul.f32 %v912, 0.5
    %v915 = vmul.f32 %v913, 0.5
    %v916 = vtanh.pop %v914
    %v917 = vtanh.pop %v915
    %v918 = vadd.f32 %v916, 1.0
    %v919 = vadd.f32 %v917, 1.0
    %v920 = vmul.f32 %v918, 0.5
    %v921 = vmul.f32 %v919, 0.5
    %v922 = vmax.f32 %v884, 1e-30
    %v923 = vmax.f32 %v885, 1e-30
    %v924 = vrsqrt.pop %v922
    %v925 = vrsqrt.pop %v923
    %v926 = vmul.f32 %v922, %v924
    %v927 = vmul.f32 %v923, %v925
    %v928 = vmax.f32 %v926, -0.9999999
    %v929 = vmax.f32 %v927, -0.9999999
    %v930 = vmin.f32 %v928, 0.9999999
    %v931 = vmin.f32 %v929, 0.9999999
    %v932 = vadd.f32 %v930, 1.0
    %v933 = vadd.f32 %v931, 1.0
    %v934 = vsub.f32 1.0, %v930
    %v935 = vsub.f32 1.0, %v931
    %v936 = vrcp.pop %v934
    %v937 = vrcp.pop %v935
    %v938 = vmul.f32 %v932, %v936
    %v939 = vmul.f32 %v933, %v937
    %v940 = vlog2.pop %v938
    %v941 = vmul.f32 %v940, 0.6931472
    %v942 = vlog2.pop %v939
    %v943 = vmul.f32 %v942, 0.6931472
    %v944 = vmul.f32 %v941, 0.5
    %v945 = vmul.f32 %v943, 0.5
    %v946 = vmul.f32 %v944, %v924
    %v947 = vmul.f32 %v945, %v925
    %v948 = vmul.f32 %v882, %v946
    %v949 = vmul.f32 %v883, %v947
    %v950 = vmul.f32 %v948, 0.5
    %v951 = vmul.f32 %v949, 0.5
    %v952 = vtanh.pop %v950
    %v953 = vtanh.pop %v951
    %v954 = vadd.f32 %v952, 1.0
    %v955 = vadd.f32 %v953, 1.0
    %v956 = vmul.f32 %v954, 0.5
    %v957 = vmul.f32 %v955, 0.5
    %960 = vrot.lane.b32.xlu0 %v956, 96
    %v961 = vpop.permute.xlu0 %960
    %962 = vrot.lane.b32.xlu0 %v957, 96
    %v963 = vpop.permute.xlu0 %962
    %v966 = vmul.f32 %v78, %v961
    %v967 = vmul.f32 %v79, %v963
    %v968 = vmul.f32 %v956, %v956
    %v969 = vmul.f32 %v957, %v957
    %972 = vrot.lane.b32.xlu0 %v968, 96
    %v973 = vpop.permute.xlu0 %972
    %974 = vrot.lane.b32.xlu0 %v969, 96
    %v975 = vpop.permute.xlu0 %974
    %v978 = vsel %vm83, %v973, 0.0
    %979 = vadd.xlane.f32.xlu0 %v978
    %v980 = vpop.xlane.xlu0 %979
    %v981 = vsel %vm83, %v975, 0.0
    %982 = vadd.xlane.f32.xlu0 %v981
    %v983 = vpop.xlane.xlu0 %982
    %v984 = vmax.f32 %v980, 1e-30
    %v985 = vmax.f32 %v983, 1e-30
    %v986 = vrsqrt.pop %v984
    %v987 = vrsqrt.pop %v985
    %v988 = vmul.f32 %v984, %v986
    %v989 = vmul.f32 %v985, %v987
    %v990 = vmax.f32 %v988, -0.9999999
    %v991 = vmax.f32 %v989, -0.9999999
    %v992 = vmin.f32 %v990, 0.9999999
    %v993 = vmin.f32 %v991, 0.9999999
    %v994 = vadd.f32 %v992, 1.0
    %v995 = vadd.f32 %v993, 1.0
    %v996 = vsub.f32 1.0, %v992
    %v997 = vsub.f32 1.0, %v993
    %v998 = vrcp.pop %v996
    %v999 = vrcp.pop %v997
    %v1000 = vmul.f32 %v994, %v998
    %v1001 = vmul.f32 %v995, %v999
    %v1002 = vlog2.pop %v1000
    %v1003 = vmul.f32 %v1002, 0.6931472
    %v1004 = vlog2.pop %v1001
    %v1005 = vmul.f32 %v1004, 0.6931472
    %v1006 = vmul.f32 %v1003, 0.5
    %v1007 = vmul.f32 %v1005, 0.5
    %v1008 = vmul.f32 %v1006, %v986
    %v1009 = vmul.f32 %v1007, %v987
    %v1010 = vmul.f32 %v966, %v966
    %v1011 = vmul.f32 %v967, %v967
    %v1012 = vsel %vm83, %v1010, 0.0
    %1013 = vadd.xlane.f32.xlu0 %v1012
    %v1014 = vpop.xlane.xlu0 %1013
    %v1015 = vsel %vm83, %v1011, 0.0
    %1016 = vadd.xlane.f32.xlu0 %v1015
    %v1017 = vpop.xlane.xlu0 %1016
    %v1018 = vmax.f32 %v1014, 1e-30
    %v1019 = vmax.f32 %v1017, 1e-30
    %v1020 = vrsqrt.pop %v1018
    %v1021 = vrsqrt.pop %v1019
    %v1022 = vmul.f32 %v1018, %v1020
    %v1023 = vmul.f32 %v1019, %v1021
    %v1024 = vmul.f32 %v1022, %v1008
    %v1025 = vmul.f32 %v1023, %v1009
    %v1026 = vtanh.pop %v1024
    %v1027 = vtanh.pop %v1025
    %v1028 = vmul.f32 %v1026, %v1020
    %v1029 = vmul.f32 %v1027, %v1021
    %vm1030 = vcmp.le.f32.partialorder %v1014, 0.0
    %vm1031 = vcmp.le.f32.partialorder %v1017, 0.0
    %v1032 = vmul.f32 %v1028, %v966
    %v1033 = vmul.f32 %v1029, %v967
    %v1034 = vsel %vm1030, 1, 0
    %v1035 = vsel %vm1031, 1, 0
    %vm1036 = vcmp.eq.s32.totalorder %v1034, 1
    %vm1037 = vcmp.eq.s32.totalorder %v1035, 1
    %v1038 = vsel %vm1036, 0.0, %v1032
    %v1039 = vsel %vm1037, 0.0, %v1033
    %v1040 = vmul.f32 %v1028, %v1028
    %v1041 = vmul.f32 %v1029, %v1029
    %v1042 = vmul.f32 %v1040, %v1014
    %v1043 = vmul.f32 %v1041, %v1017
    %v1044 = vsel %vm1030, 0.0, %v1042
    %v1045 = vsel %vm1031, 0.0, %v1043
    %v1046 = vmax.f32 %v1044, 1e-30
    %v1047 = vmax.f32 %v1045, 1e-30
    %v1048 = vrsqrt.pop %v1046
    %v1049 = vrsqrt.pop %v1047
    %v1050 = vmul.f32 %v1046, %v1048
    %v1051 = vmul.f32 %v1047, %v1049
    %vm1052 = vcmp.gt.f32.partialorder %v1050, 0.996
    %vm1053 = vcmp.gt.f32.partialorder %v1051, 0.996
    %v1054 = vmul.f32 %v1048, 0.996
    %v1055 = vmul.f32 %v1049, 0.996
    %v1056 = vmul.f32 %v1038, %v1054
    %v1057 = vmul.f32 %v1039, %v1055
    %v1058 = vsel %vm1052, 1, 0
    %v1059 = vsel %vm1053, 1, 0
    %vm1060 = vcmp.eq.s32.totalorder %v1058, 1
    %vm1061 = vcmp.eq.s32.totalorder %v1059, 1
    %v1062 = vsel %vm1060, %v1056, %v1038
    %v1063 = vsel %vm1061, %v1057, %v1039
    %v1064 = vsel %vm1052, 0.992016, %v1044
    %v1065 = vsel %vm1053, 0.992016, %v1045
    %v1066 = vld [vmem:[#allocation9] sm:$0xff]
    %v1067 = vld [vmem:[#allocation9 + $0x8] sm:$0xff]
    %v1068 = vld [vmem:[#allocation9 + $0x10] sm:$0xff]
    %v1069 = vld [vmem:[#allocation9 + $0x18] sm:$0xff]
    %v1071 = vsel %vm83, %v1062, 0
    %v1074 = vsel %vm83, %v1063, 0
    %1076 = vmatprep.subr.mxu0 0.0
    %1077 = vmatpush1.msra.mxu0 %v1066
    %1078 = vmatprep.subr.mxu0 0.0
    %1079 = vmatpush1.msra.mxu0 %v1067
    %1080 = vmatprep.subr.mxu0 0.0
    %1081 = vmatpush1.msra.mxu0 %v1068
    %1082 = vmatprep.subr.mxu0 0.0
    %1083 = vmatpush1.msra.mxu0 %v1069
    %1084 = vmatprep.subr.mxu0 0.0
    %1085 = vmatpush1.msra.mxu0 0.0
    %1086 = vmatprep.subr.mxu0 0.0
    %1087 = vmatpush1.msra.mxu0 0.0
    %1088 = vmatprep.subr.mxu0 0.0
    %1089 = vmatpush1.msra.mxu0 0.0
    %1090 = vmatprep.subr.mxu0 0.0
    %1091 = vmatpush1.msra.mxu0 0.0
    %1092 = vmatprep.subr.mxu0 0.0
    %1093 = vmatpush1.msra.mxu0 0.0
    %1094 = vmatprep.subr.mxu0 0.0
    %1095 = vmatpush1.msra.mxu0 0.0
    %1096 = vmatprep.subr.mxu0 0.0
    %1097 = vmatpush1.msra.mxu0 0.0
    %1098 = vmatprep.subr.mxu0 0.0
    %1099 = vmatpush1.msra.mxu0 0.0
    %1100 = vmatprep.subr.mxu0 0.0
    %1101 = vmatpush1.msra.mxu0 0.0
    %1102 = vmatprep.subr.mxu0 0.0
    %1103 = vmatpush1.msra.mxu0 0.0
    %1104 = vmatprep.subr.mxu0 0.0
    %1105 = vmatpush1.msra.mxu0 0.0
    %1106 = vmatprep.subr.mxu0 0.0
    %1107 = vmatpush1.msra.mxu0 0.0
    %1108 = vmatprep.subr.mxu0 0.0
    %1109 = vmatpush1.msra.mxu0 0.0
    %1110 = vmatprep.subr.mxu0 0.0
    %1111 = vmatpush1.msra.mxu0 0.0
    %1112 = vmatprep.subr.mxu0 0.0
    %1113 = vmatpush1.msra.mxu0 0.0
    %1114 = vmatprep.subr.mxu0 0.0
    %1115 = vmatpush1.msra.mxu0 0.0
    %1116 = vmatprep.subr.mxu0 0.0
    %1117 = vmatpush1.msra.mxu0 0.0
    %1118 = vmatprep.subr.mxu0 0.0
    %1119 = vmatpush1.msra.mxu0 0.0
    %1120 = vmatprep.subr.mxu0 0.0
    %1121 = vmatpush1.msra.mxu0 0.0
    %1122 = vmatprep.subr.mxu0 0.0
    %1123 = vmatpush1.msra.mxu0 0.0
    %1124 = vmatprep.subr.mxu0 0.0
    %1125 = vmatpush1.msra.mxu0 0.0
    %1126 = vmatprep.subr.mxu0 0.0
    %1127 = vmatpush1.msra.mxu0 0.0
    %1128 = vmatprep.subr.mxu0 0.0
    %1129 = vmatpush1.msra.mxu0 0.0
    %1130 = vmatprep.subr.mxu0 0.0
    %1131 = vmatpush1.msra.mxu0 0.0
    %1132 = vmatprep.subr.mxu0 0.0
    %1133 = vmatpush1.msra.mxu0 0.0
    %1134 = vmatprep.subr.mxu0 0.0
    %1135 = vmatpush1.msra.mxu0 0.0
    %1136 = vmatprep.subr.mxu0 0.0
    %1137 = vmatpush1.msra.mxu0 0.0
    %1138 = vmatprep.subr.mxu0 0.0
    %1139 = vmatpush1.msra.mxu0 0.0
    %1140 = vmatprep.mubr.f32.mxu0 0.0
    %1141 = vmatmul.mubr.f32.gmra.mrb[0].mxu0 %v1071
    %v1142 = vpop.f32.mrb[0].mxu0
    %v1143 = vadd.f32 0.0, %v1142
    %v1144 = vpop.f32.mrb[0].mxu0
    %1145 = vmatprep.mubr.f32.mxu0 0.0
    %1146 = vmatmul.mubr.f32.gmra.mrb[0].mxu0 %v1074
    %v1147 = vpop.f32.mrb[0].mxu0
    %v1148 = vadd.f32 0.0, %v1147
    %v1149 = vpop.f32.mrb[0].mxu0
    %1150 = vdwg.mxu0
    %v1151 = vmax.f32 %v1064, 1e-30
    %v1152 = vmax.f32 %v1065, 1e-30
    %v1153 = vrsqrt.pop %v1151
    %v1154 = vrsqrt.pop %v1152
    %v1155 = vmul.f32 %v1151, %v1153
    %v1156 = vmul.f32 %v1152, %v1154
    %v1157 = vmax.f32 %v1155, -0.9999999
    %v1158 = vmax.f32 %v1156, -0.9999999
    %v1159 = vmin.f32 %v1157, 0.9999999
    %v1160 = vmin.f32 %v1158, 0.9999999
    %v1161 = vadd.f32 %v1159, 1.0
    %v1162 = vadd.f32 %v1160, 1.0
    %v1163 = vsub.f32 1.0, %v1159
    %v1164 = vsub.f32 1.0, %v1160
    %v1165 = vrcp.pop %v1163
    %v1166 = vrcp.pop %v1164
    %v1167 = vmul.f32 %v1161, %v1165
    %v1168 = vmul.f32 %v1162, %v1166
    %v1169 = vlog2.pop %v1167
    %v1170 = vmul.f32 %v1169, 0.6931472
    %v1171 = vlog2.pop %v1168
    %v1172 = vmul.f32 %v1171, 0.6931472
    %v1173 = vmul.f32 %v1170, 0.5
    %v1174 = vmul.f32 %v1172, 0.5
    %v1175 = vmul.f32 %v1173, %v1153
    %v1176 = vmul.f32 %v1174, %v1154
    %v1177 = vmul.f32 %v1143, %v1143
    %v1178 = vmul.f32 %v1148, %v1148
    %v1179 = vsel %vm83, %v1177, 0.0
    %1180 = vadd.xlane.f32.xlu0 %v1179
    %v1181 = vpop.xlane.xlu0 %1180
    %v1182 = vsel %vm83, %v1178, 0.0
    %1183 = vadd.xlane.f32.xlu0 %v1182
    %v1184 = vpop.xlane.xlu0 %1183
    %v1185 = vmax.f32 %v1181, 1e-30
    %v1186 = vmax.f32 %v1184, 1e-30
    %v1187 = vrsqrt.pop %v1185
    %v1188 = vrsqrt.pop %v1186
    %v1189 = vmul.f32 %v1185, %v1187
    %v1190 = vmul.f32 %v1186, %v1188
    %v1191 = vmul.f32 %v1189, %v1175
    %v1192 = vmul.f32 %v1190, %v1176
    %v1193 = vtanh.pop %v1191
    %v1194 = vtanh.pop %v1192
    %v1195 = vmul.f32 %v1193, %v1187
    %v1196 = vmul.f32 %v1194, %v1188
    %vm1197 = vcmp.le.f32.partialorder %v1181, 0.0
    %vm1198 = vcmp.le.f32.partialorder %v1184, 0.0
    %v1199 = vmul.f32 %v1195, %v1143
    %v1200 = vmul.f32 %v1196, %v1148
    %v1201 = vsel %vm1197, 1, 0
    %v1202 = vsel %vm1198, 1, 0
    %vm1203 = vcmp.eq.s32.totalorder %v1201, 1
    %vm1204 = vcmp.eq.s32.totalorder %v1202, 1
    %v1205 = vsel %vm1203, 0.0, %v1199
    %v1206 = vsel %vm1204, 0.0, %v1200
    %v1207 = vmul.f32 %v1195, %v1195
    %v1208 = vmul.f32 %v1196, %v1196
    %v1209 = vmul.f32 %v1207, %v1181
    %v1210 = vmul.f32 %v1208, %v1184
    %v1211 = vsel %vm1197, 0.0, %v1209
    %v1212 = vsel %vm1198, 0.0, %v1210
    %v1213 = vmax.f32 %v1211, 1e-30
    %v1214 = vmax.f32 %v1212, 1e-30
    %v1215 = vrsqrt.pop %v1213
    %v1216 = vrsqrt.pop %v1214
    %v1217 = vmul.f32 %v1213, %v1215
    %v1218 = vmul.f32 %v1214, %v1216
    %vm1219 = vcmp.gt.f32.partialorder %v1217, 0.996
    %vm1220 = vcmp.gt.f32.partialorder %v1218, 0.996
    %v1221 = vmul.f32 %v1215, 0.996
    %v1222 = vmul.f32 %v1216, 0.996
    %v1223 = vmul.f32 %v1205, %v1221
    %v1224 = vmul.f32 %v1206, %v1222
    %v1225 = vsel %vm1219, 1, 0
    %v1226 = vsel %vm1220, 1, 0
    %vm1227 = vcmp.eq.s32.totalorder %v1225, 1
    %vm1228 = vcmp.eq.s32.totalorder %v1226, 1
    %v1229 = vsel %vm1227, %v1223, %v1205
    %v1230 = vsel %vm1228, %v1224, %v1206
    %v1231 = vsel %vm1219, 0.992016, %v1211
    %v1232 = vsel %vm1220, 0.992016, %v1212
    %1233 = vrot.lane.b32.xlu0 %v502, 32
    %v1234 = vpop.permute.xlu0 %1233
    %1235 = vrot.lane.b32.xlu0 %v503, 32
    %v1236 = vpop.permute.xlu0 %1235
    %v1239 = vmul.f32 %v1229, %v1234
    %v1240 = vmul.f32 %v1230, %v1236
    %v1241 = vsel %vm83, %v1239, 0.0
    %1242 = vadd.xlane.f32.xlu0 %v1241
    %v1243 = vpop.xlane.xlu0 %1242
    %v1244 = vsel %vm83, %v1240, 0.0
    %1245 = vadd.xlane.f32.xlu0 %v1244
    %v1246 = vpop.xlane.xlu0 %1245
    %v1247 = vmul.f32 %v1243, 2.0
    %v1248 = vmul.f32 %v1246, 2.0
    %v1249 = vadd.f32 %v1247, 1.0
    %v1250 = vadd.f32 %v1248, 1.0
    %v1251 = vadd.f32 %v1249, %v504
    %v1252 = vadd.f32 %v1250, %v505
    %v1253 = vsub.f32 1.0, %v1231
    %v1254 = vsub.f32 1.0, %v1232
    %v1255 = vmul.f32 %v1231, %v504
    %v1256 = vmul.f32 %v1232, %v505
    %v1257 = vadd.f32 %v1249, %v1255
    %v1258 = vadd.f32 %v1250, %v1256
    %v1259 = vmax.f32 %v1257, 1e-15
    %v1260 = vmax.f32 %v1258, 1e-15
    %v1261 = vrcp.pop %v1259
    %v1262 = vrcp.pop %v1260
    %v1263 = vmul.f32 %v1251, %v1229
    %v1264 = vmul.f32 %v1252, %v1230
    %v1265 = vmul.f32 %v1253, %v502
    %v1266 = vmul.f32 %v1254, %v503
    %1269 = vrot.lane.b32.xlu0 %v1265, 32
    %v1270 = vpop.permute.xlu0 %1269
    %1271 = vrot.lane.b32.xlu0 %v1266, 32
    %v1272 = vpop.permute.xlu0 %1271
    %v1275 = vadd.f32 %v1263, %v1270
    %v1276 = vadd.f32 %v1264, %v1272
    %v1277 = vmul.f32 %v1275, %v1261
    %v1278 = vmul.f32 %v1276, %v1262
    %v1279 = vmul.f32 %v1251, %v1251
    %v1280 = vmul.f32 %v1252, %v1252
    %v1281 = vmul.f32 %v1279, %v1231
    %v1282 = vmul.f32 %v1280, %v1232
    %v1283 = vmul.f32 %v1251, 2.0
    %v1284 = vmul.f32 %v1252, 2.0
    %v1285 = vmul.f32 %v1283, %v1253
    %v1286 = vmul.f32 %v1284, %v1254
    %v1287 = vmul.f32 %v1285, %v1243
    %v1288 = vmul.f32 %v1286, %v1246
    %v1289 = vadd.f32 %v1281, %v1287
    %v1290 = vadd.f32 %v1282, %v1288
    %v1291 = vmul.f32 %v1253, %v1253
    %v1292 = vmul.f32 %v1254, %v1254
    %v1293 = vmul.f32 %v1291, %v504
    %v1294 = vmul.f32 %v1292, %v505
    %v1295 = vadd.f32 %v1289, %v1293
    %v1296 = vadd.f32 %v1290, %v1294
    %v1297 = vmax.f32 %v1295, 0.0
    %v1298 = vmax.f32 %v1296, 0.0
    %v1299 = vmul.f32 %v1261, %v1261
    %v1300 = vmul.f32 %v1262, %v1262
    %v1301 = vmul.f32 %v1297, %v1299
    %v1302 = vmul.f32 %v1298, %v1300
    %v1303 = vmax.f32 %v1301, 1e-30
    %v1304 = vmax.f32 %v1302, 1e-30
    %v1305 = vrsqrt.pop %v1303
    %v1306 = vrsqrt.pop %v1304
    %v1307 = vmul.f32 %v1303, %v1305
    %v1308 = vmul.f32 %v1304, %v1306
    %vm1309 = vcmp.gt.f32.partialorder %v1307, 0.996
    %vm1310 = vcmp.gt.f32.partialorder %v1308, 0.996
    %v1311 = vmul.f32 %v1305, 0.996
    %v1312 = vmul.f32 %v1306, 0.996
    %v1313 = vmul.f32 %v1277, %v1311
    %v1314 = vmul.f32 %v1278, %v1312
    %v1315 = vsel %vm1309, 1, 0
    %v1316 = vsel %vm1310, 1, 0
    %vm1317 = vcmp.eq.s32.totalorder %v1315, 1
    %vm1318 = vcmp.eq.s32.totalorder %v1316, 1
    %v1319 = vsel %vm1317, %v1313, %v1277
    %v1320 = vsel %vm1318, %v1314, %v1278
    %v1321 = vsel %vm1309, 0.992016, %v1301
    %v1322 = vsel %vm1310, 0.992016, %v1302
    %v1323 = vlaneseq
    %v1324 = vshrl.u32 %v1323, 7
    %v1325 = vsub.s32 2, %v1324
    %v1326 = vrot.slane %v80, %v1325
    %v1327 = vmul.f32 %v1319, %v1326
    %v1328 = vmul.f32 %v1320, %v1326
    %v1329 = vsel %vm83, %v1327, 0.0
    %1330 = vadd.xlane.f32.xlu0 %v1329
    %v1331 = vpop.xlane.xlu0 %1330
    %v1332 = vsel %vm83, %v1328, 0.0
    %1333 = vadd.xlane.f32.xlu0 %v1332
    %v1334 = vpop.xlane.xlu0 %1333
    %v1335 = vmul.f32 %v1331, 2.0
    %v1336 = vmul.f32 %v1334, 2.0
    %v1337 = vadd.f32 %v1335, 1.0
    %v1338 = vadd.f32 %v1336, 1.0
    %v1339 = vlaneseq
    %v1340 = vshrl.u32 %v1339, 7
    %v1341 = vsub.s32 2, %v1340
    %v1342 = vrot.slane %v162, %v1341
    %v1343 = vadd.f32 %v1337, %v1342
    %v1344 = vadd.f32 %v1338, %v1342
    %v1345 = vsub.f32 1.0, %v1321
    %v1346 = vsub.f32 1.0, %v1322
    %v1347 = vmul.f32 %v1321, %v1342
    %v1348 = vmul.f32 %v1322, %v1342
    %v1349 = vadd.f32 %v1337, %v1347
    %v1350 = vadd.f32 %v1338, %v1348
    %v1351 = vmax.f32 %v1349, 1e-15
    %v1352 = vmax.f32 %v1350, 1e-15
    %v1353 = vrcp.pop %v1351
    %v1354 = vrcp.pop %v1352
    %v1355 = vmul.f32 %v1343, %v1319
    %v1356 = vmul.f32 %v1344, %v1320
    %v1357 = vmul.f32 %v1345, %v1326
    %v1358 = vmul.f32 %v1346, %v1326
    %v1359 = vadd.f32 %v1355, %v1357
    %v1360 = vadd.f32 %v1356, %v1358
    %v1361 = vmul.f32 %v1359, %v1353
    %v1362 = vmul.f32 %v1360, %v1354
    %v1363 = vmul.f32 %v1343, %v1343
    %v1364 = vmul.f32 %v1344, %v1344
    %v1365 = vmul.f32 %v1363, %v1321
    %v1366 = vmul.f32 %v1364, %v1322
    %v1367 = vmul.f32 %v1343, 2.0
    %v1368 = vmul.f32 %v1344, 2.0
    %v1369 = vmul.f32 %v1367, %v1345
    %v1370 = vmul.f32 %v1368, %v1346
    %v1371 = vmul.f32 %v1369, %v1331
    %v1372 = vmul.f32 %v1370, %v1334
    %v1373 = vadd.f32 %v1365, %v1371
    %v1374 = vadd.f32 %v1366, %v1372
    %v1375 = vmul.f32 %v1345, %v1345
    %v1376 = vmul.f32 %v1346, %v1346
    %v1377 = vmul.f32 %v1375, %v1342
    %v1378 = vmul.f32 %v1376, %v1342
    %v1379 = vadd.f32 %v1373, %v1377
    %v1380 = vadd.f32 %v1374, %v1378
    %v1381 = vmax.f32 %v1379, 0.0
    %v1382 = vmax.f32 %v1380, 0.0
    %v1383 = vmul.f32 %v1353, %v1353
    %v1384 = vmul.f32 %v1354, %v1354
    %v1385 = vmul.f32 %v1381, %v1383
    %v1386 = vmul.f32 %v1382, %v1384
    %v1387 = vmax.f32 %v1385, 1e-30
    %v1388 = vmax.f32 %v1386, 1e-30
    %v1389 = vrsqrt.pop %v1387
    %v1390 = vrsqrt.pop %v1388
    %v1391 = vmul.f32 %v1387, %v1389
    %v1392 = vmul.f32 %v1388, %v1390
    %vm1393 = vcmp.gt.f32.partialorder %v1391, 0.996
    %vm1394 = vcmp.gt.f32.partialorder %v1392, 0.996
    %v1395 = vmul.f32 %v1389, 0.996
    %v1396 = vmul.f32 %v1390, 0.996
    %v1397 = vmul.f32 %v1361, %v1395
    %v1398 = vmul.f32 %v1362, %v1396
    %v1399 = vsel %vm1393, 1, 0
    %v1400 = vsel %vm1394, 1, 0
    %vm1401 = vcmp.eq.s32.totalorder %v1399, 1
    %vm1402 = vcmp.eq.s32.totalorder %v1400, 1
    %v1403 = vsel %vm1401, %v1397, %v1361
    %v1404 = vsel %vm1402, %v1398, %v1362
    %v1405 = vsel %vm1393, 0.992016, %v1385
    %v1406 = vsel %vm1394, 0.992016, %v1386
    %v1407 = vsub.f32 0.0, %v78
    %v1408 = vsub.f32 0.0, %v79
    %v1409 = vmul.f32 %v1407, %v1403
    %v1410 = vmul.f32 %v1408, %v1404
    %v1411 = vsel %vm83, %v1409, 0.0
    %1412 = vadd.xlane.f32.xlu0 %v1411
    %v1413 = vpop.xlane.xlu0 %1412
    %v1414 = vsel %vm83, %v1410, 0.0
    %1415 = vadd.xlane.f32.xlu0 %v1414
    %v1416 = vpop.xlane.xlu0 %1415
    %v1417 = vmul.f32 %v1413, 2.0
    %v1418 = vmul.f32 %v1416, 2.0
    %v1419 = vadd.f32 %v1417, 1.0
    %v1420 = vadd.f32 %v1418, 1.0
    %v1421 = vadd.f32 %v1419, %v1405
    %v1422 = vadd.f32 %v1420, %v1406
    %v1423 = vsub.f32 1.0, %v94
    %v1424 = vsub.f32 1.0, %v97
    %v1425 = vmul.f32 %v94, %v1405
    %v1426 = vmul.f32 %v97, %v1406
    %v1427 = vadd.f32 %v1419, %v1425
    %v1428 = vadd.f32 %v1420, %v1426
    %v1429 = vmax.f32 %v1427, 1e-15
    %v1430 = vmax.f32 %v1428, 1e-15
    %v1431 = vrcp.pop %v1429
    %v1432 = vrcp.pop %v1430
    %v1433 = vmul.f32 %v1421, %v1407
    %v1434 = vmul.f32 %v1422, %v1408
    %v1435 = vmul.f32 %v1423, %v1403
    %v1436 = vmul.f32 %v1424, %v1404
    %v1437 = vadd.f32 %v1433, %v1435
    %v1438 = vadd.f32 %v1434, %v1436
    %v1439 = vmul.f32 %v1437, %v1431
    %v1440 = vmul.f32 %v1438, %v1432
    %v1441 = vmul.f32 %v1421, %v1421
    %v1442 = vmul.f32 %v1422, %v1422
    %v1443 = vmul.f32 %v1441, %v94
    %v1444 = vmul.f32 %v1442, %v97
    %v1445 = vmul.f32 %v1421, 2.0
    %v1446 = vmul.f32 %v1422, 2.0
    %v1447 = vmul.f32 %v1445, %v1423
    %v1448 = vmul.f32 %v1446, %v1424
    %v1449 = vmul.f32 %v1447, %v1413
    %v1450 = vmul.f32 %v1448, %v1416
    %v1451 = vadd.f32 %v1443, %v1449
    %v1452 = vadd.f32 %v1444, %v1450
    %v1453 = vmul.f32 %v1423, %v1423
    %v1454 = vmul.f32 %v1424, %v1424
    %v1455 = vmul.f32 %v1453, %v1405
    %v1456 = vmul.f32 %v1454, %v1406
    %v1457 = vadd.f32 %v1451, %v1455
    %v1458 = vadd.f32 %v1452, %v1456
    %v1459 = vmax.f32 %v1457, 0.0
    %v1460 = vmax.f32 %v1458, 0.0
    %v1461 = vmul.f32 %v1431, %v1431
    %v1462 = vmul.f32 %v1432, %v1432
    %v1463 = vmul.f32 %v1459, %v1461
    %v1464 = vmul.f32 %v1460, %v1462
    %v1465 = vmax.f32 %v1463, 1e-30
    %v1466 = vmax.f32 %v1464, 1e-30
    %v1467 = vrsqrt.pop %v1465
    %v1468 = vrsqrt.pop %v1466
    %v1469 = vmul.f32 %v1465, %v1467
    %v1470 = vmul.f32 %v1466, %v1468
    %vm1471 = vcmp.gt.f32.partialorder %v1469, 0.996
    %vm1472 = vcmp.gt.f32.partialorder %v1470, 0.996
    %v1473 = vmul.f32 %v1467, 0.996
    %v1474 = vmul.f32 %v1468, 0.996
    %v1475 = vmul.f32 %v1439, %v1473
    %v1476 = vmul.f32 %v1440, %v1474
    %v1477 = vsel %vm1471, 1, 0
    %v1478 = vsel %vm1472, 1, 0
    %vm1479 = vcmp.eq.s32.totalorder %v1477, 1
    %vm1480 = vcmp.eq.s32.totalorder %v1478, 1
    %v1481 = vsel %vm1479, %v1475, %v1439
    %v1482 = vsel %vm1480, %v1476, %v1440
    %v1483 = vmul.f32 %v1481, %v920
    %v1484 = vmul.f32 %v1482, %v921
    %v1485 = vmul.f32 %v920, %v920
    %v1486 = vmul.f32 %v921, %v921
    %v1487 = vsel %vm83, %v1485, 0.0
    %1488 = vadd.xlane.f32.xlu0 %v1487
    %v1489 = vpop.xlane.xlu0 %1488
    %v1490 = vsel %vm83, %v1486, 0.0
    %1491 = vadd.xlane.f32.xlu0 %v1490
    %v1492 = vpop.xlane.xlu0 %1491
    %v1493 = vmax.f32 %v1489, 1e-30
    %v1494 = vmax.f32 %v1492, 1e-30
    %v1495 = vrsqrt.pop %v1493
    %v1496 = vrsqrt.pop %v1494
    %v1497 = vmul.f32 %v1493, %v1495
    %v1498 = vmul.f32 %v1494, %v1496
    %v1499 = vmax.f32 %v1497, -0.9999999
    %v1500 = vmax.f32 %v1498, -0.9999999
    %v1501 = vmin.f32 %v1499, 0.9999999
    %v1502 = vmin.f32 %v1500, 0.9999999
    %v1503 = vadd.f32 %v1501, 1.0
    %v1504 = vadd.f32 %v1502, 1.0
    %v1505 = vsub.f32 1.0, %v1501
    %v1506 = vsub.f32 1.0, %v1502
    %v1507 = vrcp.pop %v1505
    %v1508 = vrcp.pop %v1506
    %v1509 = vmul.f32 %v1503, %v1507
    %v1510 = vmul.f32 %v1504, %v1508
    %v1511 = vlog2.pop %v1509
    %v1512 = vmul.f32 %v1511, 0.6931472
    %v1513 = vlog2.pop %v1510
    %v1514 = vmul.f32 %v1513, 0.6931472
    %v1515 = vmul.f32 %v1512, 0.5
    %v1516 = vmul.f32 %v1514, 0.5
    %v1517 = vmul.f32 %v1515, %v1495
    %v1518 = vmul.f32 %v1516, %v1496
    %v1519 = vmul.f32 %v1483, %v1483
    %v1520 = vmul.f32 %v1484, %v1484
    %v1521 = vsel %vm83, %v1519, 0.0
    %1522 = vadd.xlane.f32.xlu0 %v1521
    %v1523 = vpop.xlane.xlu0 %1522
    %v1524 = vsel %vm83, %v1520, 0.0
    %1525 = vadd.xlane.f32.xlu0 %v1524
    %v1526 = vpop.xlane.xlu0 %1525
    %v1527 = vmax.f32 %v1523, 1e-30
    %v1528 = vmax.f32 %v1526, 1e-30
    %v1529 = vrsqrt.pop %v1527
    %v1530 = vrsqrt.pop %v1528
    %v1531 = vmul.f32 %v1527, %v1529
    %v1532 = vmul.f32 %v1528, %v1530
    %v1533 = vmul.f32 %v1531, %v1517
    %v1534 = vmul.f32 %v1532, %v1518
    %v1535 = vtanh.pop %v1533
    %v1536 = vtanh.pop %v1534
    %v1537 = vmul.f32 %v1535, %v1529
    %v1538 = vmul.f32 %v1536, %v1530
    %vm1539 = vcmp.le.f32.partialorder %v1523, 0.0
    %vm1540 = vcmp.le.f32.partialorder %v1526, 0.0
    %v1541 = vmul.f32 %v1537, %v1483
    %v1542 = vmul.f32 %v1538, %v1484
    %v1543 = vsel %vm1539, 1, 0
    %v1544 = vsel %vm1540, 1, 0
    %vm1545 = vcmp.eq.s32.totalorder %v1543, 1
    %vm1546 = vcmp.eq.s32.totalorder %v1544, 1
    %v1547 = vsel %vm1545, 0.0, %v1541
    %v1548 = vsel %vm1546, 0.0, %v1542
    %v1549 = vmul.f32 %v1537, %v1537
    %v1550 = vmul.f32 %v1538, %v1538
    %v1551 = vmul.f32 %v1549, %v1523
    %v1552 = vmul.f32 %v1550, %v1526
    %v1553 = vsel %vm1539, 0.0, %v1551
    %v1554 = vsel %vm1540, 0.0, %v1552
    %v1555 = vmax.f32 %v1553, 1e-30
    %v1556 = vmax.f32 %v1554, 1e-30
    %v1557 = vrsqrt.pop %v1555
    %v1558 = vrsqrt.pop %v1556
    %v1559 = vmul.f32 %v1555, %v1557
    %v1560 = vmul.f32 %v1556, %v1558
    %vm1561 = vcmp.gt.f32.partialorder %v1559, 0.996
    %vm1562 = vcmp.gt.f32.partialorder %v1560, 0.996
    %v1563 = vmul.f32 %v1557, 0.996
    %v1564 = vmul.f32 %v1558, 0.996
    %v1565 = vmul.f32 %v1547, %v1563
    %v1566 = vmul.f32 %v1548, %v1564
    %v1567 = vsel %vm1561, 1, 0
    %v1568 = vsel %vm1562, 1, 0
    %vm1569 = vcmp.eq.s32.totalorder %v1567, 1
    %vm1570 = vcmp.eq.s32.totalorder %v1568, 1
    %v1571 = vsel %vm1569, %v1565, %v1547
    %v1572 = vsel %vm1570, %v1566, %v1548
    %v1573 = vsel %vm1561, 0.992016, %v1553
    %v1574 = vsel %vm1562, 0.992016, %v1554
    %v1575 = vmul.f32 %v78, %v1571
    %v1576 = vmul.f32 %v79, %v1572
    %v1577 = vsel %vm83, %v1575, 0.0
    %1578 = vadd.xlane.f32.xlu0 %v1577
    %v1579 = vpop.xlane.xlu0 %1578
    %v1580 = vsel %vm83, %v1576, 0.0
    %1581 = vadd.xlane.f32.xlu0 %v1580
    %v1582 = vpop.xlane.xlu0 %1581
    %v1583 = vmul.f32 %v1579, 2.0
    %v1584 = vmul.f32 %v1582, 2.0
    %v1585 = vadd.f32 %v1583, 1.0
    %v1586 = vadd.f32 %v1584, 1.0
    %v1587 = vadd.f32 %v1585, %v1573
    %v1588 = vadd.f32 %v1586, %v1574
    %v1589 = vmul.f32 %v94, %v1573
    %v1590 = vmul.f32 %v97, %v1574
    %v1591 = vadd.f32 %v1585, %v1589
    %v1592 = vadd.f32 %v1586, %v1590
    %v1593 = vmax.f32 %v1591, 1e-15
    %v1594 = vmax.f32 %v1592, 1e-15
    %v1595 = vrcp.pop %v1593
    %v1596 = vrcp.pop %v1594
    %v1597 = vmul.f32 %v1587, %v78
    %v1598 = vmul.f32 %v1588, %v79
    %v1599 = vmul.f32 %v1423, %v1571
    %v1600 = vmul.f32 %v1424, %v1572
    %v1601 = vadd.f32 %v1597, %v1599
    %v1602 = vadd.f32 %v1598, %v1600
    %v1603 = vmul.f32 %v1601, %v1595
    %v1604 = vmul.f32 %v1602, %v1596
    %v1605 = vmul.f32 %v1587, %v1587
    %v1606 = vmul.f32 %v1588, %v1588
    %v1607 = vmul.f32 %v1605, %v94
    %v1608 = vmul.f32 %v1606, %v97
    %v1609 = vmul.f32 %v1587, 2.0
    %v1610 = vmul.f32 %v1588, 2.0
    %v1611 = vmul.f32 %v1609, %v1423
    %v1612 = vmul.f32 %v1610, %v1424
    %v1613 = vmul.f32 %v1611, %v1579
    %v1614 = vmul.f32 %v1612, %v1582
    %v1615 = vadd.f32 %v1607, %v1613
    %v1616 = vadd.f32 %v1608, %v1614
    %v1617 = vmul.f32 %v1453, %v1573
    %v1618 = vmul.f32 %v1454, %v1574
    %v1619 = vadd.f32 %v1615, %v1617
    %v1620 = vadd.f32 %v1616, %v1618
    %v1621 = vmax.f32 %v1619, 0.0
    %v1622 = vmax.f32 %v1620, 0.0
    %v1623 = vmul.f32 %v1595, %v1595
    %v1624 = vmul.f32 %v1596, %v1596
    %v1625 = vmul.f32 %v1621, %v1623
    %v1626 = vmul.f32 %v1622, %v1624
    %v1627 = vmax.f32 %v1625, 1e-30
    %v1628 = vmax.f32 %v1626, 1e-30
    %v1629 = vrsqrt.pop %v1627
    %v1630 = vrsqrt.pop %v1628
    %v1631 = vmul.f32 %v1627, %v1629
    %v1632 = vmul.f32 %v1628, %v1630
    %vm1633 = vcmp.gt.f32.partialorder %v1631, 0.996
    %vm1634 = vcmp.gt.f32.partialorder %v1632, 0.996
    %v1635 = vmul.f32 %v1629, 0.996
    %v1636 = vmul.f32 %v1630, 0.996
    %v1637 = vmul.f32 %v1603, %v1635
    %v1638 = vmul.f32 %v1604, %v1636
    %v1639 = vsel %vm1633, 1, 0
    %v1640 = vsel %vm1634, 1, 0
    %vm1641 = vcmp.eq.s32.totalorder %v1639, 1
    %vm1642 = vcmp.eq.s32.totalorder %v1640, 1
    %v1643 = vsel %vm1641, %v1637, %v1603
    %v1644 = vsel %vm1642, %v1638, %v1604
    %1645 = vst.msk [vmem:[#allocation11] sm:$0xff] %vm83, %v1643
    %1646 = vst.msk [vmem:[#allocation11 + $0x8] sm:$0xff] %vm83, %v1644
    // Predicated region
    $region38: #{tpu_custom_call.1} parent=1 // pred_check
      _
    $region39: #{tpu_custom_call.1} parent=1 // pred_check_branch
      %1648 = sbr.rel (0) target = $region41
    $region40: #{tpu_custom_call.1} parent=1 // pred_region
      %s1650 = ssub.s32 256, 256
      %1651 = vsyncadd [#allocation5], %s1650
      %s1652 = sshll.u32 [#allocation11], 4
      %s1653 = int_to_ptr.vmem [resolvable:$true] %s1652
      %1658 = dma.vmem_to_hbm [thread:$0]  %s1653, 256, %s5, [#allocation5], 128, 128, 8
    $region41: #{tpu_custom_call.1} parent=1 // pred_fallthru
      _
    // Predicated region
    $region42: #{tpu_custom_call.1} parent=1 // pred_check
      _
    $region43: #{tpu_custom_call.1} parent=1 // pred_check_branch
      %1660 = sbr.rel (0) target = $region45
    $region44: #{tpu_custom_call.1} parent=1 // pred_region
      %1661 = dma.done [#allocation5], 256
    $region45: #{tpu_custom_call.1} parent=1 // pred_fallthru
      _
    %1662 = vsyncpa [#allocation4], 1
    %1663 = vsyncpa [#allocation7], 1
    %1664 = vsyncpa [#allocation10], 1
    %1665 = vsyncpa [#allocation5], 1

</llo_original>
